<compile_context>
chip_gen: v7x
topology: tpu7x:2x2x1
jax: 0.10.0
libtpu: 0.0.40
codegen_flags: <defaults>
</compile_context>

<pallas_src>
import functools

import jax
import jax.numpy as jnp
from jax.experimental import pallas as pl
from jax.experimental.pallas import tpu as pltpu


def _round_up(n, m):
    return ((n + m - 1) // m) * m


# ----------------------------------------------------------------------------
# In-kernel LSTM recurrence (gate order already permuted to [i, f, o, g])
# ----------------------------------------------------------------------------
def _lstm_recurrence(xp_scr, whh_ref, T, Bp, H, collect_outputs=False):
    """xp_scr: VMEM scratch (T*Bp, 4H) f32 holding the hoisted input projection (+bias).

    Per step only h @ W_hh is on the serial critical path; W_hh is loaded once.
    h/c are carried as values (vregs) across the fully unrolled static loop.
    """
    whh = whh_ref[...]                                   # hoisted: (H, 4H) bf16, once per layer
    h = jnp.zeros((Bp, H), jnp.float32)
    c = jnp.zeros((Bp, H), jnp.float32)
    hs = []
    for t in range(T):
        xp_t = xp_scr[t * Bp:(t + 1) * Bp, :]            # (Bp, 4H) f32, (8,128)-aligned load
        gates = xp_t + jnp.dot(h.astype(jnp.bfloat16), whh,
                               preferred_element_type=jnp.float32)
        sig = jax.nn.sigmoid(gates[:, :3 * H])           # one EUP pass: i, f, o
        g_g = jnp.tanh(gates[:, 3 * H:])                 # one EUP pass: g
        c = sig[:, H:2 * H] * c + sig[:, :H] * g_g
        h = sig[:, 2 * H:3 * H] * jnp.tanh(c)
        if collect_outputs:
            hs.append(h)
    return h, hs


# ----------------------------------------------------------------------------
# Fused kernel: LSTM layer 0 -> LSTM layer 1 -> Linear head
# ----------------------------------------------------------------------------
def _fused_lstm_fc_kernel(x_ref, wih0_ref, whh0_ref, b0_ref,
                          wih1_ref, whh1_ref, b1_ref,
                          wfc_ref, bfc_ref,
                          out_ref, xp_scr, *, seq_len, batch_p, hidden):
    """
    x_ref   : (T*Bp, Epad) bf16   time-major flattened, batch padded to 8 (row = t*Bp + b)
    wih0    : (Epad, 4H)   bf16   whh0: (H, 4H) bf16   b0: (1, 4H) f32  (b_ih+b_hh, permuted)
    wih1    : (H, 4H)      bf16   whh1: (H, 4H) bf16   b1: (1, 4H) f32
    wfc     : (H, Cpad)    bf16   bfc : (1, Cpad) f32
    out_ref : (Bp, Cpad)   f32    logits (padded lanes = zero-weight columns)
    xp_scr  : (T*Bp, 4H)   f32    VMEM scratch, reused for both layers' input projections
    """
    T, Bp, H = seq_len, batch_p, hidden

    # ---- Layer 0: input projection hoisted out of the recurrence ------------
    xp_scr[...] = jnp.dot(x_ref[...], wih0_ref[...],
                          preferred_element_type=jnp.float32) + b0_ref[...]
    _, hs0 = _lstm_recurrence(xp_scr, whh0_ref, T, Bp, H, collect_outputs=True)

    # ---- Layer 1: project the whole layer-0 sequence in one matmul ----------
    y0 = jnp.concatenate(hs0, axis=0).astype(jnp.bfloat16)          # (T*Bp, H), stays in vregs
    xp_scr[...] = jnp.dot(y0, wih1_ref[...],
                          preferred_element_type=jnp.float32) + b1_ref[...]
    h_last, _ = _lstm_recurrence(xp_scr, whh1_ref, T, Bp, H, collect_outputs=False)

    # ---- Classifier head (only the final hidden state feeds it) -------------
    out_ref[...] = jnp.dot(h_last.astype(jnp.bfloat16), wfc_ref[...],
                           preferred_element_type=jnp.float32) + bfc_ref[...]


# ----------------------------------------------------------------------------
# Parameter preparation (done once, not per forward call)
# ----------------------------------------------------------------------------
def _gate_perm(H):
    # PyTorch 4H axis order: [i, f, g, o]  ->  kernel order: [i, f, o, g]
    idx = jnp.arange(H)
    return jnp.concatenate([idx, idx + H, idx + 3 * H, idx + 2 * H])


def prepare_params(params, embed, hidden, class_number):
    """Transpose to (in, out), permute gates, fold biases, pad E/C to 128, cast to bf16."""
    H = hidden
    e_pad = _round_up(embed, 128)
    c_pad = _round_up(class_number, 128)
    perm = _gate_perm(H)

    wih0 = jnp.transpose(params["w_ih0"]).astype(jnp.float32)[:, perm]     # (E, 4H)
    wih0 = jnp.pad(wih0, ((0, e_pad - embed), (0, 0))).astype(jnp.bfloat16)
    whh0 = jnp.transpose(params["w_hh0"]).astype(jnp.float32)[:, perm].astype(jnp.bfloat16)
    b0 = (params["b_ih0"] + params["b_hh0"]).astype(jnp.float32)[perm].reshape(1, 4 * H)

    wih1 = jnp.transpose(params["w_ih1"]).astype(jnp.float32)[:, perm].astype(jnp.bfloat16)
    whh1 = jnp.transpose(params["w_hh1"]).astype(jnp.float32)[:, perm].astype(jnp.bfloat16)
    b1 = (params["b_ih1"] + params["b_hh1"]).astype(jnp.float32)[perm].reshape(1, 4 * H)

    wfc = jnp.transpose(params["w_fc"]).astype(jnp.float32)                # (H, C)
    wfc = jnp.pad(wfc, ((0, 0), (0, c_pad - class_number))).astype(jnp.bfloat16)
    bfc = jnp.pad(params["b_fc"].astype(jnp.float32),
                  (0, c_pad - class_number)).reshape(1, c_pad)

    return {"wih0": wih0, "whh0": whh0, "b0": b0,
            "wih1": wih1, "whh1": whh1, "b1": b1,
            "wfc": wfc, "bfc": bfc}


# ----------------------------------------------------------------------------
# Forward wrapper (one pallas_call, no grid: everything fits in VMEM)
# ----------------------------------------------------------------------------
@functools.partial(jax.jit, static_argnames=("class_number",))
def lstm_classifier_forward(x, kparams, *, class_number):
    """x: (B, T, E) batch-first f32.  Returns logits (B, class_number) f32."""
    # TODO(synk): nn.Dropout(p=0.2) between LSTM layers is training-only; omitted (eval mode).
    B, T, E = x.shape
    e_pad = kparams["wih0"].shape[0]
    H = kparams["whh0"].shape[0]
    c_pad = kparams["wfc"].shape[1]
    b_pad = _round_up(max(B, 8), 8)                      # f32 sublane tile alignment

    # Time-major, pad batch to 8 rows and embed dim to a full 128-lane tile, cast once.
    x_tbe = jnp.transpose(x, (1, 0, 2))
    x_tbe = jnp.pad(x_tbe, ((0, 0), (0, b_pad - B), (0, e_pad - E)))
    x_flat = x_tbe.reshape(T * b_pad, e_pad).astype(jnp.bfloat16)

    vspec = pl.BlockSpec(memory_space=pltpu.MemorySpace.VMEM)
    kernel = functools.partial(_fused_lstm_fc_kernel,
                               seq_len=T, batch_p=b_pad, hidden=H)

    out = pl.pallas_call(
        kernel,
        out_shape=jax.ShapeDtypeStruct((b_pad, c_pad), jnp.float32),
        in_specs=[vspec] * 9,
        out_specs=vspec,
        scratch_shapes=[pltpu.VMEM((T * b_pad, 4 * H), jnp.float32)],  # reused xp0/xp1 staging
    )(x_flat,
      kparams["wih0"], kparams["whh0"], kparams["b0"],
      kparams["wih1"], kparams["whh1"], kparams["b1"],
      kparams["wfc"], kparams["bfc"])

    return out[:B, :class_number]


# ----------------------------------------------------------------------------
# Pure-JAX f32 reference (PyTorch semantics, PyTorch gate order) for sanity check
# ----------------------------------------------------------------------------
def _ref_lstm_layer(x_tbe, w_ih, w_hh, b_ih, b_hh):
    T, B, _ = x_tbe.shape
    H = w_hh.shape[1]
    h = jnp.zeros((B, H), jnp.float32)
    c = jnp.zeros((B, H), jnp.float32)
    outs = []
    for t in range(T):
        gates = x_tbe[t] @ w_ih.T + h @ w_hh.T + b_ih + b_hh
        i = jax.nn.sigmoid(gates[:, 0 * H:1 * H])
        f = jax.nn.sigmoid(gates[:, 1 * H:2 * H])
        g = jnp.tanh(gates[:, 2 * H:3 * H])
        o = jax.nn.sigmoid(gates[:, 3 * H:4 * H])
        c = f * c + i * g
        h = o * jnp.tanh(c)
        outs.append(h)
    return jnp.stack(outs, axis=0)


def _ref_forward(x, p):
    x_tbe = jnp.transpose(x, (1, 0, 2))
    y0 = _ref_lstm_layer(x_tbe, p["w_ih0"], p["w_hh0"], p["b_ih0"], p["b_hh0"])
    y1 = _ref_lstm_layer(y0, p["w_ih1"], p["w_hh1"], p["b_ih1"], p["b_hh1"])
    return y1[-1] @ p["w_fc"].T + p["b_fc"]


# ----------------------------------------------------------------------------
# Deterministic parameter init (PyTorch-style U(-1/sqrt(H), 1/sqrt(H)))
# ----------------------------------------------------------------------------
def init_params(key, embed, hidden, class_number):
    k = 1.0 / jnp.sqrt(hidden)
    keys = jax.random.split(key, 10)

    def u(kk, shape):
        return jax.random.uniform(kk, shape, jnp.float32, -k, k)

    return {
        "w_ih0": u(keys[0], (4 * hidden, embed)),
        "w_hh0": u(keys[1], (4 * hidden, hidden)),
        "b_ih0": u(keys[2], (4 * hidden,)),
        "b_hh0": u(keys[3], (4 * hidden,)),
        "w_ih1": u(keys[4], (4 * hidden, hidden)),
        "w_hh1": u(keys[5], (4 * hidden, hidden)),
        "b_ih1": u(keys[6], (4 * hidden,)),
        "b_hh1": u(keys[7], (4 * hidden,)),
        "w_fc": u(keys[8], (class_number, hidden)),
        "b_fc": u(keys[9], (class_number,)),
    }


# ----------------------------------------------------------------------------
if __name__ == "__main__":
    BATCH, SEQ, EMBED, HIDDEN, CLASSES = 2, 8, 100, 128, 5

    key = jax.random.PRNGKey(0)
    kx, kp = jax.random.split(key)
    x = jax.random.normal(kx, (BATCH, SEQ, EMBED), jnp.float32)
    params = init_params(kp, EMBED, HIDDEN, CLASSES)
    kparams = prepare_params(params, EMBED, HIDDEN, CLASSES)

    logits = lstm_classifier_forward(x, kparams, class_number=CLASSES)
    logits = jax.block_until_ready(logits)

    ref = _ref_forward(x, params)
    assert logits.shape == (BATCH, CLASSES)
    max_err = float(jnp.max(jnp.abs(logits - ref)))
    # bf16 MXU inputs (f32 accumulation) -> expect ~1e-2-level deviation vs f32 reference.
    assert jnp.allclose(logits, ref, atol=5e-2, rtol=5e-2), (
        f"mismatch vs reference (max abs err {max_err})")

    print("KERNEL_OK")
</pallas_src>

<mosaic_0001>
module attributes {stable_mosaic.version = 11 : i64} {
  func.func @_fused_lstm_fc_kernel(%arg0: memref<64x128xbf16, #tpu.memory_space<vmem>>, %arg1: memref<128x512xbf16, #tpu.memory_space<vmem>>, %arg2: memref<128x512xbf16, #tpu.memory_space<vmem>>, %arg3: memref<1x512xf32, #tpu.memory_space<vmem>>, %arg4: memref<128x512xbf16, #tpu.memory_space<vmem>>, %arg5: memref<128x512xbf16, #tpu.memory_space<vmem>>, %arg6: memref<1x512xf32, #tpu.memory_space<vmem>>, %arg7: memref<128x128xbf16, #tpu.memory_space<vmem>>, %arg8: memref<1x128xf32, #tpu.memory_space<vmem>>, %arg9: memref<8x128xf32, #tpu.memory_space<vmem>>, %arg10: memref<64x512xf32, #tpu.memory_space<vmem>>) attributes {dimension_semantics = [], scalar_prefetch = 0 : i64, scratch_operands = 1 : i64, tpu.core_type = #tpu.core_type<tc>} {
    %c0 = arith.constant 0 : index
    %c0_0 = arith.constant 0 : index
    %0 = vector.load %arg0[%c0, %c0_0] : memref<64x128xbf16, #tpu.memory_space<vmem>>, vector<64x128xbf16>
    %c0_1 = arith.constant 0 : index
    %c0_2 = arith.constant 0 : index
    %1 = vector.load %arg1[%c0_1, %c0_2] : memref<128x512xbf16, #tpu.memory_space<vmem>>, vector<128x512xbf16>
    %cst = arith.constant dense<0.000000e+00> : vector<64x512xf32>
    %2 = tpu.matmul %0, %1, %cst {dimension_numbers = #tpu.dot_dimension_numbers<[1], [0], [0], [1], [0, 0, 1, 1], [], []>} : vector<64x128xbf16>, vector<128x512xbf16>, vector<64x512xf32> -> vector<64x512xf32>
    %c0_3 = arith.constant 0 : index
    %c0_4 = arith.constant 0 : index
    %3 = vector.load %arg3[%c0_3, %c0_4] : memref<1x512xf32, #tpu.memory_space<vmem>>, vector<1x512xf32>
    %4 = vector.broadcast %3 : vector<1x512xf32> to vector<64x512xf32>
    %5 = arith.addf %2, %4 : vector<64x512xf32>
    %c0_5 = arith.constant 0 : index
    %c0_6 = arith.constant 0 : index
    %6 = vector.load %arg10[%c0_5, %c0_6] : memref<64x512xf32, #tpu.memory_space<vmem>>, vector<64x512xf32>
    tpu.vector_store %arg10[%c0_5, %c0_6], %5 {strides = array<i32>} : memref<64x512xf32, #tpu.memory_space<vmem>>, vector<64x512xf32>,
    %c0_7 = arith.constant 0 : index
    %c0_8 = arith.constant 0 : index
    %7 = vector.load %arg2[%c0_7, %c0_8] : memref<128x512xbf16, #tpu.memory_space<vmem>>, vector<128x512xbf16>
    %cst_9 = arith.constant 0.000000e+00 : f32
    %8 = vector.broadcast %cst_9 : f32 to vector<8x128xf32>
    %cst_10 = arith.constant 0.000000e+00 : f32
    %9 = vector.broadcast %cst_10 : f32 to vector<8x128xf32>
    %c0_11 = arith.constant 0 : index
    %c0_12 = arith.constant 0 : index
    %10 = vector.load %arg10[%c0_11, %c0_12] : memref<64x512xf32, #tpu.memory_space<vmem>>, vector<8x512xf32>
    %11 = arith.truncf %8 : vector<8x128xf32> to vector<8x128xbf16>
    %cst_13 = arith.constant dense<0.000000e+00> : vector<8x512xf32>
    %12 = tpu.matmul %11, %7, %cst_13 {dimension_numbers = #tpu.dot_dimension_numbers<[1], [0], [0], [1], [0, 0, 1, 1], [], []>} : vector<8x128xbf16>, vector<128x512xbf16>, vector<8x512xf32> -> vector<8x512xf32>
    %13 = arith.addf %10, %12 : vector<8x512xf32>
    %14 = vector.extract_strided_slice %13 {offsets = [0, 0], sizes = [8, 384], strides = [1, 1]} : vector<8x512xf32> to vector<8x384xf32>
    %15 = arith.negf %14 : vector<8x384xf32>
    %16 = math.exp %15 : vector<8x384xf32>
    %cst_14 = arith.constant 1.000000e+00 : f32
    %17 = vector.broadcast %cst_14 : f32 to vector<8x384xf32>
    %18 = arith.addf %17, %16 : vector<8x384xf32>
    %19 = arith.divf %17, %18 : vector<8x384xf32>
    %20 = vector.extract_strided_slice %13 {offsets = [0, 384], sizes = [8, 128], strides = [1, 1]} : vector<8x512xf32> to vector<8x128xf32>
    %21 = math.tanh %20 : vector<8x128xf32>
    %22 = vector.extract_strided_slice %19 {offsets = [0, 128], sizes = [8, 128], strides = [1, 1]} : vector<8x384xf32> to vector<8x128xf32>
    %23 = arith.mulf %22, %9 : vector<8x128xf32>
    %24 = vector.extract_strided_slice %19 {offsets = [0, 0], sizes = [8, 128], strides = [1, 1]} : vector<8x384xf32> to vector<8x128xf32>
    %25 = arith.mulf %24, %21 : vector<8x128xf32>
    %26 = arith.addf %23, %25 : vector<8x128xf32>
    %27 = vector.extract_strided_slice %19 {offsets = [0, 256], sizes = [8, 128], strides = [1, 1]} : vector<8x384xf32> to vector<8x128xf32>
    %28 = math.tanh %26 : vector<8x128xf32>
    %29 = arith.mulf %27, %28 : vector<8x128xf32>
    %c8 = arith.constant 8 : index
    %c0_15 = arith.constant 0 : index
    %30 = vector.load %arg10[%c8, %c0_15] : memref<64x512xf32, #tpu.memory_space<vmem>>, vector<8x512xf32>
    %31 = arith.truncf %29 : vector<8x128xf32> to vector<8x128xbf16>
    %cst_16 = arith.constant dense<0.000000e+00> : vector<8x512xf32>
    %32 = tpu.matmul %31, %7, %cst_16 {dimension_numbers = #tpu.dot_dimension_numbers<[1], [0], [0], [1], [0, 0, 1, 1], [], []>} : vector<8x128xbf16>, vector<128x512xbf16>, vector<8x512xf32> -> vector<8x512xf32>
    %33 = arith.addf %30, %32 : vector<8x512xf32>
    %34 = vector.extract_strided_slice %33 {offsets = [0, 0], sizes = [8, 384], strides = [1, 1]} : vector<8x512xf32> to vector<8x384xf32>
    %35 = arith.negf %34 : vector<8x384xf32>
    %36 = math.exp %35 : vector<8x384xf32>
    %cst_17 = arith.constant 1.000000e+00 : f32
    %37 = vector.broadcast %cst_17 : f32 to vector<8x384xf32>
    %38 = arith.addf %37, %36 : vector<8x384xf32>
    %39 = arith.divf %37, %38 : vector<8x384xf32>
    %40 = vector.extract_strided_slice %33 {offsets = [0, 384], sizes = [8, 128], strides = [1, 1]} : vector<8x512xf32> to vector<8x128xf32>
    %41 = math.tanh %40 : vector<8x128xf32>
    %42 = vector.extract_strided_slice %39 {offsets = [0, 128], sizes = [8, 128], strides = [1, 1]} : vector<8x384xf32> to vector<8x128xf32>
    %43 = arith.mulf %42, %26 : vector<8x128xf32>
    %44 = vector.extract_strided_slice %39 {offsets = [0, 0], sizes = [8, 128], strides = [1, 1]} : vector<8x384xf32> to vector<8x128xf32>
    %45 = arith.mulf %44, %41 : vector<8x128xf32>
    %46 = arith.addf %43, %45 : vector<8x128xf32>
    %47 = vector.extract_strided_slice %39 {offsets = [0, 256], sizes = [8, 128], strides = [1, 1]} : vector<8x384xf32> to vector<8x128xf32>
    %48 = math.tanh %46 : vector<8x128xf32>
    %49 = arith.mulf %47, %48 : vector<8x128xf32>
    %c16 = arith.constant 16 : index
    %c0_18 = arith.constant 0 : index
    %50 = vector.load %arg10[%c16, %c0_18] : memref<64x512xf32, #tpu.memory_space<vmem>>, vector<8x512xf32>
    %51 = arith.truncf %49 : vector<8x128xf32> to vector<8x128xbf16>
    %cst_19 = arith.constant dense<0.000000e+00> : vector<8x512xf32>
    %52 = tpu.matmul %51, %7, %cst_19 {dimension_numbers = #tpu.dot_dimension_numbers<[1], [0], [0], [1], [0, 0, 1, 1], [], []>} : vector<8x128xbf16>, vector<128x512xbf16>, vector<8x512xf32> -> vector<8x512xf32>
    %53 = arith.addf %50, %52 : vector<8x512xf32>
    %54 = vector.extract_strided_slice %53 {offsets = [0, 0], sizes = [8, 384], strides = [1, 1]} : vector<8x512xf32> to vector<8x384xf32>
    %55 = arith.negf %54 : vector<8x384xf32>
    %56 = math.exp %55 : vector<8x384xf32>
    %cst_20 = arith.constant 1.000000e+00 : f32
    %57 = vector.broadcast %cst_20 : f32 to vector<8x384xf32>
    %58 = arith.addf %57, %56 : vector<8x384xf32>
    %59 = arith.divf %57, %58 : vector<8x384xf32>
    %60 = vector.extract_strided_slice %53 {offsets = [0, 384], sizes = [8, 128], strides = [1, 1]} : vector<8x512xf32> to vector<8x128xf32>
    %61 = math.tanh %60 : vector<8x128xf32>
    %62 = vector.extract_strided_slice %59 {offsets = [0, 128], sizes = [8, 128], strides = [1, 1]} : vector<8x384xf32> to vector<8x128xf32>
    %63 = arith.mulf %62, %46 : vector<8x128xf32>
    %64 = vector.extract_strided_slice %59 {offsets = [0, 0], sizes = [8, 128], strides = [1, 1]} : vector<8x384xf32> to vector<8x128xf32>
    %65 = arith.mulf %64, %61 : vector<8x128xf32>
    %66 = arith.addf %63, %65 : vector<8x128xf32>
    %67 = vector.extract_strided_slice %59 {offsets = [0, 256], sizes = [8, 128], strides = [1, 1]} : vector<8x384xf32> to vector<8x128xf32>
    %68 = math.tanh %66 : vector<8x128xf32>
    %69 = arith.mulf %67, %68 : vector<8x128xf32>
    %c24 = arith.constant 24 : index
    %c0_21 = arith.constant 0 : index
    %70 = vector.load %arg10[%c24, %c0_21] : memref<64x512xf32, #tpu.memory_space<vmem>>, vector<8x512xf32>
    %71 = arith.truncf %69 : vector<8x128xf32> to vector<8x128xbf16>
    %cst_22 = arith.constant dense<0.000000e+00> : vector<8x512xf32>
    %72 = tpu.matmul %71, %7, %cst_22 {dimension_numbers = #tpu.dot_dimension_numbers<[1], [0], [0], [1], [0, 0, 1, 1], [], []>} : vector<8x128xbf16>, vector<128x512xbf16>, vector<8x512xf32> -> vector<8x512xf32>
    %73 = arith.addf %70, %72 : vector<8x512xf32>
    %74 = vector.extract_strided_slice %73 {offsets = [0, 0], sizes = [8, 384], strides = [1, 1]} : vector<8x512xf32> to vector<8x384xf32>
    %75 = arith.negf %74 : vector<8x384xf32>
    %76 = math.exp %75 : vector<8x384xf32>
    %cst_23 = arith.constant 1.000000e+00 : f32
    %77 = vector.broadcast %cst_23 : f32 to vector<8x384xf32>
    %78 = arith.addf %77, %76 : vector<8x384xf32>
    %79 = arith.divf %77, %78 : vector<8x384xf32>
    %80 = vector.extract_strided_slice %73 {offsets = [0, 384], sizes = [8, 128], strides = [1, 1]} : vector<8x512xf32> to vector<8x128xf32>
    %81 = math.tanh %80 : vector<8x128xf32>
    %82 = vector.extract_strided_slice %79 {offsets = [0, 128], sizes = [8, 128], strides = [1, 1]} : vector<8x384xf32> to vector<8x128xf32>
    %83 = arith.mulf %82, %66 : vector<8x128xf32>
    %84 = vector.extract_strided_slice %79 {offsets = [0, 0], sizes = [8, 128], strides = [1, 1]} : vector<8x384xf32> to vector<8x128xf32>
    %85 = arith.mulf %84, %81 : vector<8x128xf32>
    %86 = arith.addf %83, %85 : vector<8x128xf32>
    %87 = vector.extract_strided_slice %79 {offsets = [0, 256], sizes = [8, 128], strides = [1, 1]} : vector<8x384xf32> to vector<8x128xf32>
    %88 = math.tanh %86 : vector<8x128xf32>
    %89 = arith.mulf %87, %88 : vector<8x128xf32>
    %c32 = arith.constant 32 : index
    %c0_24 = arith.constant 0 : index
    %90 = vector.load %arg10[%c32, %c0_24] : memref<64x512xf32, #tpu.memory_space<vmem>>, vector<8x512xf32>
    %91 = arith.truncf %89 : vector<8x128xf32> to vector<8x128xbf16>
    %cst_25 = arith.constant dense<0.000000e+00> : vector<8x512xf32>
    %92 = tpu.matmul %91, %7, %cst_25 {dimension_numbers = #tpu.dot_dimension_numbers<[1], [0], [0], [1], [0, 0, 1, 1], [], []>} : vector<8x128xbf16>, vector<128x512xbf16>, vector<8x512xf32> -> vector<8x512xf32>
    %93 = arith.addf %90, %92 : vector<8x512xf32>
    %94 = vector.extract_strided_slice %93 {offsets = [0, 0], sizes = [8, 384], strides = [1, 1]} : vector<8x512xf32> to vector<8x384xf32>
    %95 = arith.negf %94 : vector<8x384xf32>
    %96 = math.exp %95 : vector<8x384xf32>
    %cst_26 = arith.constant 1.000000e+00 : f32
    %97 = vector.broadcast %cst_26 : f32 to vector<8x384xf32>
    %98 = arith.addf %97, %96 : vector<8x384xf32>
    %99 = arith.divf %97, %98 : vector<8x384xf32>
    %100 = vector.extract_strided_slice %93 {offsets = [0, 384], sizes = [8, 128], strides = [1, 1]} : vector<8x512xf32> to vector<8x128xf32>
    %101 = math.tanh %100 : vector<8x128xf32>
    %102 = vector.extract_strided_slice %99 {offsets = [0, 128], sizes = [8, 128], strides = [1, 1]} : vector<8x384xf32> to vector<8x128xf32>
    %103 = arith.mulf %102, %86 : vector<8x128xf32>
    %104 = vector.extract_strided_slice %99 {offsets = [0, 0], sizes = [8, 128], strides = [1, 1]} : vector<8x384xf32> to vector<8x128xf32>
    %105 = arith.mulf %104, %101 : vector<8x128xf32>
    %106 = arith.addf %103, %105 : vector<8x128xf32>
    %107 = vector.extract_strided_slice %99 {offsets = [0, 256], sizes = [8, 128], strides = [1, 1]} : vector<8x384xf32> to vector<8x128xf32>
    %108 = math.tanh %106 : vector<8x128xf32>
    %109 = arith.mulf %107, %108 : vector<8x128xf32>
    %c40 = arith.constant 40 : index
    %c0_27 = arith.constant 0 : index
    %110 = vector.load %arg10[%c40, %c0_27] : memref<64x512xf32, #tpu.memory_space<vmem>>, vector<8x512xf32>
    %111 = arith.truncf %109 : vector<8x128xf32> to vector<8x128xbf16>
    %cst_28 = arith.constant dense<0.000000e+00> : vector<8x512xf32>
    %112 = tpu.matmul %111, %7, %cst_28 {dimension_numbers = #tpu.dot_dimension_numbers<[1], [0], [0], [1], [0, 0, 1, 1], [], []>} : vector<8x128xbf16>, vector<128x512xbf16>, vector<8x512xf32> -> vector<8x512xf32>
    %113 = arith.addf %110, %112 : vector<8x512xf32>
    %114 = vector.extract_strided_slice %113 {offsets = [0, 0], sizes = [8, 384], strides = [1, 1]} : vector<8x512xf32> to vector<8x384xf32>
    %115 = arith.negf %114 : vector<8x384xf32>
    %116 = math.exp %115 : vector<8x384xf32>
    %cst_29 = arith.constant 1.000000e+00 : f32
    %117 = vector.broadcast %cst_29 : f32 to vector<8x384xf32>
    %118 = arith.addf %117, %116 : vector<8x384xf32>
    %119 = arith.divf %117, %118 : vector<8x384xf32>
    %120 = vector.extract_strided_slice %113 {offsets = [0, 384], sizes = [8, 128], strides = [1, 1]} : vector<8x512xf32> to vector<8x128xf32>
    %121 = math.tanh %120 : vector<8x128xf32>
    %122 = vector.extract_strided_slice %119 {offsets = [0, 128], sizes = [8, 128], strides = [1, 1]} : vector<8x384xf32> to vector<8x128xf32>
    %123 = arith.mulf %122, %106 : vector<8x128xf32>
    %124 = vector.extract_strided_slice %119 {offsets = [0, 0], sizes = [8, 128], strides = [1, 1]} : vector<8x384xf32> to vector<8x128xf32>
    %125 = arith.mulf %124, %121 : vector<8x128xf32>
    %126 = arith.addf %123, %125 : vector<8x128xf32>
    %127 = vector.extract_strided_slice %119 {offsets = [0, 256], sizes = [8, 128], strides = [1, 1]} : vector<8x384xf32> to vector<8x128xf32>
    %128 = math.tanh %126 : vector<8x128xf32>
    %129 = arith.mulf %127, %128 : vector<8x128xf32>
    %c48 = arith.constant 48 : index
    %c0_30 = arith.constant 0 : index
    %130 = vector.load %arg10[%c48, %c0_30] : memref<64x512xf32, #tpu.memory_space<vmem>>, vector<8x512xf32>
    %131 = arith.truncf %129 : vector<8x128xf32> to vector<8x128xbf16>
    %cst_31 = arith.constant dense<0.000000e+00> : vector<8x512xf32>
    %132 = tpu.matmul %131, %7, %cst_31 {dimension_numbers = #tpu.dot_dimension_numbers<[1], [0], [0], [1], [0, 0, 1, 1], [], []>} : vector<8x128xbf16>, vector<128x512xbf16>, vector<8x512xf32> -> vector<8x512xf32>
    %133 = arith.addf %130, %132 : vector<8x512xf32>
    %134 = vector.extract_strided_slice %133 {offsets = [0, 0], sizes = [8, 384], strides = [1, 1]} : vector<8x512xf32> to vector<8x384xf32>
    %135 = arith.negf %134 : vector<8x384xf32>
    %136 = math.exp %135 : vector<8x384xf32>
    %cst_32 = arith.constant 1.000000e+00 : f32
    %137 = vector.broadcast %cst_32 : f32 to vector<8x384xf32>
    %138 = arith.addf %137, %136 : vector<8x384xf32>
    %139 = arith.divf %137, %138 : vector<8x384xf32>
    %140 = vector.extract_strided_slice %133 {offsets = [0, 384], sizes = [8, 128], strides = [1, 1]} : vector<8x512xf32> to vector<8x128xf32>
    %141 = math.tanh %140 : vector<8x128xf32>
    %142 = vector.extract_strided_slice %139 {offsets = [0, 128], sizes = [8, 128], strides = [1, 1]} : vector<8x384xf32> to vector<8x128xf32>
    %143 = arith.mulf %142, %126 : vector<8x128xf32>
    %144 = vector.extract_strided_slice %139 {offsets = [0, 0], sizes = [8, 128], strides = [1, 1]} : vector<8x384xf32> to vector<8x128xf32>
    %145 = arith.mulf %144, %141 : vector<8x128xf32>
    %146 = arith.addf %143, %145 : vector<8x128xf32>
    %147 = vector.extract_strided_slice %139 {offsets = [0, 256], sizes = [8, 128], strides = [1, 1]} : vector<8x384xf32> to vector<8x128xf32>
    %148 = math.tanh %146 : vector<8x128xf32>
    %149 = arith.mulf %147, %148 : vector<8x128xf32>
    %c56 = arith.constant 56 : index
    %c0_33 = arith.constant 0 : index
    %150 = vector.load %arg10[%c56, %c0_33] : memref<64x512xf32, #tpu.memory_space<vmem>>, vector<8x512xf32>
    %151 = arith.truncf %149 : vector<8x128xf32> to vector<8x128xbf16>
    %cst_34 = arith.constant dense<0.000000e+00> : vector<8x512xf32>
    %152 = tpu.matmul %151, %7, %cst_34 {dimension_numbers = #tpu.dot_dimension_numbers<[1], [0], [0], [1], [0, 0, 1, 1], [], []>} : vector<8x128xbf16>, vector<128x512xbf16>, vector<8x512xf32> -> vector<8x512xf32>
    %153 = arith.addf %150, %152 : vector<8x512xf32>
    %154 = vector.extract_strided_slice %153 {offsets = [0, 0], sizes = [8, 384], strides = [1, 1]} : vector<8x512xf32> to vector<8x384xf32>
    %155 = arith.negf %154 : vector<8x384xf32>
    %156 = math.exp %155 : vector<8x384xf32>
    %cst_35 = arith.constant 1.000000e+00 : f32
    %157 = vector.broadcast %cst_35 : f32 to vector<8x384xf32>
    %158 = arith.addf %157, %156 : vector<8x384xf32>
    %159 = arith.divf %157, %158 : vector<8x384xf32>
    %160 = vector.extract_strided_slice %153 {offsets = [0, 384], sizes = [8, 128], strides = [1, 1]} : vector<8x512xf32> to vector<8x128xf32>
    %161 = math.tanh %160 : vector<8x128xf32>
    %162 = vector.extract_strided_slice %159 {offsets = [0, 128], sizes = [8, 128], strides = [1, 1]} : vector<8x384xf32> to vector<8x128xf32>
    %163 = arith.mulf %162, %146 : vector<8x128xf32>
    %164 = vector.extract_strided_slice %159 {offsets = [0, 0], sizes = [8, 128], strides = [1, 1]} : vector<8x384xf32> to vector<8x128xf32>
    %165 = arith.mulf %164, %161 : vector<8x128xf32>
    %166 = arith.addf %163, %165 : vector<8x128xf32>
    %167 = vector.extract_strided_slice %159 {offsets = [0, 256], sizes = [8, 128], strides = [1, 1]} : vector<8x384xf32> to vector<8x128xf32>
    %168 = math.tanh %166 : vector<8x128xf32>
    %169 = arith.mulf %167, %168 : vector<8x128xf32>
    %170 = tpu.concatenate %29, %49, %69, %89, %109, %129, %149, %169 in 0 : vector<8x128xf32>, vector<8x128xf32>, vector<8x128xf32>, vector<8x128xf32>, vector<8x128xf32>, vector<8x128xf32>, vector<8x128xf32>, vector<8x128xf32> -> vector<64x128xf32>
    %171 = arith.truncf %170 : vector<64x128xf32> to vector<64x128xbf16>
    %c0_36 = arith.constant 0 : index
    %c0_37 = arith.constant 0 : index
    %172 = vector.load %arg4[%c0_36, %c0_37] : memref<128x512xbf16, #tpu.memory_space<vmem>>, vector<128x512xbf16>
    %cst_38 = arith.constant dense<0.000000e+00> : vector<64x512xf32>
    %173 = tpu.matmul %171, %172, %cst_38 {dimension_numbers = #tpu.dot_dimension_numbers<[1], [0], [0], [1], [0, 0, 1, 1], [], []>} : vector<64x128xbf16>, vector<128x512xbf16>, vector<64x512xf32> -> vector<64x512xf32>
    %c0_39 = arith.constant 0 : index
    %c0_40 = arith.constant 0 : index
    %174 = vector.load %arg6[%c0_39, %c0_40] : memref<1x512xf32, #tpu.memory_space<vmem>>, vector<1x512xf32>
    %175 = vector.broadcast %174 : vector<1x512xf32> to vector<64x512xf32>
    %176 = arith.addf %173, %175 : vector<64x512xf32>
    %c0_41 = arith.constant 0 : index
    %c0_42 = arith.constant 0 : index
    %177 = vector.load %arg10[%c0_41, %c0_42] : memref<64x512xf32, #tpu.memory_space<vmem>>, vector<64x512xf32>
    tpu.vector_store %arg10[%c0_41, %c0_42], %176 {strides = array<i32>} : memref<64x512xf32, #tpu.memory_space<vmem>>, vector<64x512xf32>,
    %c0_43 = arith.constant 0 : index
    %c0_44 = arith.constant 0 : index
    %178 = vector.load %arg5[%c0_43, %c0_44] : memref<128x512xbf16, #tpu.memory_space<vmem>>, vector<128x512xbf16>
    %cst_45 = arith.constant 0.000000e+00 : f32
    %179 = vector.broadcast %cst_45 : f32 to vector<8x128xf32>
    %cst_46 = arith.constant 0.000000e+00 : f32
    %180 = vector.broadcast %cst_46 : f32 to vector<8x128xf32>
    %c0_47 = arith.constant 0 : index
    %c0_48 = arith.constant 0 : index
    %181 = vector.load %arg10[%c0_47, %c0_48] : memref<64x512xf32, #tpu.memory_space<vmem>>, vector<8x512xf32>
    %182 = arith.truncf %179 : vector<8x128xf32> to vector<8x128xbf16>
    %cst_49 = arith.constant dense<0.000000e+00> : vector<8x512xf32>
    %183 = tpu.matmul %182, %178, %cst_49 {dimension_numbers = #tpu.dot_dimension_numbers<[1], [0], [0], [1], [0, 0, 1, 1], [], []>} : vector<8x128xbf16>, vector<128x512xbf16>, vector<8x512xf32> -> vector<8x512xf32>
    %184 = arith.addf %181, %183 : vector<8x512xf32>
    %185 = vector.extract_strided_slice %184 {offsets = [0, 0], sizes = [8, 384], strides = [1, 1]} : vector<8x512xf32> to vector<8x384xf32>
    %186 = arith.negf %185 : vector<8x384xf32>
    %187 = math.exp %186 : vector<8x384xf32>
    %cst_50 = arith.constant 1.000000e+00 : f32
    %188 = vector.broadcast %cst_50 : f32 to vector<8x384xf32>
    %189 = arith.addf %188, %187 : vector<8x384xf32>
    %190 = arith.divf %188, %189 : vector<8x384xf32>
    %191 = vector.extract_strided_slice %184 {offsets = [0, 384], sizes = [8, 128], strides = [1, 1]} : vector<8x512xf32> to vector<8x128xf32>
    %192 = math.tanh %191 : vector<8x128xf32>
    %193 = vector.extract_strided_slice %190 {offsets = [0, 128], sizes = [8, 128], strides = [1, 1]} : vector<8x384xf32> to vector<8x128xf32>
    %194 = arith.mulf %193, %180 : vector<8x128xf32>
    %195 = vector.extract_strided_slice %190 {offsets = [0, 0], sizes = [8, 128], strides = [1, 1]} : vector<8x384xf32> to vector<8x128xf32>
    %196 = arith.mulf %195, %192 : vector<8x128xf32>
    %197 = arith.addf %194, %196 : vector<8x128xf32>
    %198 = vector.extract_strided_slice %190 {offsets = [0, 256], sizes = [8, 128], strides = [1, 1]} : vector<8x384xf32> to vector<8x128xf32>
    %199 = math.tanh %197 : vector<8x128xf32>
    %200 = arith.mulf %198, %199 : vector<8x128xf32>
    %c8_51 = arith.constant 8 : index
    %c0_52 = arith.constant 0 : index
    %201 = vector.load %arg10[%c8_51, %c0_52] : memref<64x512xf32, #tpu.memory_space<vmem>>, vector<8x512xf32>
    %202 = arith.truncf %200 : vector<8x128xf32> to vector<8x128xbf16>
    %cst_53 = arith.constant dense<0.000000e+00> : vector<8x512xf32>
    %203 = tpu.matmul %202, %178, %cst_53 {dimension_numbers = #tpu.dot_dimension_numbers<[1], [0], [0], [1], [0, 0, 1, 1], [], []>} : vector<8x128xbf16>, vector<128x512xbf16>, vector<8x512xf32> -> vector<8x512xf32>
    %204 = arith.addf %201, %203 : vector<8x512xf32>
    %205 = vector.extract_strided_slice %204 {offsets = [0, 0], sizes = [8, 384], strides = [1, 1]} : vector<8x512xf32> to vector<8x384xf32>
    %206 = arith.negf %205 : vector<8x384xf32>
    %207 = math.exp %206 : vector<8x384xf32>
    %cst_54 = arith.constant 1.000000e+00 : f32
    %208 = vector.broadcast %cst_54 : f32 to vector<8x384xf32>
    %209 = arith.addf %208, %207 : vector<8x384xf32>
    %210 = arith.divf %208, %209 : vector<8x384xf32>
    %211 = vector.extract_strided_slice %204 {offsets = [0, 384], sizes = [8, 128], strides = [1, 1]} : vector<8x512xf32> to vector<8x128xf32>
    %212 = math.tanh %211 : vector<8x128xf32>
    %213 = vector.extract_strided_slice %210 {offsets = [0, 128], sizes = [8, 128], strides = [1, 1]} : vector<8x384xf32> to vector<8x128xf32>
    %214 = arith.mulf %213, %197 : vector<8x128xf32>
    %215 = vector.extract_strided_slice %210 {offsets = [0, 0], sizes = [8, 128], strides = [1, 1]} : vector<8x384xf32> to vector<8x128xf32>
    %216 = arith.mulf %215, %212 : vector<8x128xf32>
    %217 = arith.addf %214, %216 : vector<8x128xf32>
    %218 = vector.extract_strided_slice %210 {offsets = [0, 256], sizes = [8, 128], strides = [1, 1]} : vector<8x384xf32> to vector<8x128xf32>
    %219 = math.tanh %217 : vector<8x128xf32>
    %220 = arith.mulf %218, %219 : vector<8x128xf32>
    %c16_55 = arith.constant 16 : index
    %c0_56 = arith.constant 0 : index
    %221 = vector.load %arg10[%c16_55, %c0_56] : memref<64x512xf32, #tpu.memory_space<vmem>>, vector<8x512xf32>
    %222 = arith.truncf %220 : vector<8x128xf32> to vector<8x128xbf16>
    %cst_57 = arith.constant dense<0.000000e+00> : vector<8x512xf32>
    %223 = tpu.matmul %222, %178, %cst_57 {dimension_numbers = #tpu.dot_dimension_numbers<[1], [0], [0], [1], [0, 0, 1, 1], [], []>} : vector<8x128xbf16>, vector<128x512xbf16>, vector<8x512xf32> -> vector<8x512xf32>
    %224 = arith.addf %221, %223 : vector<8x512xf32>
    %225 = vector.extract_strided_slice %224 {offsets = [0, 0], sizes = [8, 384], strides = [1, 1]} : vector<8x512xf32> to vector<8x384xf32>
    %226 = arith.negf %225 : vector<8x384xf32>
    %227 = math.exp %226 : vector<8x384xf32>
    %cst_58 = arith.constant 1.000000e+00 : f32
    %228 = vector.broadcast %cst_58 : f32 to vector<8x384xf32>
    %229 = arith.addf %228, %227 : vector<8x384xf32>
    %230 = arith.divf %228, %229 : vector<8x384xf32>
    %231 = vector.extract_strided_slice %224 {offsets = [0, 384], sizes = [8, 128], strides = [1, 1]} : vector<8x512xf32> to vector<8x128xf32>
    %232 = math.tanh %231 : vector<8x128xf32>
    %233 = vector.extract_strided_slice %230 {offsets = [0, 128], sizes = [8, 128], strides = [1, 1]} : vector<8x384xf32> to vector<8x128xf32>
    %234 = arith.mulf %233, %217 : vector<8x128xf32>
    %235 = vector.extract_strided_slice %230 {offsets = [0, 0], sizes = [8, 128], strides = [1, 1]} : vector<8x384xf32> to vector<8x128xf32>
    %236 = arith.mulf %235, %232 : vector<8x128xf32>
    %237 = arith.addf %234, %236 : vector<8x128xf32>
    %238 = vector.extract_strided_slice %230 {offsets = [0, 256], sizes = [8, 128], strides = [1, 1]} : vector<8x384xf32> to vector<8x128xf32>
    %239 = math.tanh %237 : vector<8x128xf32>
    %240 = arith.mulf %238, %239 : vector<8x128xf32>
    %c24_59 = arith.constant 24 : index
    %c0_60 = arith.constant 0 : index
    %241 = vector.load %arg10[%c24_59, %c0_60] : memref<64x512xf32, #tpu.memory_space<vmem>>, vector<8x512xf32>
    %242 = arith.truncf %240 : vector<8x128xf32> to vector<8x128xbf16>
    %cst_61 = arith.constant dense<0.000000e+00> : vector<8x512xf32>
    %243 = tpu.matmul %242, %178, %cst_61 {dimension_numbers = #tpu.dot_dimension_numbers<[1], [0], [0], [1], [0, 0, 1, 1], [], []>} : vector<8x128xbf16>, vector<128x512xbf16>, vector<8x512xf32> -> vector<8x512xf32>
    %244 = arith.addf %241, %243 : vector<8x512xf32>
    %245 = vector.extract_strided_slice %244 {offsets = [0, 0], sizes = [8, 384], strides = [1, 1]} : vector<8x512xf32> to vector<8x384xf32>
    %246 = arith.negf %245 : vector<8x384xf32>
    %247 = math.exp %246 : vector<8x384xf32>
    %cst_62 = arith.constant 1.000000e+00 : f32
    %248 = vector.broadcast %cst_62 : f32 to vector<8x384xf32>
    %249 = arith.addf %248, %247 : vector<8x384xf32>
    %250 = arith.divf %248, %249 : vector<8x384xf32>
    %251 = vector.extract_strided_slice %244 {offsets = [0, 384], sizes = [8, 128], strides = [1, 1]} : vector<8x512xf32> to vector<8x128xf32>
    %252 = math.tanh %251 : vector<8x128xf32>
    %253 = vector.extract_strided_slice %250 {offsets = [0, 128], sizes = [8, 128], strides = [1, 1]} : vector<8x384xf32> to vector<8x128xf32>
    %254 = arith.mulf %253, %237 : vector<8x128xf32>
    %255 = vector.extract_strided_slice %250 {offsets = [0, 0], sizes = [8, 128], strides = [1, 1]} : vector<8x384xf32> to vector<8x128xf32>
    %256 = arith.mulf %255, %252 : vector<8x128xf32>
    %257 = arith.addf %254, %256 : vector<8x128xf32>
    %258 = vector.extract_strided_slice %250 {offsets = [0, 256], sizes = [8, 128], strides = [1, 1]} : vector<8x384xf32> to vector<8x128xf32>
    %259 = math.tanh %257 : vector<8x128xf32>
    %260 = arith.mulf %258, %259 : vector<8x128xf32>
    %c32_63 = arith.constant 32 : index
    %c0_64 = arith.constant 0 : index
    %261 = vector.load %arg10[%c32_63, %c0_64] : memref<64x512xf32, #tpu.memory_space<vmem>>, vector<8x512xf32>
    %262 = arith.truncf %260 : vector<8x128xf32> to vector<8x128xbf16>
    %cst_65 = arith.constant dense<0.000000e+00> : vector<8x512xf32>
    %263 = tpu.matmul %262, %178, %cst_65 {dimension_numbers = #tpu.dot_dimension_numbers<[1], [0], [0], [1], [0, 0, 1, 1], [], []>} : vector<8x128xbf16>, vector<128x512xbf16>, vector<8x512xf32> -> vector<8x512xf32>
    %264 = arith.addf %261, %263 : vector<8x512xf32>
    %265 = vector.extract_strided_slice %264 {offsets = [0, 0], sizes = [8, 384], strides = [1, 1]} : vector<8x512xf32> to vector<8x384xf32>
    %266 = arith.negf %265 : vector<8x384xf32>
    %267 = math.exp %266 : vector<8x384xf32>
    %cst_66 = arith.constant 1.000000e+00 : f32
    %268 = vector.broadcast %cst_66 : f32 to vector<8x384xf32>
    %269 = arith.addf %268, %267 : vector<8x384xf32>
    %270 = arith.divf %268, %269 : vector<8x384xf32>
    %271 = vector.extract_strided_slice %264 {offsets = [0, 384], sizes = [8, 128], strides = [1, 1]} : vector<8x512xf32> to vector<8x128xf32>
    %272 = math.tanh %271 : vector<8x128xf32>
    %273 = vector.extract_strided_slice %270 {offsets = [0, 128], sizes = [8, 128], strides = [1, 1]} : vector<8x384xf32> to vector<8x128xf32>
    %274 = arith.mulf %273, %257 : vector<8x128xf32>
    %275 = vector.extract_strided_slice %270 {offsets = [0, 0], sizes = [8, 128], strides = [1, 1]} : vector<8x384xf32> to vector<8x128xf32>
    %276 = arith.mulf %275, %272 : vector<8x128xf32>
    %277 = arith.addf %274, %276 : vector<8x128xf32>
    %278 = vector.extract_strided_slice %270 {offsets = [0, 256], sizes = [8, 128], strides = [1, 1]} : vector<8x384xf32> to vector<8x128xf32>
    %279 = math.tanh %277 : vector<8x128xf32>
    %280 = arith.mulf %278, %279 : vector<8x128xf32>
    %c40_67 = arith.constant 40 : index
    %c0_68 = arith.constant 0 : index
    %281 = vector.load %arg10[%c40_67, %c0_68] : memref<64x512xf32, #tpu.memory_space<vmem>>, vector<8x512xf32>
    %282 = arith.truncf %280 : vector<8x128xf32> to vector<8x128xbf16>
    %cst_69 = arith.constant dense<0.000000e+00> : vector<8x512xf32>
    %283 = tpu.matmul %282, %178, %cst_69 {dimension_numbers = #tpu.dot_dimension_numbers<[1], [0], [0], [1], [0, 0, 1, 1], [], []>} : vector<8x128xbf16>, vector<128x512xbf16>, vector<8x512xf32> -> vector<8x512xf32>
    %284 = arith.addf %281, %283 : vector<8x512xf32>
    %285 = vector.extract_strided_slice %284 {offsets = [0, 0], sizes = [8, 384], strides = [1, 1]} : vector<8x512xf32> to vector<8x384xf32>
    %286 = arith.negf %285 : vector<8x384xf32>
    %287 = math.exp %286 : vector<8x384xf32>
    %cst_70 = arith.constant 1.000000e+00 : f32
    %288 = vector.broadcast %cst_70 : f32 to vector<8x384xf32>
    %289 = arith.addf %288, %287 : vector<8x384xf32>
    %290 = arith.divf %288, %289 : vector<8x384xf32>
    %291 = vector.extract_strided_slice %284 {offsets = [0, 384], sizes = [8, 128], strides = [1, 1]} : vector<8x512xf32> to vector<8x128xf32>
    %292 = math.tanh %291 : vector<8x128xf32>
    %293 = vector.extract_strided_slice %290 {offsets = [0, 128], sizes = [8, 128], strides = [1, 1]} : vector<8x384xf32> to vector<8x128xf32>
    %294 = arith.mulf %293, %277 : vector<8x128xf32>
    %295 = vector.extract_strided_slice %290 {offsets = [0, 0], sizes = [8, 128], strides = [1, 1]} : vector<8x384xf32> to vector<8x128xf32>
    %296 = arith.mulf %295, %292 : vector<8x128xf32>
    %297 = arith.addf %294, %296 : vector<8x128xf32>
    %298 = vector.extract_strided_slice %290 {offsets = [0, 256], sizes = [8, 128], strides = [1, 1]} : vector<8x384xf32> to vector<8x128xf32>
    %299 = math.tanh %297 : vector<8x128xf32>
    %300 = arith.mulf %298, %299 : vector<8x128xf32>
    %c48_71 = arith.constant 48 : index
    %c0_72 = arith.constant 0 : index
    %301 = vector.load %arg10[%c48_71, %c0_72] : memref<64x512xf32, #tpu.memory_space<vmem>>, vector<8x512xf32>
    %302 = arith.truncf %300 : vector<8x128xf32> to vector<8x128xbf16>
    %cst_73 = arith.constant dense<0.000000e+00> : vector<8x512xf32>
    %303 = tpu.matmul %302, %178, %cst_73 {dimension_numbers = #tpu.dot_dimension_numbers<[1], [0], [0], [1], [0, 0, 1, 1], [], []>} : vector<8x128xbf16>, vector<128x512xbf16>, vector<8x512xf32> -> vector<8x512xf32>
    %304 = arith.addf %301, %303 : vector<8x512xf32>
    %305 = vector.extract_strided_slice %304 {offsets = [0, 0], sizes = [8, 384], strides = [1, 1]} : vector<8x512xf32> to vector<8x384xf32>
    %306 = arith.negf %305 : vector<8x384xf32>
    %307 = math.exp %306 : vector<8x384xf32>
    %cst_74 = arith.constant 1.000000e+00 : f32
    %308 = vector.broadcast %cst_74 : f32 to vector<8x384xf32>
    %309 = arith.addf %308, %307 : vector<8x384xf32>
    %310 = arith.divf %308, %309 : vector<8x384xf32>
    %311 = vector.extract_strided_slice %304 {offsets = [0, 384], sizes = [8, 128], strides = [1, 1]} : vector<8x512xf32> to vector<8x128xf32>
    %312 = math.tanh %311 : vector<8x128xf32>
    %313 = vector.extract_strided_slice %310 {offsets = [0, 128], sizes = [8, 128], strides = [1, 1]} : vector<8x384xf32> to vector<8x128xf32>
    %314 = arith.mulf %313, %297 : vector<8x128xf32>
    %315 = vector.extract_strided_slice %310 {offsets = [0, 0], sizes = [8, 128], strides = [1, 1]} : vector<8x384xf32> to vector<8x128xf32>
    %316 = arith.mulf %315, %312 : vector<8x128xf32>
    %317 = arith.addf %314, %316 : vector<8x128xf32>
    %318 = vector.extract_strided_slice %310 {offsets = [0, 256], sizes = [8, 128], strides = [1, 1]} : vector<8x384xf32> to vector<8x128xf32>
    %319 = math.tanh %317 : vector<8x128xf32>
    %320 = arith.mulf %318, %319 : vector<8x128xf32>
    %c56_75 = arith.constant 56 : index
    %c0_76 = arith.constant 0 : index
    %321 = vector.load %arg10[%c56_75, %c0_76] : memref<64x512xf32, #tpu.memory_space<vmem>>, vector<8x512xf32>
    %322 = arith.truncf %320 : vector<8x128xf32> to vector<8x128xbf16>
    %cst_77 = arith.constant dense<0.000000e+00> : vector<8x512xf32>
    %323 = tpu.matmul %322, %178, %cst_77 {dimension_numbers = #tpu.dot_dimension_numbers<[1], [0], [0], [1], [0, 0, 1, 1], [], []>} : vector<8x128xbf16>, vector<128x512xbf16>, vector<8x512xf32> -> vector<8x512xf32>
    %324 = arith.addf %321, %323 : vector<8x512xf32>
    %325 = vector.extract_strided_slice %324 {offsets = [0, 0], sizes = [8, 384], strides = [1, 1]} : vector<8x512xf32> to vector<8x384xf32>
    %326 = arith.negf %325 : vector<8x384xf32>
    %327 = math.exp %326 : vector<8x384xf32>
    %cst_78 = arith.constant 1.000000e+00 : f32
    %328 = vector.broadcast %cst_78 : f32 to vector<8x384xf32>
    %329 = arith.addf %328, %327 : vector<8x384xf32>
    %330 = arith.divf %328, %329 : vector<8x384xf32>
    %331 = vector.extract_strided_slice %324 {offsets = [0, 384], sizes = [8, 128], strides = [1, 1]} : vector<8x512xf32> to vector<8x128xf32>
    %332 = math.tanh %331 : vector<8x128xf32>
    %333 = vector.extract_strided_slice %330 {offsets = [0, 128], sizes = [8, 128], strides = [1, 1]} : vector<8x384xf32> to vector<8x128xf32>
    %334 = arith.mulf %333, %317 : vector<8x128xf32>
    %335 = vector.extract_strided_slice %330 {offsets = [0, 0], sizes = [8, 128], strides = [1, 1]} : vector<8x384xf32> to vector<8x128xf32>
    %336 = arith.mulf %335, %332 : vector<8x128xf32>
    %337 = arith.addf %334, %336 : vector<8x128xf32>
    %338 = vector.extract_strided_slice %330 {offsets = [0, 256], sizes = [8, 128], strides = [1, 1]} : vector<8x384xf32> to vector<8x128xf32>
    %339 = math.tanh %337 : vector<8x128xf32>
    %340 = arith.mulf %338, %339 : vector<8x128xf32>
    %341 = arith.truncf %340 : vector<8x128xf32> to vector<8x128xbf16>
    %c0_79 = arith.constant 0 : index
    %c0_80 = arith.constant 0 : index
    %342 = vector.load %arg7[%c0_79, %c0_80] : memref<128x128xbf16, #tpu.memory_space<vmem>>, vector<128x128xbf16>
    %cst_81 = arith.constant dense<0.000000e+00> : vector<8x128xf32>
    %343 = tpu.matmul %341, %342, %cst_81 {dimension_numbers = #tpu.dot_dimension_numbers<[1], [0], [0], [1], [0, 0, 1, 1], [], []>} : vector<8x128xbf16>, vector<128x128xbf16>, vector<8x128xf32> -> vector<8x128xf32>
    %c0_82 = arith.constant 0 : index
    %c0_83 = arith.constant 0 : index
    %344 = vector.load %arg8[%c0_82, %c0_83] : memref<1x128xf32, #tpu.memory_space<vmem>>, vector<1x128xf32>
    %345 = vector.broadcast %344 : vector<1x128xf32> to vector<8x128xf32>
    %346 = arith.addf %343, %345 : vector<8x128xf32>
    %c0_84 = arith.constant 0 : index
    %c0_85 = arith.constant 0 : index
    %347 = vector.load %arg9[%c0_84, %c0_85] : memref<8x128xf32, #tpu.memory_space<vmem>>, vector<8x128xf32>
    tpu.vector_store %arg9[%c0_84, %c0_85], %346 {strides = array<i32>} : memref<8x128xf32, #tpu.memory_space<vmem>>, vector<8x128xf32>,
    return
  }
}

</mosaic_0001>

<llo_original>
// kernel: lstm_classifier_forward.1
$region0: #{lstm_classifier_forward.1}
  #allocation0 [shape = 'u32[]', space=smem, size = 0x4, offset = 0x4, fixed_abs, tag = 'smem constant byte address 0x4 - core index']
  #allocation1 [shape = 'u32[144,128]{1,0:T(1,128)}', space=vmem, size = 0x12000, scoped, tag = 'internal scratch']
  #allocation2 [shape = 'f32[64,512]{1,0:T(8,128)}', space=vmem, size = 0x20000, scoped, tag = 'scratch operand']
  %s0 = inlined_call_operand.vmem [shape: bf16[64,128], index: 0, kind: input, shape index: {}]
  %s1 = inlined_call_operand.hbm [shape: bf16[128,512], index: 1, kind: input, shape index: {}]
  %s2 = inlined_call_operand.hbm [shape: bf16[128,512], index: 2, kind: input, shape index: {}]
  %s3 = inlined_call_operand.vmem [shape: f32[1,512], index: 3, kind: input, shape index: {}]
  %s4 = inlined_call_operand.hbm [shape: bf16[128,512], index: 4, kind: input, shape index: {}]
  %s5 = inlined_call_operand.hbm [shape: bf16[128,512], index: 5, kind: input, shape index: {}]
  %s6 = inlined_call_operand.vmem [shape: f32[1,512], index: 6, kind: input, shape index: {}]
  %s7 = inlined_call_operand.vmem [shape: bf16[128,128], index: 7, kind: input, shape index: {}]
  %s8 = inlined_call_operand.vmem [shape: f32[1,128], index: 8, kind: input, shape index: {}]
  %s9 = inlined_call_operand.vmem [shape: f32[8,128], index: 9, kind: output, shape index: {}]
  %s10 = sld [smem:[#allocation0]]
  $region62: #{lstm_classifier_forward.1} parent=0
    _
  %s12 = ssub.s32 1, %s10
  %s13 = scalar_select 0, %s12, %s10
  $region1: #{lstm_classifier_forward.1} parent=0
    #allocation3 [shape = 'u8[131072]{0}', space=vmem, size = 0x20000, scoped, tag = 'input window, operand 1, single buffered']
    #allocation4 [shape = 's32[1]{0}', space=sflag, size = 0x4, scoped, tag = 'scoped memory for lstm_classifier_forward.1']
    #allocation5 [shape = 'u8[131072]{0}', space=vmem, size = 0x20000, scoped, tag = 'input window, operand 2, single buffered']
    #allocation6 [shape = 's32[1]{0}', space=sflag, size = 0x4, scoped, tag = 'scoped memory for lstm_classifier_forward.1']
    #allocation7 [shape = 'u8[131072]{0}', space=vmem, size = 0x20000, scoped, tag = 'input window, operand 4, single buffered']
    #allocation8 [shape = 'u8[131072]{0}', space=vmem, size = 0x20000, scoped, tag = 'input window, operand 5, single buffered']
    #allocation9 [shape = 's32[1]{0}', space=sflag, size = 0x4, scoped, tag = 'scoped memory for lstm_classifier_forward.1']
    %14 = vsyncpa [#allocation4], 0
    %15 = vsyncpa [#allocation6], 0
    %16 = vsyncpa [#allocation9], 0
    // Predicated region
    $region2: #{lstm_classifier_forward.1} parent=1 // pred_check
      _
    $region3: #{lstm_classifier_forward.1} parent=1 // pred_check_branch
      %18 = sbr.rel (0) target = $region5
    $region4: #{lstm_classifier_forward.1} parent=1 // pred_region
      _
    $region5: #{lstm_classifier_forward.1} parent=1 // pred_fallthru
      _
    // Predicated region
    $region6: #{lstm_classifier_forward.1} parent=1 // pred_check
      _
    $region7: #{lstm_classifier_forward.1} parent=1 // pred_check_branch
      %20 = sbr.rel (0) target = $region9
    $region8: #{lstm_classifier_forward.1} parent=1 // pred_region
      %s22 = ssub.s32 4096, 4096
      %23 = vsyncadd [#allocation4], %s22
      %s24 = sshll.u32 [#allocation3], 4
      %s25 = int_to_ptr.vmem [resolvable:$true] %s24
      %30 = dma.hbm_to_vmem [thread:$0]  %s1, 4096, %s25, [#allocation4], 256, 256, 16
    $region9: #{lstm_classifier_forward.1} parent=1 // pred_fallthru
      _
    // Predicated region
    $region10: #{lstm_classifier_forward.1} parent=1 // pred_check
      _
    $region11: #{lstm_classifier_forward.1} parent=1 // pred_check_branch
      %32 = sbr.rel (0) target = $region13
    $region12: #{lstm_classifier_forward.1} parent=1 // pred_region
      %s34 = ssub.s32 4096, 4096
      %35 = vsyncadd [#allocation6], %s34
      %s36 = sshll.u32 [#allocation5], 4
      %s37 = int_to_ptr.vmem [resolvable:$true] %s36
      %42 = dma.hbm_to_vmem [thread:$0]  %s2, 4096, %s37, [#allocation6], 256, 256, 16
    $region13: #{lstm_classifier_forward.1} parent=1 // pred_fallthru
      _
    // Predicated region
    $region14: #{lstm_classifier_forward.1} parent=1 // pred_check
      _
    $region15: #{lstm_classifier_forward.1} parent=1 // pred_check_branch
      %44 = sbr.rel (0) target = $region17
    $region16: #{lstm_classifier_forward.1} parent=1 // pred_region
      _
    $region17: #{lstm_classifier_forward.1} parent=1 // pred_fallthru
      _
    // Predicated region
    $region18: #{lstm_classifier_forward.1} parent=1 // pred_check
      _
    $region19: #{lstm_classifier_forward.1} parent=1 // pred_check_branch
      %46 = sbr.rel (0) target = $region21
    $region20: #{lstm_classifier_forward.1} parent=1 // pred_region
      %s48 = ssub.s32 4096, 4096
      %49 = vsyncadd [#allocation6], %s48
      %s50 = sshll.u32 [#allocation7], 4
      %s51 = int_to_ptr.vmem [resolvable:$true] %s50
      %56 = dma.hbm_to_vmem [thread:$0]  %s4, 4096, %s51, [#allocation6], 256, 256, 16
    $region21: #{lstm_classifier_forward.1} parent=1 // pred_fallthru
      _
    // Predicated region
    $region22: #{lstm_classifier_forward.1} parent=1 // pred_check
      _
    $region23: #{lstm_classifier_forward.1} parent=1 // pred_check_branch
      %58 = sbr.rel (0) target = $region25
    $region24: #{lstm_classifier_forward.1} parent=1 // pred_region
      %s60 = ssub.s32 4096, 4096
      %61 = vsyncadd [#allocation9], %s60
      %s62 = sshll.u32 [#allocation8], 4
      %s63 = int_to_ptr.vmem [resolvable:$true] %s62
      %68 = dma.hbm_to_vmem [thread:$0]  %s5, 4096, %s63, [#allocation9], 256, 256, 16
    $region25: #{lstm_classifier_forward.1} parent=1 // pred_fallthru
      _
    // Predicated region
    $region26: #{lstm_classifier_forward.1} parent=1 // pred_check
      _
    $region27: #{lstm_classifier_forward.1} parent=1 // pred_check_branch
      %70 = sbr.rel (0) target = $region29
    $region28: #{lstm_classifier_forward.1} parent=1 // pred_region
      _
    $region29: #{lstm_classifier_forward.1} parent=1 // pred_fallthru
      _
    // Predicated region
    $region30: #{lstm_classifier_forward.1} parent=1 // pred_check
      _
    $region31: #{lstm_classifier_forward.1} parent=1 // pred_check_branch
      %72 = sbr.rel (0) target = $region33
    $region32: #{lstm_classifier_forward.1} parent=1 // pred_region
      _
    $region33: #{lstm_classifier_forward.1} parent=1 // pred_fallthru
      _
    // Predicated region
    $region34: #{lstm_classifier_forward.1} parent=1 // pred_check
      _
    $region35: #{lstm_classifier_forward.1} parent=1 // pred_check_branch
      %74 = sbr.rel (0) target = $region37
    $region36: #{lstm_classifier_forward.1} parent=1 // pred_region
      _
    $region37: #{lstm_classifier_forward.1} parent=1 // pred_fallthru
      _
    // Predicated region
    $region38: #{lstm_classifier_forward.1} parent=1 // pred_check
      _
    $region39: #{lstm_classifier_forward.1} parent=1 // pred_check_branch
      %76 = sbr.rel (0) target = $region41
    $region40: #{lstm_classifier_forward.1} parent=1 // pred_region
      %77 = dma.done [#allocation4], 4096
    $region41: #{lstm_classifier_forward.1} parent=1 // pred_fallthru
      _
    // Predicated region
    $region42: #{lstm_classifier_forward.1} parent=1 // pred_check
      _
    $region43: #{lstm_classifier_forward.1} parent=1 // pred_check_branch
      %79 = sbr.rel (0) target = $region45
    $region44: #{lstm_classifier_forward.1} parent=1 // pred_region
      %80 = dma.done [#allocation6], 4096
    $region45: #{lstm_classifier_forward.1} parent=1 // pred_fallthru
      _
    // Predicated region
    $region46: #{lstm_classifier_forward.1} parent=1 // pred_check
      _
    $region47: #{lstm_classifier_forward.1} parent=1 // pred_check_branch
      %82 = sbr.rel (0) target = $region49
    $region48: #{lstm_classifier_forward.1} parent=1 // pred_region
      %83 = dma.done [#allocation6], 4096
    $region49: #{lstm_classifier_forward.1} parent=1 // pred_fallthru
      _
    // Predicated region
    $region50: #{lstm_classifier_forward.1} parent=1 // pred_check
      _
    $region51: #{lstm_classifier_forward.1} parent=1 // pred_check_branch
      %85 = sbr.rel (0) target = $region53
    $region52: #{lstm_classifier_forward.1} parent=1 // pred_region
      %86 = dma.done [#allocation9], 4096
    $region53: #{lstm_classifier_forward.1} parent=1 // pred_fallthru
      _
    %v88 = vld [vmem:[%s0] sm:$0xf]
    %v89 = vld [vmem:[%s0 + $0x4] sm:$0xf]
    %v90 = vld [vmem:[%s0 + $0x8] sm:$0xf]
    %v91 = vld [vmem:[%s0 + $0xc] sm:$0xf]
    %v92 = vld [vmem:[%s0 + $0x10] sm:$0xf]
    %v93 = vld [vmem:[%s0 + $0x14] sm:$0xf]
    %v94 = vld [vmem:[%s0 + $0x18] sm:$0xf]
    %v95 = vld [vmem:[%s0 + $0x1c] sm:$0xf]
    %v96 = vld [vmem:[#allocation3] sm:$0xff]
    %v97 = vld [vmem:[#allocation3 + $0x8] sm:$0xff]
    %v98 = vld [vmem:[#allocation3 + $0x10] sm:$0xff]
    %v99 = vld [vmem:[#allocation3 + $0x18] sm:$0xff]
    %v100 = vld [vmem:[#allocation3 + $0x20] sm:$0xff]
    %v101 = vld [vmem:[#allocation3 + $0x28] sm:$0xff]
    %v102 = vld [vmem:[#allocation3 + $0x30] sm:$0xff]
    %v103 = vld [vmem:[#allocation3 + $0x38] sm:$0xff]
    %v104 = vld [vmem:[#allocation3 + $0x40] sm:$0xff]
    %v105 = vld [vmem:[#allocation3 + $0x48] sm:$0xff]
    %v106 = vld [vmem:[#allocation3 + $0x50] sm:$0xff]
    %v107 = vld [vmem:[#allocation3 + $0x58] sm:$0xff]
    %v108 = vld [vmem:[#allocation3 + $0x60] sm:$0xff]
    %v109 = vld [vmem:[#allocation3 + $0x68] sm:$0xff]
    %v110 = vld [vmem:[#allocation3 + $0x70] sm:$0xff]
    %v111 = vld [vmem:[#allocation3 + $0x78] sm:$0xff]
    %v112 = vld [vmem:[#allocation3 + $0x80] sm:$0xff]
    %v113 = vld [vmem:[#allocation3 + $0x88] sm:$0xff]
    %v114 = vld [vmem:[#allocation3 + $0x90] sm:$0xff]
    %v115 = vld [vmem:[#allocation3 + $0x98] sm:$0xff]
    %v116 = vld [vmem:[#allocation3 + $0xa0] sm:$0xff]
    %v117 = vld [vmem:[#allocation3 + $0xa8] sm:$0xff]
    %v118 = vld [vmem:[#allocation3 + $0xb0] sm:$0xff]
    %v119 = vld [vmem:[#allocation3 + $0xb8] sm:$0xff]
    %v120 = vld [vmem:[#allocation3 + $0xc0] sm:$0xff]
    %v121 = vld [vmem:[#allocation3 + $0xc8] sm:$0xff]
    %v122 = vld [vmem:[#allocation3 + $0xd0] sm:$0xff]
    %v123 = vld [vmem:[#allocation3 + $0xd8] sm:$0xff]
    %v124 = vld [vmem:[#allocation3 + $0xe0] sm:$0xff]
    %v125 = vld [vmem:[#allocation3 + $0xe8] sm:$0xff]
    %v126 = vld [vmem:[#allocation3 + $0xf0] sm:$0xff]
    %v127 = vld [vmem:[#allocation3 + $0xf8] sm:$0xff]
    %v128 = vld [vmem:[%s3] sm:$0xf]
    %v130 = vlaneseq
    %v131 = vshrl.u32 %v130, 7
    %v132 = vsub.s32 0, %v131
    %v133 = vrot.slane %v128, %v132
    %v134 = vlaneseq
    %v135 = vshrl.u32 %v134, 7
    %v136 = vsub.s32 1, %v135
    %v137 = vrot.slane %v128, %v136
    %v138 = vlaneseq
    %v139 = vshrl.u32 %v138, 7
    %v140 = vsub.s32 2, %v139
    %v141 = vrot.slane %v128, %v140
    %v142 = vlaneseq
    %v143 = vshrl.u32 %v142, 7
    %v144 = vsub.s32 3, %v143
    %v145 = vrot.slane %v128, %v144
    %v158 = vunpack.c.l.b16 %v88
    %v159 = vunpack.c.l.b16 %v89
    %v160 = vunpack.c.l.b16 %v90
    %v161 = vunpack.c.l.b16 %v91
    %v162 = vunpack.c.l.b16 %v92
    %v163 = vunpack.c.l.b16 %v93
    %v164 = vunpack.c.l.b16 %v94
    %v165 = vunpack.c.l.b16 %v95
    %v166 = vpack.c.b16 %v159, %v158
    %v167 = vpack.c.b16 %v161, %v160
    %v168 = vpack.c.b16 %v163, %v162
    %v169 = vpack.c.b16 %v165, %v164
    %v206 = vunpack.c.l.b16 %v96
    %v207 = vunpack.c.h.b16 %v96
    %v208 = vunpack.c.l.b16 %v97
    %v209 = vunpack.c.h.b16 %v97
    %v210 = vunpack.c.l.b16 %v98
    %v211 = vunpack.c.h.b16 %v98
    %v212 = vunpack.c.l.b16 %v99
    %v213 = vunpack.c.h.b16 %v99
    %v214 = vunpack.c.l.b16 %v100
    %v215 = vunpack.c.h.b16 %v100
    %v216 = vunpack.c.l.b16 %v101
    %v217 = vunpack.c.h.b16 %v101
    %v218 = vunpack.c.l.b16 %v102
    %v219 = vunpack.c.h.b16 %v102
    %v220 = vunpack.c.l.b16 %v103
    %v221 = vunpack.c.h.b16 %v103
    %v222 = vunpack.c.l.b16 %v104
    %v223 = vunpack.c.h.b16 %v104
    %v224 = vunpack.c.l.b16 %v105
    %v225 = vunpack.c.h.b16 %v105
    %v226 = vunpack.c.l.b16 %v106
    %v227 = vunpack.c.h.b16 %v106
    %v228 = vunpack.c.l.b16 %v107
    %v229 = vunpack.c.h.b16 %v107
    %v230 = vunpack.c.l.b16 %v108
    %v231 = vunpack.c.h.b16 %v108
    %v232 = vunpack.c.l.b16 %v109
    %v233 = vunpack.c.h.b16 %v109
    %v234 = vunpack.c.l.b16 %v110
    %v235 = vunpack.c.h.b16 %v110
    %v236 = vunpack.c.l.b16 %v111
    %v237 = vunpack.c.h.b16 %v111
    %v238 = vunpack.c.l.b16 %v112
    %v239 = vunpack.c.h.b16 %v112
    %v240 = vunpack.c.l.b16 %v113
    %v241 = vunpack.c.h.b16 %v113
    %v242 = vunpack.c.l.b16 %v114
    %v243 = vunpack.c.h.b16 %v114
    %v244 = vunpack.c.l.b16 %v115
    %v245 = vunpack.c.h.b16 %v115
    %v246 = vunpack.c.l.b16 %v116
    %v247 = vunpack.c.h.b16 %v116
    %v248 = vunpack.c.l.b16 %v117
    %v249 = vunpack.c.h.b16 %v117
    %v250 = vunpack.c.l.b16 %v118
    %v251 = vunpack.c.h.b16 %v118
    %v252 = vunpack.c.l.b16 %v119
    %v253 = vunpack.c.h.b16 %v119
    %v254 = vunpack.c.l.b16 %v120
    %v255 = vunpack.c.h.b16 %v120
    %v256 = vunpack.c.l.b16 %v121
    %v257 = vunpack.c.h.b16 %v121
    %v258 = vunpack.c.l.b16 %v122
    %v259 = vunpack.c.h.b16 %v122
    %v260 = vunpack.c.l.b16 %v123
    %v261 = vunpack.c.h.b16 %v123
    %v262 = vunpack.c.l.b16 %v124
    %v263 = vunpack.c.h.b16 %v124
    %v264 = vunpack.c.l.b16 %v125
    %v265 = vunpack.c.h.b16 %v125
    %v266 = vunpack.c.l.b16 %v126
    %v267 = vunpack.c.h.b16 %v126
    %v268 = vunpack.c.l.b16 %v127
    %v269 = vunpack.c.h.b16 %v127
    %v270 = vpack.c.b16 %v210, %v206
    %v271 = vpack.c.b16 %v211, %v207
    %v272 = vpack.c.b16 %v212, %v208
    %v273 = vpack.c.b16 %v213, %v209
    %v274 = vpack.c.b16 %v218, %v214
    %v275 = vpack.c.b16 %v219, %v215
    %v276 = vpack.c.b16 %v220, %v216
    %v277 = vpack.c.b16 %v221, %v217
    %v278 = vpack.c.b16 %v226, %v222
    %v279 = vpack.c.b16 %v227, %v223
    %v280 = vpack.c.b16 %v228, %v224
    %v281 = vpack.c.b16 %v229, %v225
    %v282 = vpack.c.b16 %v234, %v230
    %v283 = vpack.c.b16 %v235, %v231
    %v284 = vpack.c.b16 %v236, %v232
    %v285 = vpack.c.b16 %v237, %v233
    %v286 = vpack.c.b16 %v242, %v238
    %v287 = vpack.c.b16 %v243, %v239
    %v288 = vpack.c.b16 %v244, %v240
    %v289 = vpack.c.b16 %v245, %v241
    %v290 = vpack.c.b16 %v250, %v246
    %v291 = vpack.c.b16 %v251, %v247
    %v292 = vpack.c.b16 %v252, %v248
    %v293 = vpack.c.b16 %v253, %v249
    %v294 = vpack.c.b16 %v258, %v254
    %v295 = vpack.c.b16 %v259, %v255
    %v296 = vpack.c.b16 %v260, %v256
    %v297 = vpack.c.b16 %v261, %v257
    %v298 = vpack.c.b16 %v266, %v262
    %v299 = vpack.c.b16 %v267, %v263
    %v300 = vpack.c.b16 %v268, %v264
    %v301 = vpack.c.b16 %v269, %v265
    %334 = vmatprep.subr.bf16.mxu0 %v271
    %335 = vmatpush1.bf16.msra.mxu0 %v270
    %336 = vmatprep.subr.bf16.mxu0 %v275
    %337 = vmatpush1.bf16.msra.mxu0 %v274
    %338 = vmatprep.subr.bf16.mxu0 %v279
    %339 = vmatpush1.bf16.msra.mxu0 %v278
    %340 = vmatprep.subr.bf16.mxu0 %v283
    %341 = vmatpush1.bf16.msra.mxu0 %v282
    %342 = vmatprep.subr.bf16.mxu0 %v287
    %343 = vmatpush1.bf16.msra.mxu0 %v286
    %344 = vmatprep.subr.bf16.mxu0 %v291
    %345 = vmatpush1.bf16.msra.mxu0 %v290
    %346 = vmatprep.subr.bf16.mxu0 %v295
    %347 = vmatpush1.bf16.msra.mxu0 %v294
    %348 = vmatprep.subr.bf16.mxu0 %v299
    %349 = vmatpush1.bf16.msra.mxu0 %v298
    %350 = vmatprep.subr.bf16.mxu0 0
    %351 = vmatpush1.bf16.msra.mxu0 0
    %352 = vmatprep.subr.bf16.mxu0 0
    %353 = vmatpush1.bf16.msra.mxu0 0
    %354 = vmatprep.subr.bf16.mxu0 0
    %355 = vmatpush1.bf16.msra.mxu0 0
    %356 = vmatprep.subr.bf16.mxu0 0
    %357 = vmatpush1.bf16.msra.mxu0 0
    %358 = vmatprep.subr.bf16.mxu0 0
    %359 = vmatpush1.bf16.msra.mxu0 0
    %360 = vmatprep.subr.bf16.mxu0 0
    %361 = vmatpush1.bf16.msra.mxu0 0
    %362 = vmatprep.subr.bf16.mxu0 0
    %363 = vmatpush1.bf16.msra.mxu0 0
    %364 = vmatprep.subr.bf16.mxu0 0
    %365 = vmatpush1.bf16.msra.mxu0 0
    %366 = vmatprep.mubr.bf16.mxu0 0
    %367 = vmatmul.mubr.bf16.gmra.mrb[0].mxu0 %v166
    %v368 = vpop.f32.mrb[0].mxu0
    %v369 = vadd.f32 %v133, %v368
    %v370 = vpop.f32.mrb[0].mxu0
    %v371 = vadd.f32 %v137, %v370
    %v372 = vpop.f32.mrb[0].mxu0
    %v373 = vadd.f32 %v133, %v372
    %v374 = vpop.f32.mrb[0].mxu0
    %v375 = vadd.f32 %v137, %v374
    %376 = vmatprep.mubr.bf16.mxu0 0
    %377 = vmatmul.mubr.bf16.gmra.mrb[0].mxu0 %v167
    %v378 = vpop.f32.mrb[0].mxu0
    %v379 = vadd.f32 %v133, %v378
    %v380 = vpop.f32.mrb[0].mxu0
    %v381 = vadd.f32 %v137, %v380
    %v382 = vpop.f32.mrb[0].mxu0
    %v383 = vadd.f32 %v133, %v382
    %v384 = vpop.f32.mrb[0].mxu0
    %v385 = vadd.f32 %v137, %v384
    %386 = vmatprep.mubr.bf16.mxu0 0
    %387 = vmatmul.mubr.bf16.gmra.mrb[0].mxu0 %v168
    %v388 = vpop.f32.mrb[0].mxu0
    %v389 = vadd.f32 %v133, %v388
    %v390 = vpop.f32.mrb[0].mxu0
    %v391 = vadd.f32 %v137, %v390
    %v392 = vpop.f32.mrb[0].mxu0
    %v393 = vadd.f32 %v133, %v392
    %v394 = vpop.f32.mrb[0].mxu0
    %v395 = vadd.f32 %v137, %v394
    %396 = vmatprep.mubr.bf16.mxu0 0
    %397 = vmatmul.mubr.bf16.gmra.mrb[0].mxu0 %v169
    %v398 = vpop.f32.mrb[0].mxu0
    %v399 = vadd.f32 %v133, %v398
    %v400 = vpop.f32.mrb[0].mxu0
    %v401 = vadd.f32 %v137, %v400
    %v402 = vpop.f32.mrb[0].mxu0
    %v403 = vadd.f32 %v133, %v402
    %v404 = vpop.f32.mrb[0].mxu0
    %v405 = vadd.f32 %v137, %v404
    %406 = vdwg.mxu0
    %407 = vmatprep.subr.bf16.mxu0 %v273
    %408 = vmatpush1.bf16.msra.mxu0 %v272
    %409 = vmatprep.subr.bf16.mxu0 %v277
    %410 = vmatpush1.bf16.msra.mxu0 %v276
    %411 = vmatprep.subr.bf16.mxu0 %v281
    %412 = vmatpush1.bf16.msra.mxu0 %v280
    %413 = vmatprep.subr.bf16.mxu0 %v285
    %414 = vmatpush1.bf16.msra.mxu0 %v284
    %415 = vmatprep.subr.bf16.mxu0 %v289
    %416 = vmatpush1.bf16.msra.mxu0 %v288
    %417 = vmatprep.subr.bf16.mxu0 %v293
    %418 = vmatpush1.bf16.msra.mxu0 %v292
    %419 = vmatprep.subr.bf16.mxu0 %v297
    %420 = vmatpush1.bf16.msra.mxu0 %v296
    %421 = vmatprep.subr.bf16.mxu0 %v301
    %422 = vmatpush1.bf16.msra.mxu0 %v300
    %423 = vmatprep.subr.bf16.mxu0 0
    %424 = vmatpush1.bf16.msra.mxu0 0
    %425 = vmatprep.subr.bf16.mxu0 0
    %426 = vmatpush1.bf16.msra.mxu0 0
    %427 = vmatprep.subr.bf16.mxu0 0
    %428 = vmatpush1.bf16.msra.mxu0 0
    %429 = vmatprep.subr.bf16.mxu0 0
    %430 = vmatpush1.bf16.msra.mxu0 0
    %431 = vmatprep.subr.bf16.mxu0 0
    %432 = vmatpush1.bf16.msra.mxu0 0
    %433 = vmatprep.subr.bf16.mxu0 0
    %434 = vmatpush1.bf16.msra.mxu0 0
    %435 = vmatprep.subr.bf16.mxu0 0
    %436 = vmatpush1.bf16.msra.mxu0 0
    %437 = vmatprep.subr.bf16.mxu0 0
    %438 = vmatpush1.bf16.msra.mxu0 0
    %439 = vmatprep.mubr.bf16.mxu0 0
    %440 = vmatmul.mubr.bf16.gmra.mrb[0].mxu0 %v166
    %v441 = vpop.f32.mrb[0].mxu0
    %v442 = vadd.f32 %v141, %v441
    %v443 = vpop.f32.mrb[0].mxu0
    %v444 = vadd.f32 %v145, %v443
    %v445 = vpop.f32.mrb[0].mxu0
    %v446 = vadd.f32 %v141, %v445
    %v447 = vpop.f32.mrb[0].mxu0
    %v448 = vadd.f32 %v145, %v447
    %449 = vmatprep.mubr.bf16.mxu0 0
    %450 = vmatmul.mubr.bf16.gmra.mrb[0].mxu0 %v167
    %v451 = vpop.f32.mrb[0].mxu0
    %v452 = vadd.f32 %v141, %v451
    %v453 = vpop.f32.mrb[0].mxu0
    %v454 = vadd.f32 %v145, %v453
    %v455 = vpop.f32.mrb[0].mxu0
    %v456 = vadd.f32 %v141, %v455
    %v457 = vpop.f32.mrb[0].mxu0
    %v458 = vadd.f32 %v145, %v457
    %459 = vmatprep.mubr.bf16.mxu0 0
    %460 = vmatmul.mubr.bf16.gmra.mrb[0].mxu0 %v168
    %v461 = vpop.f32.mrb[0].mxu0
    %v462 = vadd.f32 %v141, %v461
    %v463 = vpop.f32.mrb[0].mxu0
    %v464 = vadd.f32 %v145, %v463
    %v465 = vpop.f32.mrb[0].mxu0
    %v466 = vadd.f32 %v141, %v465
    %v467 = vpop.f32.mrb[0].mxu0
    %v468 = vadd.f32 %v145, %v467
    %469 = vmatprep.mubr.bf16.mxu0 0
    %470 = vmatmul.mubr.bf16.gmra.mrb[0].mxu0 %v169
    %v471 = vpop.f32.mrb[0].mxu0
    %v472 = vadd.f32 %v141, %v471
    %v473 = vpop.f32.mrb[0].mxu0
    %v474 = vadd.f32 %v145, %v473
    %v475 = vpop.f32.mrb[0].mxu0
    %v476 = vadd.f32 %v141, %v475
    %v477 = vpop.f32.mrb[0].mxu0
    %v478 = vadd.f32 %v145, %v477
    %479 = vdwg.mxu0
    %480 = vst [vmem:[#allocation2] sm:$0xff] %v369
    %481 = vst [vmem:[#allocation2 + $0x8] sm:$0xff] %v371
    %482 = vst [vmem:[#allocation2 + $0x10] sm:$0xff] %v442
    %483 = vst [vmem:[#allocation2 + $0x18] sm:$0xff] %v444
    %484 = vst [vmem:[#allocation2 + $0x20] sm:$0xff] %v373
    %485 = vst [vmem:[#allocation2 + $0x28] sm:$0xff] %v375
    %486 = vst [vmem:[#allocation2 + $0x30] sm:$0xff] %v446
    %487 = vst [vmem:[#allocation2 + $0x38] sm:$0xff] %v448
    %488 = vst [vmem:[#allocation2 + $0x40] sm:$0xff] %v379
    %489 = vst [vmem:[#allocation2 + $0x48] sm:$0xff] %v381
    %490 = vst [vmem:[#allocation2 + $0x50] sm:$0xff] %v452
    %491 = vst [vmem:[#allocation2 + $0x58] sm:$0xff] %v454
    %492 = vst [vmem:[#allocation2 + $0x60] sm:$0xff] %v383
    %493 = vst [vmem:[#allocation2 + $0x68] sm:$0xff] %v385
    %494 = vst [vmem:[#allocation2 + $0x70] sm:$0xff] %v456
    %495 = vst [vmem:[#allocation2 + $0x78] sm:$0xff] %v458
    %496 = vst [vmem:[#allocation2 + $0x80] sm:$0xff] %v389
    %497 = vst [vmem:[#allocation2 + $0x88] sm:$0xff] %v391
    %498 = vst [vmem:[#allocation2 + $0x90] sm:$0xff] %v462
    %499 = vst [vmem:[#allocation2 + $0x98] sm:$0xff] %v464
    %500 = vst [vmem:[#allocation2 + $0xa0] sm:$0xff] %v393
    %501 = vst [vmem:[#allocation2 + $0xa8] sm:$0xff] %v395
    %502 = vst [vmem:[#allocation2 + $0xb0] sm:$0xff] %v466
    %503 = vst [vmem:[#allocation2 + $0xb8] sm:$0xff] %v468
    %504 = vst [vmem:[#allocation2 + $0xc0] sm:$0xff] %v399
    %505 = vst [vmem:[#allocation2 + $0xc8] sm:$0xff] %v401
    %506 = vst [vmem:[#allocation2 + $0xd0] sm:$0xff] %v472
    %507 = vst [vmem:[#allocation2 + $0xd8] sm:$0xff] %v474
    %508 = vst [vmem:[#allocation2 + $0xe0] sm:$0xff] %v403
    %509 = vst [vmem:[#allocation2 + $0xe8] sm:$0xff] %v405
    %510 = vst [vmem:[#allocation2 + $0xf0] sm:$0xff] %v476
    %511 = vst [vmem:[#allocation2 + $0xf8] sm:$0xff] %v478
    %v512 = vld [vmem:[#allocation5] sm:$0xff]
    %v513 = vld [vmem:[#allocation5 + $0x8] sm:$0xff]
    %v514 = vld [vmem:[#allocation5 + $0x10] sm:$0xff]
    %v515 = vld [vmem:[#allocation5 + $0x18] sm:$0xff]
    %v516 = vld [vmem:[#allocation5 + $0x20] sm:$0xff]
    %v517 = vld [vmem:[#allocation5 + $0x28] sm:$0xff]
    %v518 = vld [vmem:[#allocation5 + $0x30] sm:$0xff]
    %v519 = vld [vmem:[#allocation5 + $0x38] sm:$0xff]
    %v520 = vld [vmem:[#allocation5 + $0x40] sm:$0xff]
    %v521 = vld [vmem:[#allocation5 + $0x48] sm:$0xff]
    %v522 = vld [vmem:[#allocation5 + $0x50] sm:$0xff]
    %v523 = vld [vmem:[#allocation5 + $0x58] sm:$0xff]
    %v524 = vld [vmem:[#allocation5 + $0x60] sm:$0xff]
    %v525 = vld [vmem:[#allocation5 + $0x68] sm:$0xff]
    %v526 = vld [vmem:[#allocation5 + $0x70] sm:$0xff]
    %v527 = vld [vmem:[#allocation5 + $0x78] sm:$0xff]
    %v528 = vld [vmem:[#allocation5 + $0x80] sm:$0xff]
    %v529 = vld [vmem:[#allocation5 + $0x88] sm:$0xff]
    %v530 = vld [vmem:[#allocation5 + $0x90] sm:$0xff]
    %v531 = vld [vmem:[#allocation5 + $0x98] sm:$0xff]
    %v532 = vld [vmem:[#allocation5 + $0xa0] sm:$0xff]
    %v533 = vld [vmem:[#allocation5 + $0xa8] sm:$0xff]
    %v534 = vld [vmem:[#allocation5 + $0xb0] sm:$0xff]
    %v535 = vld [vmem:[#allocation5 + $0xb8] sm:$0xff]
    %v536 = vld [vmem:[#allocation5 + $0xc0] sm:$0xff]
    %v537 = vld [vmem:[#allocation5 + $0xc8] sm:$0xff]
    %v538 = vld [vmem:[#allocation5 + $0xd0] sm:$0xff]
    %v539 = vld [vmem:[#allocation5 + $0xd8] sm:$0xff]
    %v540 = vld [vmem:[#allocation5 + $0xe0] sm:$0xff]
    %v541 = vld [vmem:[#allocation5 + $0xe8] sm:$0xff]
    %v542 = vld [vmem:[#allocation5 + $0xf0] sm:$0xff]
    %v543 = vld [vmem:[#allocation5 + $0xf8] sm:$0xff]
    %v544 = vld [vmem:[#allocation2] sm:$0xff]
    %v545 = vld [vmem:[#allocation2 + $0x8] sm:$0xff]
    %v546 = vld [vmem:[#allocation2 + $0x10] sm:$0xff]
    %v547 = vld [vmem:[#allocation2 + $0x18] sm:$0xff]
    %v580 = vunpack.c.l.b16 %v512
    %v581 = vunpack.c.h.b16 %v512
    %v582 = vunpack.c.l.b16 %v513
    %v583 = vunpack.c.h.b16 %v513
    %v584 = vunpack.c.l.b16 %v514
    %v585 = vunpack.c.h.b16 %v514
    %v586 = vunpack.c.l.b16 %v515
    %v587 = vunpack.c.h.b16 %v515
    %v588 = vunpack.c.l.b16 %v516
    %v589 = vunpack.c.h.b16 %v516
    %v590 = vunpack.c.l.b16 %v517
    %v591 = vunpack.c.h.b16 %v517
    %v592 = vunpack.c.l.b16 %v518
    %v593 = vunpack.c.h.b16 %v518
    %v594 = vunpack.c.l.b16 %v519
    %v595 = vunpack.c.h.b16 %v519
    %v596 = vunpack.c.l.b16 %v520
    %v597 = vunpack.c.h.b16 %v520
    %v598 = vunpack.c.l.b16 %v521
    %v599 = vunpack.c.h.b16 %v521
    %v600 = vunpack.c.l.b16 %v522
    %v601 = vunpack.c.h.b16 %v522
    %v602 = vunpack.c.l.b16 %v523
    %v603 = vunpack.c.h.b16 %v523
    %v604 = vunpack.c.l.b16 %v524
    %v605 = vunpack.c.h.b16 %v524
    %v606 = vunpack.c.l.b16 %v525
    %v607 = vunpack.c.h.b16 %v525
    %v608 = vunpack.c.l.b16 %v526
    %v609 = vunpack.c.h.b16 %v526
    %v610 = vunpack.c.l.b16 %v527
    %v611 = vunpack.c.h.b16 %v527
    %v612 = vunpack.c.l.b16 %v528
    %v613 = vunpack.c.h.b16 %v528
    %v614 = vunpack.c.l.b16 %v529
    %v615 = vunpack.c.h.b16 %v529
    %v616 = vunpack.c.l.b16 %v530
    %v617 = vunpack.c.h.b16 %v530
    %v618 = vunpack.c.l.b16 %v531
    %v619 = vunpack.c.h.b16 %v531
    %v620 = vunpack.c.l.b16 %v532
    %v621 = vunpack.c.h.b16 %v532
    %v622 = vunpack.c.l.b16 %v533
    %v623 = vunpack.c.h.b16 %v533
    %v624 = vunpack.c.l.b16 %v534
    %v625 = vunpack.c.h.b16 %v534
    %v626 = vunpack.c.l.b16 %v535
    %v627 = vunpack.c.h.b16 %v535
    %v628 = vunpack.c.l.b16 %v536
    %v629 = vunpack.c.h.b16 %v536
    %v630 = vunpack.c.l.b16 %v537
    %v631 = vunpack.c.h.b16 %v537
    %v632 = vunpack.c.l.b16 %v538
    %v633 = vunpack.c.h.b16 %v538
    %v634 = vunpack.c.l.b16 %v539
    %v635 = vunpack.c.h.b16 %v539
    %v636 = vunpack.c.l.b16 %v540
    %v637 = vunpack.c.h.b16 %v540
    %v638 = vunpack.c.l.b16 %v541
    %v639 = vunpack.c.h.b16 %v541
    %v640 = vunpack.c.l.b16 %v542
    %v641 = vunpack.c.h.b16 %v542
    %v642 = vunpack.c.l.b16 %v543
    %v643 = vunpack.c.h.b16 %v543
    %v644 = vpack.c.b16 %v584, %v580
    %v645 = vpack.c.b16 %v585, %v581
    %v646 = vpack.c.b16 %v586, %v582
    %v647 = vpack.c.b16 %v587, %v583
    %v648 = vpack.c.b16 %v592, %v588
    %v649 = vpack.c.b16 %v593, %v589
    %v650 = vpack.c.b16 %v594, %v590
    %v651 = vpack.c.b16 %v595, %v591
    %v652 = vpack.c.b16 %v600, %v596
    %v653 = vpack.c.b16 %v601, %v597
    %v654 = vpack.c.b16 %v602, %v598
    %v655 = vpack.c.b16 %v603, %v599
    %v656 = vpack.c.b16 %v608, %v604
    %v657 = vpack.c.b16 %v609, %v605
    %v658 = vpack.c.b16 %v610, %v606
    %v659 = vpack.c.b16 %v611, %v607
    %v660 = vpack.c.b16 %v616, %v612
    %v661 = vpack.c.b16 %v617, %v613
    %v662 = vpack.c.b16 %v618, %v614
    %v663 = vpack.c.b16 %v619, %v615
    %v664 = vpack.c.b16 %v624, %v620
    %v665 = vpack.c.b16 %v625, %v621
    %v666 = vpack.c.b16 %v626, %v622
    %v667 = vpack.c.b16 %v627, %v623
    %v668 = vpack.c.b16 %v632, %v628
    %v669 = vpack.c.b16 %v633, %v629
    %v670 = vpack.c.b16 %v634, %v630
    %v671 = vpack.c.b16 %v635, %v631
    %v672 = vpack.c.b16 %v640, %v636
    %v673 = vpack.c.b16 %v641, %v637
    %v674 = vpack.c.b16 %v642, %v638
    %v675 = vpack.c.b16 %v643, %v639
    %708 = vmatprep.subr.bf16.mxu0 %v645
    %709 = vmatpush1.bf16.msra.mxu0 %v644
    %710 = vmatprep.subr.bf16.mxu0 %v649
    %711 = vmatpush1.bf16.msra.mxu0 %v648
    %712 = vmatprep.subr.bf16.mxu0 %v653
    %713 = vmatpush1.bf16.msra.mxu0 %v652
    %714 = vmatprep.subr.bf16.mxu0 %v657
    %715 = vmatpush1.bf16.msra.mxu0 %v656
    %716 = vmatprep.subr.bf16.mxu0 %v661
    %717 = vmatpush1.bf16.msra.mxu0 %v660
    %718 = vmatprep.subr.bf16.mxu0 %v665
    %719 = vmatpush1.bf16.msra.mxu0 %v664
    %720 = vmatprep.subr.bf16.mxu0 %v669
    %721 = vmatpush1.bf16.msra.mxu0 %v668
    %722 = vmatprep.subr.bf16.mxu0 %v673
    %723 = vmatpush1.bf16.msra.mxu0 %v672
    %724 = vmatprep.subr.bf16.mxu0 0
    %725 = vmatpush1.bf16.msra.mxu0 0
    %726 = vmatprep.subr.bf16.mxu0 0
    %727 = vmatpush1.bf16.msra.mxu0 0
    %728 = vmatprep.subr.bf16.mxu0 0
    %729 = vmatpush1.bf16.msra.mxu0 0
    %730 = vmatprep.subr.bf16.mxu0 0
    %731 = vmatpush1.bf16.msra.mxu0 0
    %732 = vmatprep.subr.bf16.mxu0 0
    %733 = vmatpush1.bf16.msra.mxu0 0
    %734 = vmatprep.subr.bf16.mxu0 0
    %735 = vmatpush1.bf16.msra.mxu0 0
    %736 = vmatprep.subr.bf16.mxu0 0
    %737 = vmatpush1.bf16.msra.mxu0 0
    %738 = vmatprep.subr.bf16.mxu0 0
    %739 = vmatpush1.bf16.msra.mxu0 0
    %740 = vmatprep.mubr.bf16.mxu0 0
    %741 = vmatmul.mubr.bf16.gmra.mrb[0].mxu0 0
    %v742 = vpop.f32.mrb[0].mxu0
    %v743 = vadd.f32 0.0, %v742
    %v744 = vpop.f32.mrb[0].mxu0
    %v745 = vadd.f32 0.0, %v744
    %v746 = vpop.f32.mrb[0].mxu0
    %v747 = vpop.f32.mrb[0].mxu0
    %748 = vdwg.mxu0
    %749 = vmatprep.subr.bf16.mxu0 %v647
    %750 = vmatpush1.bf16.msra.mxu0 %v646
    %751 = vmatprep.subr.bf16.mxu0 %v651
    %752 = vmatpush1.bf16.msra.mxu0 %v650
    %753 = vmatprep.subr.bf16.mxu0 %v655
    %754 = vmatpush1.bf16.msra.mxu0 %v654
    %755 = vmatprep.subr.bf16.mxu0 %v659
    %756 = vmatpush1.bf16.msra.mxu0 %v658
    %757 = vmatprep.subr.bf16.mxu0 %v663
    %758 = vmatpush1.bf16.msra.mxu0 %v662
    %759 = vmatprep.subr.bf16.mxu0 %v667
    %760 = vmatpush1.bf16.msra.mxu0 %v666
    %761 = vmatprep.subr.bf16.mxu0 %v671
    %762 = vmatpush1.bf16.msra.mxu0 %v670
    %763 = vmatprep.subr.bf16.mxu0 %v675
    %764 = vmatpush1.bf16.msra.mxu0 %v674
    %765 = vmatprep.subr.bf16.mxu0 0
    %766 = vmatpush1.bf16.msra.mxu0 0
    %767 = vmatprep.subr.bf16.mxu0 0
    %768 = vmatpush1.bf16.msra.mxu0 0
    %769 = vmatprep.subr.bf16.mxu0 0
    %770 = vmatpush1.bf16.msra.mxu0 0
    %771 = vmatprep.subr.bf16.mxu0 0
    %772 = vmatpush1.bf16.msra.mxu0 0
    %773 = vmatprep.subr.bf16.mxu0 0
    %774 = vmatpush1.bf16.msra.mxu0 0
    %775 = vmatprep.subr.bf16.mxu0 0
    %776 = vmatpush1.bf16.msra.mxu0 0
    %777 = vmatprep.subr.bf16.mxu0 0
    %778 = vmatpush1.bf16.msra.mxu0 0
    %779 = vmatprep.subr.bf16.mxu0 0
    %780 = vmatpush1.bf16.msra.mxu0 0
    %781 = vmatprep.mubr.bf16.mxu0 0
    %782 = vmatmul.mubr.bf16.gmra.mrb[0].mxu0 0
    %v783 = vpop.f32.mrb[0].mxu0
    %v784 = vadd.f32 0.0, %v783
    %v785 = vpop.f32.mrb[0].mxu0
    %v786 = vadd.f32 0.0, %v785
    %v787 = vpop.f32.mrb[0].mxu0
    %v788 = vpop.f32.mrb[0].mxu0
    %789 = vdwg.mxu0
    %v790 = vadd.f32 %v544, %v743
    %v791 = vadd.f32 %v545, %v745
    %v792 = vadd.f32 %v546, %v784
    %v793 = vadd.f32 %v547, %v786
    %v794 = vxor.u32 %v790, 2147483648
    %v795 = vxor.u32 %v791, 2147483648
    %v796 = vxor.u32 %v792, 2147483648
    %v797 = vmul.f32 %v794, 1.442695
    %v798 = vpow.pop %v797
    %v799 = vmul.f32 %v795, 1.442695
    %v800 = vpow.pop %v799
    %v801 = vmul.f32 %v796, 1.442695
    %v802 = vpow.pop %v801
    %v803 = vadd.f32 %v798, 1.0
    %v804 = vadd.f32 %v800, 1.0
    %v805 = vadd.f32 %v802, 1.0
    %v806 = vrcp.pop %v803
    %v807 = vmul.f32 1.0, %v806
    %v808 = vrcp.pop %v804
    %v809 = vmul.f32 1.0, %v808
    %v810 = vrcp.pop %v805
    %v811 = vmul.f32 1.0, %v810
    %v812 = vtanh.pop %v793
    %v813 = vmul.f32 %v809, 0.0
    %v814 = vmul.f32 %v807, %v812
    %v815 = vadd.f32 %v813, %v814
    %v816 = vtanh.pop %v815
    %v817 = vmul.f32 %v811, %v816
    %v818 = vld [vmem:[#allocation2 + $0x20] sm:$0xff]
    %v819 = vld [vmem:[#allocation2 + $0x28] sm:$0xff]
    %v820 = vld [vmem:[#allocation2 + $0x30] sm:$0xff]
    %v821 = vld [vmem:[#allocation2 + $0x38] sm:$0xff]
    %v822 = vpack.c.bf16 %v817, %v817
    %823 = vmatprep.subr.bf16.mxu0 %v645
    %824 = vmatpush1.bf16.msra.mxu0 %v644
    %825 = vmatprep.subr.bf16.mxu0 %v649
    %826 = vmatpush1.bf16.msra.mxu0 %v648
    %827 = vmatprep.subr.bf16.mxu0 %v653
    %828 = vmatpush1.bf16.msra.mxu0 %v652
    %829 = vmatprep.subr.bf16.mxu0 %v657
    %830 = vmatpush1.bf16.msra.mxu0 %v656
    %831 = vmatprep.subr.bf16.mxu0 %v661
    %832 = vmatpush1.bf16.msra.mxu0 %v660
    %833 = vmatprep.subr.bf16.mxu0 %v665
    %834 = vmatpush1.bf16.msra.mxu0 %v664
    %835 = vmatprep.subr.bf16.mxu0 %v669
    %836 = vmatpush1.bf16.msra.mxu0 %v668
    %837 = vmatprep.subr.bf16.mxu0 %v673
    %838 = vmatpush1.bf16.msra.mxu0 %v672
    %839 = vmatprep.subr.bf16.mxu0 0
    %840 = vmatpush1.bf16.msra.mxu0 0
    %841 = vmatprep.subr.bf16.mxu0 0
    %842 = vmatpush1.bf16.msra.mxu0 0
    %843 = vmatprep.subr.bf16.mxu0 0
    %844 = vmatpush1.bf16.msra.mxu0 0
    %845 = vmatprep.subr.bf16.mxu0 0
    %846 = vmatpush1.bf16.msra.mxu0 0
    %847 = vmatprep.subr.bf16.mxu0 0
    %848 = vmatpush1.bf16.msra.mxu0 0
    %849 = vmatprep.subr.bf16.mxu0 0
    %850 = vmatpush1.bf16.msra.mxu0 0
    %851 = vmatprep.subr.bf16.mxu0 0
    %852 = vmatpush1.bf16.msra.mxu0 0
    %853 = vmatprep.subr.bf16.mxu0 0
    %854 = vmatpush1.bf16.msra.mxu0 0
    %855 = vmatprep.mubr.bf16.mxu0 0
    %856 = vmatmul.mubr.bf16.gmra.mrb[0].mxu0 %v822
    %v857 = vpop.f32.mrb[0].mxu0
    %v858 = vadd.f32 0.0, %v857
    %v859 = vpop.f32.mrb[0].mxu0
    %v860 = vadd.f32 0.0, %v859
    %v861 = vpop.f32.mrb[0].mxu0
    %v862 = vpop.f32.mrb[0].mxu0
    %863 = vdwg.mxu0
    %864 = vmatprep.subr.bf16.mxu0 %v647
    %865 = vmatpush1.bf16.msra.mxu0 %v646
    %866 = vmatprep.subr.bf16.mxu0 %v651
    %867 = vmatpush1.bf16.msra.mxu0 %v650
    %868 = vmatprep.subr.bf16.mxu0 %v655
    %869 = vmatpush1.bf16.msra.mxu0 %v654
    %870 = vmatprep.subr.bf16.mxu0 %v659
    %871 = vmatpush1.bf16.msra.mxu0 %v658
    %872 = vmatprep.subr.bf16.mxu0 %v663
    %873 = vmatpush1.bf16.msra.mxu0 %v662
    %874 = vmatprep.subr.bf16.mxu0 %v667
    %875 = vmatpush1.bf16.msra.mxu0 %v666
    %876 = vmatprep.subr.bf16.mxu0 %v671
    %877 = vmatpush1.bf16.msra.mxu0 %v670
    %878 = vmatprep.subr.bf16.mxu0 %v675
    %879 = vmatpush1.bf16.msra.mxu0 %v674
    %880 = vmatprep.subr.bf16.mxu0 0
    %881 = vmatpush1.bf16.msra.mxu0 0
    %882 = vmatprep.subr.bf16.mxu0 0
    %883 = vmatpush1.bf16.msra.mxu0 0
    %884 = vmatprep.subr.bf16.mxu0 0
    %885 = vmatpush1.bf16.msra.mxu0 0
    %886 = vmatprep.subr.bf16.mxu0 0
    %887 = vmatpush1.bf16.msra.mxu0 0
    %888 = vmatprep.subr.bf16.mxu0 0
    %889 = vmatpush1.bf16.msra.mxu0 0
    %890 = vmatprep.subr.bf16.mxu0 0
    %891 = vmatpush1.bf16.msra.mxu0 0
    %892 = vmatprep.subr.bf16.mxu0 0
    %893 = vmatpush1.bf16.msra.mxu0 0
    %894 = vmatprep.subr.bf16.mxu0 0
    %895 = vmatpush1.bf16.msra.mxu0 0
    %896 = vmatprep.mubr.bf16.mxu0 0
    %897 = vmatmul.mubr.bf16.gmra.mrb[0].mxu0 %v822
    %v898 = vpop.f32.mrb[0].mxu0
    %v899 = vadd.f32 0.0, %v898
    %v900 = vpop.f32.mrb[0].mxu0
    %v901 = vadd.f32 0.0, %v900
    %v902 = vpop.f32.mrb[0].mxu0
    %v903 = vpop.f32.mrb[0].mxu0
    %904 = vdwg.mxu0
    %v905 = vadd.f32 %v818, %v858
    %v906 = vadd.f32 %v819, %v860
    %v907 = vadd.f32 %v820, %v899
    %v908 = vadd.f32 %v821, %v901
    %v909 = vxor.u32 %v905, 2147483648
    %v910 = vxor.u32 %v906, 2147483648
    %v911 = vxor.u32 %v907, 2147483648
    %v912 = vmul.f32 %v909, 1.442695
    %v913 = vpow.pop %v912
    %v914 = vmul.f32 %v910, 1.442695
    %v915 = vpow.pop %v914
    %v916 = vmul.f32 %v911, 1.442695
    %v917 = vpow.pop %v916
    %v918 = vadd.f32 %v913, 1.0
    %v919 = vadd.f32 %v915, 1.0
    %v920 = vadd.f32 %v917, 1.0
    %v921 = vrcp.pop %v918
    %v922 = vmul.f32 1.0, %v921
    %v923 = vrcp.pop %v919
    %v924 = vmul.f32 1.0, %v923
    %v925 = vrcp.pop %v920
    %v926 = vmul.f32 1.0, %v925
    %v927 = vtanh.pop %v908
    %v928 = vmul.f32 %v924, %v815
    %v929 = vmul.f32 %v922, %v927
    %v930 = vadd.f32 %v928, %v929
    %v931 = vtanh.pop %v930
    %v932 = vmul.f32 %v926, %v931
    %v933 = vld [vmem:[#allocation2 + $0x40] sm:$0xff]
    %v934 = vld [vmem:[#allocation2 + $0x48] sm:$0xff]
    %v935 = vld [vmem:[#allocation2 + $0x50] sm:$0xff]
    %v936 = vld [vmem:[#allocation2 + $0x58] sm:$0xff]
    %v937 = vpack.c.bf16 %v932, %v932
    %938 = vmatprep.subr.bf16.mxu0 %v645
    %939 = vmatpush1.bf16.msra.mxu0 %v644
    %940 = vmatprep.subr.bf16.mxu0 %v649
    %941 = vmatpush1.bf16.msra.mxu0 %v648
    %942 = vmatprep.subr.bf16.mxu0 %v653
    %943 = vmatpush1.bf16.msra.mxu0 %v652
    %944 = vmatprep.subr.bf16.mxu0 %v657
    %945 = vmatpush1.bf16.msra.mxu0 %v656
    %946 = vmatprep.subr.bf16.mxu0 %v661
    %947 = vmatpush1.bf16.msra.mxu0 %v660
    %948 = vmatprep.subr.bf16.mxu0 %v665
    %949 = vmatpush1.bf16.msra.mxu0 %v664
    %950 = vmatprep.subr.bf16.mxu0 %v669
    %951 = vmatpush1.bf16.msra.mxu0 %v668
    %952 = vmatprep.subr.bf16.mxu0 %v673
    %953 = vmatpush1.bf16.msra.mxu0 %v672
    %954 = vmatprep.subr.bf16.mxu0 0
    %955 = vmatpush1.bf16.msra.mxu0 0
    %956 = vmatprep.subr.bf16.mxu0 0
    %957 = vmatpush1.bf16.msra.mxu0 0
    %958 = vmatprep.subr.bf16.mxu0 0
    %959 = vmatpush1.bf16.msra.mxu0 0
    %960 = vmatprep.subr.bf16.mxu0 0
    %961 = vmatpush1.bf16.msra.mxu0 0
    %962 = vmatprep.subr.bf16.mxu0 0
    %963 = vmatpush1.bf16.msra.mxu0 0
    %964 = vmatprep.subr.bf16.mxu0 0
    %965 = vmatpush1.bf16.msra.mxu0 0
    %966 = vmatprep.subr.bf16.mxu0 0
    %967 = vmatpush1.bf16.msra.mxu0 0
    %968 = vmatprep.subr.bf16.mxu0 0
    %969 = vmatpush1.bf16.msra.mxu0 0
    %970 = vmatprep.mubr.bf16.mxu0 0
    %971 = vmatmul.mubr.bf16.gmra.mrb[0].mxu0 %v937
    %v972 = vpop.f32.mrb[0].mxu0
    %v973 = vadd.f32 0.0, %v972
    %v974 = vpop.f32.mrb[0].mxu0
    %v975 = vadd.f32 0.0, %v974
    %v976 = vpop.f32.mrb[0].mxu0
    %v977 = vpop.f32.mrb[0].mxu0
    %978 = vdwg.mxu0
    %979 = vmatprep.subr.bf16.mxu0 %v647
    %980 = vmatpush1.bf16.msra.mxu0 %v646
    %981 = vmatprep.subr.bf16.mxu0 %v651
    %982 = vmatpush1.bf16.msra.mxu0 %v650
    %983 = vmatprep.subr.bf16.mxu0 %v655
    %984 = vmatpush1.bf16.msra.mxu0 %v654
    %985 = vmatprep.subr.bf16.mxu0 %v659
    %986 = vmatpush1.bf16.msra.mxu0 %v658
    %987 = vmatprep.subr.bf16.mxu0 %v663
    %988 = vmatpush1.bf16.msra.mxu0 %v662
    %989 = vmatprep.subr.bf16.mxu0 %v667
    %990 = vmatpush1.bf16.msra.mxu0 %v666
    %991 = vmatprep.subr.bf16.mxu0 %v671
    %992 = vmatpush1.bf16.msra.mxu0 %v670
    %993 = vmatprep.subr.bf16.mxu0 %v675
    %994 = vmatpush1.bf16.msra.mxu0 %v674
    %995 = vmatprep.subr.bf16.mxu0 0
    %996 = vmatpush1.bf16.msra.mxu0 0
    %997 = vmatprep.subr.bf16.mxu0 0
    %998 = vmatpush1.bf16.msra.mxu0 0
    %999 = vmatprep.subr.bf16.mxu0 0
    %1000 = vmatpush1.bf16.msra.mxu0 0
    %1001 = vmatprep.subr.bf16.mxu0 0
    %1002 = vmatpush1.bf16.msra.mxu0 0
    %1003 = vmatprep.subr.bf16.mxu0 0
    %1004 = vmatpush1.bf16.msra.mxu0 0
    %1005 = vmatprep.subr.bf16.mxu0 0
    %1006 = vmatpush1.bf16.msra.mxu0 0
    %1007 = vmatprep.subr.bf16.mxu0 0
    %1008 = vmatpush1.bf16.msra.mxu0 0
    %1009 = vmatprep.subr.bf16.mxu0 0
    %1010 = vmatpush1.bf16.msra.mxu0 0
    %1011 = vmatprep.mubr.bf16.mxu0 0
    %1012 = vmatmul.mubr.bf16.gmra.mrb[0].mxu0 %v937
    %v1013 = vpop.f32.mrb[0].mxu0
    %v1014 = vadd.f32 0.0, %v1013
    %v1015 = vpop.f32.mrb[0].mxu0
    %v1016 = vadd.f32 0.0, %v1015
    %v1017 = vpop.f32.mrb[0].mxu0
    %v1018 = vpop.f32.mrb[0].mxu0
    %1019 = vdwg.mxu0
    %v1020 = vadd.f32 %v933, %v973
    %v1021 = vadd.f32 %v934, %v975
    %v1022 = vadd.f32 %v935, %v1014
    %v1023 = vadd.f32 %v936, %v1016
    %v1024 = vxor.u32 %v1020, 2147483648
    %v1025 = vxor.u32 %v1021, 2147483648
    %v1026 = vxor.u32 %v1022, 2147483648
    %v1027 = vmul.f32 %v1024, 1.442695
    %v1028 = vpow.pop %v1027
    %v1029 = vmul.f32 %v1025, 1.442695
    %v1030 = vpow.pop %v1029
    %v1031 = vmul.f32 %v1026, 1.442695
    %v1032 = vpow.pop %v1031
    %v1033 = vadd.f32 %v1028, 1.0
    %v1034 = vadd.f32 %v1030, 1.0
    %v1035 = vadd.f32 %v1032, 1.0
    %v1036 = vrcp.pop %v1033
    %v1037 = vmul.f32 1.0, %v1036
    %v1038 = vrcp.pop %v1034
    %v1039 = vmul.f32 1.0, %v1038
    %v1040 = vrcp.pop %v1035
    %v1041 = vmul.f32 1.0, %v1040
    %v1042 = vtanh.pop %v1023
    %v1043 = vmul.f32 %v1039, %v930
    %v1044 = vmul.f32 %v1037, %v1042
    %v1045 = vadd.f32 %v1043, %v1044
    %v1046 = vtanh.pop %v1045
    %v1047 = vmul.f32 %v1041, %v1046
    %v1048 = vld [vmem:[#allocation2 + $0x60] sm:$0xff]
    %v1049 = vld [vmem:[#allocation2 + $0x68] sm:$0xff]
    %v1050 = vld [vmem:[#allocation2 + $0x70] sm:$0xff]
    %v1051 = vld [vmem:[#allocation2 + $0x78] sm:$0xff]
    %v1052 = vpack.c.bf16 %v1047, %v1047
    %1053 = vmatprep.subr.bf16.mxu0 %v645
    %1054 = vmatpush1.bf16.msra.mxu0 %v644
    %1055 = vmatprep.subr.bf16.mxu0 %v649
    %1056 = vmatpush1.bf16.msra.mxu0 %v648
    %1057 = vmatprep.subr.bf16.mxu0 %v653
    %1058 = vmatpush1.bf16.msra.mxu0 %v652
    %1059 = vmatprep.subr.bf16.mxu0 %v657
    %1060 = vmatpush1.bf16.msra.mxu0 %v656
    %1061 = vmatprep.subr.bf16.mxu0 %v661
    %1062 = vmatpush1.bf16.msra.mxu0 %v660
    %1063 = vmatprep.subr.bf16.mxu0 %v665
    %1064 = vmatpush1.bf16.msra.mxu0 %v664
    %1065 = vmatprep.subr.bf16.mxu0 %v669
    %1066 = vmatpush1.bf16.msra.mxu0 %v668
    %1067 = vmatprep.subr.bf16.mxu0 %v673
    %1068 = vmatpush1.bf16.msra.mxu0 %v672
    %1069 = vmatprep.subr.bf16.mxu0 0
    %1070 = vmatpush1.bf16.msra.mxu0 0
    %1071 = vmatprep.subr.bf16.mxu0 0
    %1072 = vmatpush1.bf16.msra.mxu0 0
    %1073 = vmatprep.subr.bf16.mxu0 0
    %1074 = vmatpush1.bf16.msra.mxu0 0
    %1075 = vmatprep.subr.bf16.mxu0 0
    %1076 = vmatpush1.bf16.msra.mxu0 0
    %1077 = vmatprep.subr.bf16.mxu0 0
    %1078 = vmatpush1.bf16.msra.mxu0 0
    %1079 = vmatprep.subr.bf16.mxu0 0
    %1080 = vmatpush1.bf16.msra.mxu0 0
    %1081 = vmatprep.subr.bf16.mxu0 0
    %1082 = vmatpush1.bf16.msra.mxu0 0
    %1083 = vmatprep.subr.bf16.mxu0 0
    %1084 = vmatpush1.bf16.msra.mxu0 0
    %1085 = vmatprep.mubr.bf16.mxu0 0
    %1086 = vmatmul.mubr.bf16.gmra.mrb[0].mxu0 %v1052
    %v1087 = vpop.f32.mrb[0].mxu0
    %v1088 = vadd.f32 0.0, %v1087
    %v1089 = vpop.f32.mrb[0].mxu0
    %v1090 = vadd.f32 0.0, %v1089
    %v1091 = vpop.f32.mrb[0].mxu0
    %v1092 = vpop.f32.mrb[0].mxu0
    %1093 = vdwg.mxu0
    %1094 = vmatprep.subr.bf16.mxu0 %v647
    %1095 = vmatpush1.bf16.msra.mxu0 %v646
    %1096 = vmatprep.subr.bf16.mxu0 %v651
    %1097 = vmatpush1.bf16.msra.mxu0 %v650
    %1098 = vmatprep.subr.bf16.mxu0 %v655
    %1099 = vmatpush1.bf16.msra.mxu0 %v654
    %1100 = vmatprep.subr.bf16.mxu0 %v659
    %1101 = vmatpush1.bf16.msra.mxu0 %v658
    %1102 = vmatprep.subr.bf16.mxu0 %v663
    %1103 = vmatpush1.bf16.msra.mxu0 %v662
    %1104 = vmatprep.subr.bf16.mxu0 %v667
    %1105 = vmatpush1.bf16.msra.mxu0 %v666
    %1106 = vmatprep.subr.bf16.mxu0 %v671
    %1107 = vmatpush1.bf16.msra.mxu0 %v670
    %1108 = vmatprep.subr.bf16.mxu0 %v675
    %1109 = vmatpush1.bf16.msra.mxu0 %v674
    %1110 = vmatprep.subr.bf16.mxu0 0
    %1111 = vmatpush1.bf16.msra.mxu0 0
    %1112 = vmatprep.subr.bf16.mxu0 0
    %1113 = vmatpush1.bf16.msra.mxu0 0
    %1114 = vmatprep.subr.bf16.mxu0 0
    %1115 = vmatpush1.bf16.msra.mxu0 0
    %1116 = vmatprep.subr.bf16.mxu0 0
    %1117 = vmatpush1.bf16.msra.mxu0 0
    %1118 = vmatprep.subr.bf16.mxu0 0
    %1119 = vmatpush1.bf16.msra.mxu0 0
    %1120 = vmatprep.subr.bf16.mxu0 0
    %1121 = vmatpush1.bf16.msra.mxu0 0
    %1122 = vmatprep.subr.bf16.mxu0 0
    %1123 = vmatpush1.bf16.msra.mxu0 0
    %1124 = vmatprep.subr.bf16.mxu0 0
    %1125 = vmatpush1.bf16.msra.mxu0 0
    %1126 = vmatprep.mubr.bf16.mxu0 0
    %1127 = vmatmul.mubr.bf16.gmra.mrb[0].mxu0 %v1052
    %v1128 = vpop.f32.mrb[0].mxu0
    %v1129 = vadd.f32 0.0, %v1128
    %v1130 = vpop.f32.mrb[0].mxu0
    %v1131 = vadd.f32 0.0, %v1130
    %v1132 = vpop.f32.mrb[0].mxu0
    %v1133 = vpop.f32.mrb[0].mxu0
    %1134 = vdwg.mxu0
    %v1135 = vadd.f32 %v1048, %v1088
    %v1136 = vadd.f32 %v1049, %v1090
    %v1137 = vadd.f32 %v1050, %v1129
    %v1138 = vadd.f32 %v1051, %v1131
    %v1139 = vxor.u32 %v1135, 2147483648
    %v1140 = vxor.u32 %v1136, 2147483648
    %v1141 = vxor.u32 %v1137, 2147483648
    %v1142 = vmul.f32 %v1139, 1.442695
    %v1143 = vpow.pop %v1142
    %v1144 = vmul.f32 %v1140, 1.442695
    %v1145 = vpow.pop %v1144
    %v1146 = vmul.f32 %v1141, 1.442695
    %v1147 = vpow.pop %v1146
    %v1148 = vadd.f32 %v1143, 1.0
    %v1149 = vadd.f32 %v1145, 1.0
    %v1150 = vadd.f32 %v1147, 1.0
    %v1151 = vrcp.pop %v1148
    %v1152 = vmul.f32 1.0, %v1151
    %v1153 = vrcp.pop %v1149
    %v1154 = vmul.f32 1.0, %v1153
    %v1155 = vrcp.pop %v1150
    %v1156 = vmul.f32 1.0, %v1155
    %v1157 = vtanh.pop %v1138
    %v1158 = vmul.f32 %v1154, %v1045
    %v1159 = vmul.f32 %v1152, %v1157
    %v1160 = vadd.f32 %v1158, %v1159
    %v1161 = vtanh.pop %v1160
    %v1162 = vmul.f32 %v1156, %v1161
    %v1163 = vld [vmem:[#allocation2 + $0x80] sm:$0xff]
    %v1164 = vld [vmem:[#allocation2 + $0x88] sm:$0xff]
    %v1165 = vld [vmem:[#allocation2 + $0x90] sm:$0xff]
    %v1166 = vld [vmem:[#allocation2 + $0x98] sm:$0xff]
    %v1167 = vpack.c.bf16 %v1162, %v1162
    %1168 = vmatprep.subr.bf16.mxu0 %v645
    %1169 = vmatpush1.bf16.msra.mxu0 %v644
    %1170 = vmatprep.subr.bf16.mxu0 %v649
    %1171 = vmatpush1.bf16.msra.mxu0 %v648
    %1172 = vmatprep.subr.bf16.mxu0 %v653
    %1173 = vmatpush1.bf16.msra.mxu0 %v652
    %1174 = vmatprep.subr.bf16.mxu0 %v657
    %1175 = vmatpush1.bf16.msra.mxu0 %v656
    %1176 = vmatprep.subr.bf16.mxu0 %v661
    %1177 = vmatpush1.bf16.msra.mxu0 %v660
    %1178 = vmatprep.subr.bf16.mxu0 %v665
    %1179 = vmatpush1.bf16.msra.mxu0 %v664
    %1180 = vmatprep.subr.bf16.mxu0 %v669
    %1181 = vmatpush1.bf16.msra.mxu0 %v668
    %1182 = vmatprep.subr.bf16.mxu0 %v673
    %1183 = vmatpush1.bf16.msra.mxu0 %v672
    %1184 = vmatprep.subr.bf16.mxu0 0
    %1185 = vmatpush1.bf16.msra.mxu0 0
    %1186 = vmatprep.subr.bf16.mxu0 0
    %1187 = vmatpush1.bf16.msra.mxu0 0
    %1188 = vmatprep.subr.bf16.mxu0 0
    %1189 = vmatpush1.bf16.msra.mxu0 0
    %1190 = vmatprep.subr.bf16.mxu0 0
    %1191 = vmatpush1.bf16.msra.mxu0 0
    %1192 = vmatprep.subr.bf16.mxu0 0
    %1193 = vmatpush1.bf16.msra.mxu0 0
    %1194 = vmatprep.subr.bf16.mxu0 0
    %1195 = vmatpush1.bf16.msra.mxu0 0
    %1196 = vmatprep.subr.bf16.mxu0 0
    %1197 = vmatpush1.bf16.msra.mxu0 0
    %1198 = vmatprep.subr.bf16.mxu0 0
    %1199 = vmatpush1.bf16.msra.mxu0 0
    %1200 = vmatprep.mubr.bf16.mxu0 0
    %1201 = vmatmul.mubr.bf16.gmra.mrb[0].mxu0 %v1167
    %v1202 = vpop.f32.mrb[0].mxu0
    %v1203 = vadd.f32 0.0, %v1202
    %v1204 = vpop.f32.mrb[0].mxu0
    %v1205 = vadd.f32 0.0, %v1204
    %v1206 = vpop.f32.mrb[0].mxu0
    %v1207 = vpop.f32.mrb[0].mxu0
    %1208 = vdwg.mxu0
    %1209 = vmatprep.subr.bf16.mxu0 %v647
    %1210 = vmatpush1.bf16.msra.mxu0 %v646
    %1211 = vmatprep.subr.bf16.mxu0 %v651
    %1212 = vmatpush1.bf16.msra.mxu0 %v650
    %1213 = vmatprep.subr.bf16.mxu0 %v655
    %1214 = vmatpush1.bf16.msra.mxu0 %v654
    %1215 = vmatprep.subr.bf16.mxu0 %v659
    %1216 = vmatpush1.bf16.msra.mxu0 %v658
    %1217 = vmatprep.subr.bf16.mxu0 %v663
    %1218 = vmatpush1.bf16.msra.mxu0 %v662
    %1219 = vmatprep.subr.bf16.mxu0 %v667
    %1220 = vmatpush1.bf16.msra.mxu0 %v666
    %1221 = vmatprep.subr.bf16.mxu0 %v671
    %1222 = vmatpush1.bf16.msra.mxu0 %v670
    %1223 = vmatprep.subr.bf16.mxu0 %v675
    %1224 = vmatpush1.bf16.msra.mxu0 %v674
    %1225 = vmatprep.subr.bf16.mxu0 0
    %1226 = vmatpush1.bf16.msra.mxu0 0
    %1227 = vmatprep.subr.bf16.mxu0 0
    %1228 = vmatpush1.bf16.msra.mxu0 0
    %1229 = vmatprep.subr.bf16.mxu0 0
    %1230 = vmatpush1.bf16.msra.mxu0 0
    %1231 = vmatprep.subr.bf16.mxu0 0
    %1232 = vmatpush1.bf16.msra.mxu0 0
    %1233 = vmatprep.subr.bf16.mxu0 0
    %1234 = vmatpush1.bf16.msra.mxu0 0
    %1235 = vmatprep.subr.bf16.mxu0 0
    %1236 = vmatpush1.bf16.msra.mxu0 0
    %1237 = vmatprep.subr.bf16.mxu0 0
    %1238 = vmatpush1.bf16.msra.mxu0 0
    %1239 = vmatprep.subr.bf16.mxu0 0
    %1240 = vmatpush1.bf16.msra.mxu0 0
    %1241 = vmatprep.mubr.bf16.mxu0 0
    %1242 = vmatmul.mubr.bf16.gmra.mrb[0].mxu0 %v1167
    %v1243 = vpop.f32.mrb[0].mxu0
    %v1244 = vadd.f32 0.0, %v1243
    %v1245 = vpop.f32.mrb[0].mxu0
    %v1246 = vadd.f32 0.0, %v1245
    %v1247 = vpop.f32.mrb[0].mxu0
    %v1248 = vpop.f32.mrb[0].mxu0
    %1249 = vdwg.mxu0
    %v1250 = vadd.f32 %v1163, %v1203
    %v1251 = vadd.f32 %v1164, %v1205
    %v1252 = vadd.f32 %v1165, %v1244
    %v1253 = vadd.f32 %v1166, %v1246
    %v1254 = vxor.u32 %v1250, 2147483648
    %v1255 = vxor.u32 %v1251, 2147483648
    %v1256 = vxor.u32 %v1252, 2147483648
    %v1257 = vmul.f32 %v1254, 1.442695
    %v1258 = vpow.pop %v1257
    %v1259 = vmul.f32 %v1255, 1.442695
    %v1260 = vpow.pop %v1259
    %v1261 = vmul.f32 %v1256, 1.442695
    %v1262 = vpow.pop %v1261
    %v1263 = vadd.f32 %v1258, 1.0
    %v1264 = vadd.f32 %v1260, 1.0
    %v1265 = vadd.f32 %v1262, 1.0
    %v1266 = vrcp.pop %v1263
    %v1267 = vmul.f32 1.0, %v1266
    %v1268 = vrcp.pop %v1264
    %v1269 = vmul.f32 1.0, %v1268
    %v1270 = vrcp.pop %v1265
    %v1271 = vmul.f32 1.0, %v1270
    %v1272 = vtanh.pop %v1253
    %v1273 = vmul.f32 %v1269, %v1160
    %v1274 = vmul.f32 %v1267, %v1272
    %v1275 = vadd.f32 %v1273, %v1274
    %v1276 = vtanh.pop %v1275
    %v1277 = vmul.f32 %v1271, %v1276
    %v1278 = vld [vmem:[#allocation2 + $0xa0] sm:$0xff]
    %v1279 = vld [vmem:[#allocation2 + $0xa8] sm:$0xff]
    %v1280 = vld [vmem:[#allocation2 + $0xb0] sm:$0xff]
    %v1281 = vld [vmem:[#allocation2 + $0xb8] sm:$0xff]
    %v1282 = vpack.c.bf16 %v1277, %v1277
    %1283 = vmatprep.subr.bf16.mxu0 %v645
    %1284 = vmatpush1.bf16.msra.mxu0 %v644
    %1285 = vmatprep.subr.bf16.mxu0 %v649
    %1286 = vmatpush1.bf16.msra.mxu0 %v648
    %1287 = vmatprep.subr.bf16.mxu0 %v653
    %1288 = vmatpush1.bf16.msra.mxu0 %v652
    %1289 = vmatprep.subr.bf16.mxu0 %v657
    %1290 = vmatpush1.bf16.msra.mxu0 %v656
    %1291 = vmatprep.subr.bf16.mxu0 %v661
    %1292 = vmatpush1.bf16.msra.mxu0 %v660
    %1293 = vmatprep.subr.bf16.mxu0 %v665
    %1294 = vmatpush1.bf16.msra.mxu0 %v664
    %1295 = vmatprep.subr.bf16.mxu0 %v669
    %1296 = vmatpush1.bf16.msra.mxu0 %v668
    %1297 = vmatprep.subr.bf16.mxu0 %v673
    %1298 = vmatpush1.bf16.msra.mxu0 %v672
    %1299 = vmatprep.subr.bf16.mxu0 0
    %1300 = vmatpush1.bf16.msra.mxu0 0
    %1301 = vmatprep.subr.bf16.mxu0 0
    %1302 = vmatpush1.bf16.msra.mxu0 0
    %1303 = vmatprep.subr.bf16.mxu0 0
    %1304 = vmatpush1.bf16.msra.mxu0 0
    %1305 = vmatprep.subr.bf16.mxu0 0
    %1306 = vmatpush1.bf16.msra.mxu0 0
    %1307 = vmatprep.subr.bf16.mxu0 0
    %1308 = vmatpush1.bf16.msra.mxu0 0
    %1309 = vmatprep.subr.bf16.mxu0 0
    %1310 = vmatpush1.bf16.msra.mxu0 0
    %1311 = vmatprep.subr.bf16.mxu0 0
    %1312 = vmatpush1.bf16.msra.mxu0 0
    %1313 = vmatprep.subr.bf16.mxu0 0
    %1314 = vmatpush1.bf16.msra.mxu0 0
    %1315 = vmatprep.mubr.bf16.mxu0 0
    %1316 = vmatmul.mubr.bf16.gmra.mrb[0].mxu0 %v1282
    %v1317 = vpop.f32.mrb[0].mxu0
    %v1318 = vadd.f32 0.0, %v1317
    %v1319 = vpop.f32.mrb[0].mxu0
    %v1320 = vadd.f32 0.0, %v1319
    %v1321 = vpop.f32.mrb[0].mxu0
    %v1322 = vpop.f32.mrb[0].mxu0
    %1323 = vdwg.mxu0
    %1324 = vmatprep.subr.bf16.mxu0 %v647
    %1325 = vmatpush1.bf16.msra.mxu0 %v646
    %1326 = vmatprep.subr.bf16.mxu0 %v651
    %1327 = vmatpush1.bf16.msra.mxu0 %v650
    %1328 = vmatprep.subr.bf16.mxu0 %v655
    %1329 = vmatpush1.bf16.msra.mxu0 %v654
    %1330 = vmatprep.subr.bf16.mxu0 %v659
    %1331 = vmatpush1.bf16.msra.mxu0 %v658
    %1332 = vmatprep.subr.bf16.mxu0 %v663
    %1333 = vmatpush1.bf16.msra.mxu0 %v662
    %1334 = vmatprep.subr.bf16.mxu0 %v667
    %1335 = vmatpush1.bf16.msra.mxu0 %v666
    %1336 = vmatprep.subr.bf16.mxu0 %v671
    %1337 = vmatpush1.bf16.msra.mxu0 %v670
    %1338 = vmatprep.subr.bf16.mxu0 %v675
    %1339 = vmatpush1.bf16.msra.mxu0 %v674
    %1340 = vmatprep.subr.bf16.mxu0 0
    %1341 = vmatpush1.bf16.msra.mxu0 0
    %1342 = vmatprep.subr.bf16.mxu0 0
    %1343 = vmatpush1.bf16.msra.mxu0 0
    %1344 = vmatprep.subr.bf16.mxu0 0
    %1345 = vmatpush1.bf16.msra.mxu0 0
    %1346 = vmatprep.subr.bf16.mxu0 0
    %1347 = vmatpush1.bf16.msra.mxu0 0
    %1348 = vmatprep.subr.bf16.mxu0 0
    %1349 = vmatpush1.bf16.msra.mxu0 0
    %1350 = vmatprep.subr.bf16.mxu0 0
    %1351 = vmatpush1.bf16.msra.mxu0 0
    %1352 = vmatprep.subr.bf16.mxu0 0
    %1353 = vmatpush1.bf16.msra.mxu0 0
    %1354 = vmatprep.subr.bf16.mxu0 0
    %1355 = vmatpush1.bf16.msra.mxu0 0
    %1356 = vmatprep.mubr.bf16.mxu0 0
    %1357 = vmatmul.mubr.bf16.gmra.mrb[0].mxu0 %v1282
    %v1358 = vpop.f32.mrb[0].mxu0
    %v1359 = vadd.f32 0.0, %v1358
    %v1360 = vpop.f32.mrb[0].mxu0
    %v1361 = vadd.f32 0.0, %v1360
    %v1362 = vpop.f32.mrb[0].mxu0
    %v1363 = vpop.f32.mrb[0].mxu0
    %1364 = vdwg.mxu0
    %v1365 = vadd.f32 %v1278, %v1318
    %v1366 = vadd.f32 %v1279, %v1320
    %v1367 = vadd.f32 %v1280, %v1359
    %v1368 = vadd.f32 %v1281, %v1361
    %v1369 = vxor.u32 %v1365, 2147483648
    %v1370 = vxor.u32 %v1366, 2147483648
    %v1371 = vxor.u32 %v1367, 2147483648
    %v1372 = vmul.f32 %v1369, 1.442695
    %v1373 = vpow.pop %v1372
    %v1374 = vmul.f32 %v1370, 1.442695
    %v1375 = vpow.pop %v1374
    %v1376 = vmul.f32 %v1371, 1.442695
    %v1377 = vpow.pop %v1376
    %v1378 = vadd.f32 %v1373, 1.0
    %v1379 = vadd.f32 %v1375, 1.0
    %v1380 = vadd.f32 %v1377, 1.0
    %v1381 = vrcp.pop %v1378
    %v1382 = vmul.f32 1.0, %v1381
    %v1383 = vrcp.pop %v1379
    %v1384 = vmul.f32 1.0, %v1383
    %v1385 = vrcp.pop %v1380
    %v1386 = vmul.f32 1.0, %v1385
    %v1387 = vtanh.pop %v1368
    %v1388 = vmul.f32 %v1384, %v1275
    %v1389 = vmul.f32 %v1382, %v1387
    %v1390 = vadd.f32 %v1388, %v1389
    %v1391 = vtanh.pop %v1390
    %v1392 = vmul.f32 %v1386, %v1391
    %v1393 = vld [vmem:[#allocation2 + $0xc0] sm:$0xff]
    %v1394 = vld [vmem:[#allocation2 + $0xc8] sm:$0xff]
    %v1395 = vld [vmem:[#allocation2 + $0xd0] sm:$0xff]
    %v1396 = vld [vmem:[#allocation2 + $0xd8] sm:$0xff]
    %v1397 = vpack.c.bf16 %v1392, %v1392
    %1398 = vmatprep.subr.bf16.mxu0 %v645
    %1399 = vmatpush1.bf16.msra.mxu0 %v644
    %1400 = vmatprep.subr.bf16.mxu0 %v649
    %1401 = vmatpush1.bf16.msra.mxu0 %v648
    %1402 = vmatprep.subr.bf16.mxu0 %v653
    %1403 = vmatpush1.bf16.msra.mxu0 %v652
    %1404 = vmatprep.subr.bf16.mxu0 %v657
    %1405 = vmatpush1.bf16.msra.mxu0 %v656
    %1406 = vmatprep.subr.bf16.mxu0 %v661
    %1407 = vmatpush1.bf16.msra.mxu0 %v660
    %1408 = vmatprep.subr.bf16.mxu0 %v665
    %1409 = vmatpush1.bf16.msra.mxu0 %v664
    %1410 = vmatprep.subr.bf16.mxu0 %v669
    %1411 = vmatpush1.bf16.msra.mxu0 %v668
    %1412 = vmatprep.subr.bf16.mxu0 %v673
    %1413 = vmatpush1.bf16.msra.mxu0 %v672
    %1414 = vmatprep.subr.bf16.mxu0 0
    %1415 = vmatpush1.bf16.msra.mxu0 0
    %1416 = vmatprep.subr.bf16.mxu0 0
    %1417 = vmatpush1.bf16.msra.mxu0 0
    %1418 = vmatprep.subr.bf16.mxu0 0
    %1419 = vmatpush1.bf16.msra.mxu0 0
    %1420 = vmatprep.subr.bf16.mxu0 0
    %1421 = vmatpush1.bf16.msra.mxu0 0
    %1422 = vmatprep.subr.bf16.mxu0 0
    %1423 = vmatpush1.bf16.msra.mxu0 0
    %1424 = vmatprep.subr.bf16.mxu0 0
    %1425 = vmatpush1.bf16.msra.mxu0 0
    %1426 = vmatprep.subr.bf16.mxu0 0
    %1427 = vmatpush1.bf16.msra.mxu0 0
    %1428 = vmatprep.subr.bf16.mxu0 0
    %1429 = vmatpush1.bf16.msra.mxu0 0
    %1430 = vmatprep.mubr.bf16.mxu0 0
    %1431 = vmatmul.mubr.bf16.gmra.mrb[0].mxu0 %v1397
    %v1432 = vpop.f32.mrb[0].mxu0
    %v1433 = vadd.f32 0.0, %v1432
    %v1434 = vpop.f32.mrb[0].mxu0
    %v1435 = vadd.f32 0.0, %v1434
    %v1436 = vpop.f32.mrb[0].mxu0
    %v1437 = vpop.f32.mrb[0].mxu0
    %1438 = vdwg.mxu0
    %1439 = vmatprep.subr.bf16.mxu0 %v647
    %1440 = vmatpush1.bf16.msra.mxu0 %v646
    %1441 = vmatprep.subr.bf16.mxu0 %v651
    %1442 = vmatpush1.bf16.msra.mxu0 %v650
    %1443 = vmatprep.subr.bf16.mxu0 %v655
    %1444 = vmatpush1.bf16.msra.mxu0 %v654
    %1445 = vmatprep.subr.bf16.mxu0 %v659
    %1446 = vmatpush1.bf16.msra.mxu0 %v658
    %1447 = vmatprep.subr.bf16.mxu0 %v663
    %1448 = vmatpush1.bf16.msra.mxu0 %v662
    %1449 = vmatprep.subr.bf16.mxu0 %v667
    %1450 = vmatpush1.bf16.msra.mxu0 %v666
    %1451 = vmatprep.subr.bf16.mxu0 %v671
    %1452 = vmatpush1.bf16.msra.mxu0 %v670
    %1453 = vmatprep.subr.bf16.mxu0 %v675
    %1454 = vmatpush1.bf16.msra.mxu0 %v674
    %1455 = vmatprep.subr.bf16.mxu0 0
    %1456 = vmatpush1.bf16.msra.mxu0 0
    %1457 = vmatprep.subr.bf16.mxu0 0
    %1458 = vmatpush1.bf16.msra.mxu0 0
    %1459 = vmatprep.subr.bf16.mxu0 0
    %1460 = vmatpush1.bf16.msra.mxu0 0
    %1461 = vmatprep.subr.bf16.mxu0 0
    %1462 = vmatpush1.bf16.msra.mxu0 0
    %1463 = vmatprep.subr.bf16.mxu0 0
    %1464 = vmatpush1.bf16.msra.mxu0 0
    %1465 = vmatprep.subr.bf16.mxu0 0
    %1466 = vmatpush1.bf16.msra.mxu0 0
    %1467 = vmatprep.subr.bf16.mxu0 0
    %1468 = vmatpush1.bf16.msra.mxu0 0
    %1469 = vmatprep.subr.bf16.mxu0 0
    %1470 = vmatpush1.bf16.msra.mxu0 0
    %1471 = vmatprep.mubr.bf16.mxu0 0
    %1472 = vmatmul.mubr.bf16.gmra.mrb[0].mxu0 %v1397
    %v1473 = vpop.f32.mrb[0].mxu0
    %v1474 = vadd.f32 0.0, %v1473
    %v1475 = vpop.f32.mrb[0].mxu0
    %v1476 = vadd.f32 0.0, %v1475
    %v1477 = vpop.f32.mrb[0].mxu0
    %v1478 = vpop.f32.mrb[0].mxu0
    %1479 = vdwg.mxu0
    %v1480 = vadd.f32 %v1393, %v1433
    %v1481 = vadd.f32 %v1394, %v1435
    %v1482 = vadd.f32 %v1395, %v1474
    %v1483 = vadd.f32 %v1396, %v1476
    %v1484 = vxor.u32 %v1480, 2147483648
    %v1485 = vxor.u32 %v1481, 2147483648
    %v1486 = vxor.u32 %v1482, 2147483648
    %v1487 = vmul.f32 %v1484, 1.442695
    %v1488 = vpow.pop %v1487
    %v1489 = vmul.f32 %v1485, 1.442695
    %v1490 = vpow.pop %v1489
    %v1491 = vmul.f32 %v1486, 1.442695
    %v1492 = vpow.pop %v1491
    %v1493 = vadd.f32 %v1488, 1.0
    %v1494 = vadd.f32 %v1490, 1.0
    %v1495 = vadd.f32 %v1492, 1.0
    %v1496 = vrcp.pop %v1493
    %v1497 = vmul.f32 1.0, %v1496
    %v1498 = vrcp.pop %v1494
    %v1499 = vmul.f32 1.0, %v1498
    %v1500 = vrcp.pop %v1495
    %v1501 = vmul.f32 1.0, %v1500
    %v1502 = vtanh.pop %v1483
    %v1503 = vmul.f32 %v1499, %v1390
    %v1504 = vmul.f32 %v1497, %v1502
    %v1505 = vadd.f32 %v1503, %v1504
    %v1506 = vtanh.pop %v1505
    %v1507 = vmul.f32 %v1501, %v1506
    %v1508 = vld [vmem:[#allocation2 + $0xe0] sm:$0xff]
    %v1509 = vld [vmem:[#allocation2 + $0xe8] sm:$0xff]
    %v1510 = vld [vmem:[#allocation2 + $0xf0] sm:$0xff]
    %v1511 = vld [vmem:[#allocation2 + $0xf8] sm:$0xff]
    %v1512 = vpack.c.bf16 %v1507, %v1507
    %1513 = vmatprep.subr.bf16.mxu0 %v645
    %1514 = vmatpush1.bf16.msra.mxu0 %v644
    %1515 = vmatprep.subr.bf16.mxu0 %v649
    %1516 = vmatpush1.bf16.msra.mxu0 %v648
    %1517 = vmatprep.subr.bf16.mxu0 %v653
    %1518 = vmatpush1.bf16.msra.mxu0 %v652
    %1519 = vmatprep.subr.bf16.mxu0 %v657
    %1520 = vmatpush1.bf16.msra.mxu0 %v656
    %1521 = vmatprep.subr.bf16.mxu0 %v661
    %1522 = vmatpush1.bf16.msra.mxu0 %v660
    %1523 = vmatprep.subr.bf16.mxu0 %v665
    %1524 = vmatpush1.bf16.msra.mxu0 %v664
    %1525 = vmatprep.subr.bf16.mxu0 %v669
    %1526 = vmatpush1.bf16.msra.mxu0 %v668
    %1527 = vmatprep.subr.bf16.mxu0 %v673
    %1528 = vmatpush1.bf16.msra.mxu0 %v672
    %1529 = vmatprep.subr.bf16.mxu0 0
    %1530 = vmatpush1.bf16.msra.mxu0 0
    %1531 = vmatprep.subr.bf16.mxu0 0
    %1532 = vmatpush1.bf16.msra.mxu0 0
    %1533 = vmatprep.subr.bf16.mxu0 0
    %1534 = vmatpush1.bf16.msra.mxu0 0
    %1535 = vmatprep.subr.bf16.mxu0 0
    %1536 = vmatpush1.bf16.msra.mxu0 0
    %1537 = vmatprep.subr.bf16.mxu0 0
    %1538 = vmatpush1.bf16.msra.mxu0 0
    %1539 = vmatprep.subr.bf16.mxu0 0
    %1540 = vmatpush1.bf16.msra.mxu0 0
    %1541 = vmatprep.subr.bf16.mxu0 0
    %1542 = vmatpush1.bf16.msra.mxu0 0
    %1543 = vmatprep.subr.bf16.mxu0 0
    %1544 = vmatpush1.bf16.msra.mxu0 0
    %1545 = vmatprep.mubr.bf16.mxu0 0
    %1546 = vmatmul.mubr.bf16.gmra.mrb[0].mxu0 %v1512
    %v1547 = vpop.f32.mrb[0].mxu0
    %v1548 = vadd.f32 0.0, %v1547
    %v1549 = vpop.f32.mrb[0].mxu0
    %v1550 = vadd.f32 0.0, %v1549
    %v1551 = vpop.f32.mrb[0].mxu0
    %v1552 = vpop.f32.mrb[0].mxu0
    %1553 = vdwg.mxu0
    %1554 = vmatprep.subr.bf16.mxu0 %v647
    %1555 = vmatpush1.bf16.msra.mxu0 %v646
    %1556 = vmatprep.subr.bf16.mxu0 %v651
    %1557 = vmatpush1.bf16.msra.mxu0 %v650
    %1558 = vmatprep.subr.bf16.mxu0 %v655
    %1559 = vmatpush1.bf16.msra.mxu0 %v654
    %1560 = vmatprep.subr.bf16.mxu0 %v659
    %1561 = vmatpush1.bf16.msra.mxu0 %v658
    %1562 = vmatprep.subr.bf16.mxu0 %v663
    %1563 = vmatpush1.bf16.msra.mxu0 %v662
    %1564 = vmatprep.subr.bf16.mxu0 %v667
    %1565 = vmatpush1.bf16.msra.mxu0 %v666
    %1566 = vmatprep.subr.bf16.mxu0 %v671
    %1567 = vmatpush1.bf16.msra.mxu0 %v670
    %1568 = vmatprep.subr.bf16.mxu0 %v675
    %1569 = vmatpush1.bf16.msra.mxu0 %v674
    %1570 = vmatprep.subr.bf16.mxu0 0
    %1571 = vmatpush1.bf16.msra.mxu0 0
    %1572 = vmatprep.subr.bf16.mxu0 0
    %1573 = vmatpush1.bf16.msra.mxu0 0
    %1574 = vmatprep.subr.bf16.mxu0 0
    %1575 = vmatpush1.bf16.msra.mxu0 0
    %1576 = vmatprep.subr.bf16.mxu0 0
    %1577 = vmatpush1.bf16.msra.mxu0 0
    %1578 = vmatprep.subr.bf16.mxu0 0
    %1579 = vmatpush1.bf16.msra.mxu0 0
    %1580 = vmatprep.subr.bf16.mxu0 0
    %1581 = vmatpush1.bf16.msra.mxu0 0
    %1582 = vmatprep.subr.bf16.mxu0 0
    %1583 = vmatpush1.bf16.msra.mxu0 0
    %1584 = vmatprep.subr.bf16.mxu0 0
    %1585 = vmatpush1.bf16.msra.mxu0 0
    %1586 = vmatprep.mubr.bf16.mxu0 0
    %1587 = vmatmul.mubr.bf16.gmra.mrb[0].mxu0 %v1512
    %v1588 = vpop.f32.mrb[0].mxu0
    %v1589 = vadd.f32 0.0, %v1588
    %v1590 = vpop.f32.mrb[0].mxu0
    %v1591 = vadd.f32 0.0, %v1590
    %v1592 = vpop.f32.mrb[0].mxu0
    %v1593 = vpop.f32.mrb[0].mxu0
    %1594 = vdwg.mxu0
    %v1595 = vadd.f32 %v1508, %v1548
    %v1596 = vadd.f32 %v1509, %v1550
    %v1597 = vadd.f32 %v1510, %v1589
    %v1598 = vadd.f32 %v1511, %v1591
    %v1599 = vxor.u32 %v1595, 2147483648
    %v1600 = vxor.u32 %v1596, 2147483648
    %v1601 = vxor.u32 %v1597, 2147483648
    %v1602 = vmul.f32 %v1599, 1.442695
    %v1603 = vpow.pop %v1602
    %v1604 = vmul.f32 %v1600, 1.442695
    %v1605 = vpow.pop %v1604
    %v1606 = vmul.f32 %v1601, 1.442695
    %v1607 = vpow.pop %v1606
    %v1608 = vadd.f32 %v1603, 1.0
    %v1609 = vadd.f32 %v1605, 1.0
    %v1610 = vadd.f32 %v1607, 1.0
    %v1611 = vrcp.pop %v1608
    %v1612 = vmul.f32 1.0, %v1611
    %v1613 = vrcp.pop %v1609
    %v1614 = vmul.f32 1.0, %v1613
    %v1615 = vrcp.pop %v1610
    %v1616 = vmul.f32 1.0, %v1615
    %v1617 = vtanh.pop %v1598
    %v1618 = vmul.f32 %v1614, %v1505
    %v1619 = vmul.f32 %v1612, %v1617
    %v1620 = vadd.f32 %v1618, %v1619
    %v1621 = vtanh.pop %v1620
    %v1622 = vmul.f32 %v1616, %v1621
    %v1623 = vpack.c.bf16 %v932, %v817
    %v1624 = vpack.c.bf16 %v1162, %v1047
    %v1625 = vpack.c.bf16 %v1392, %v1277
    %v1626 = vpack.c.bf16 %v1622, %v1507
    %v1627 = vld [vmem:[#allocation7] sm:$0xff]
    %v1628 = vld [vmem:[#allocation7 + $0x8] sm:$0xff]
    %v1629 = vld [vmem:[#allocation7 + $0x10] sm:$0xff]
    %v1630 = vld [vmem:[#allocation7 + $0x18] sm:$0xff]
    %v1631 = vld [vmem:[#allocation7 + $0x20] sm:$0xff]
    %v1632 = vld [vmem:[#allocation7 + $0x28] sm:$0xff]
    %v1633 = vld [vmem:[#allocation7 + $0x30] sm:$0xff]
    %v1634 = vld [vmem:[#allocation7 + $0x38] sm:$0xff]
    %v1635 = vld [vmem:[#allocation7 + $0x40] sm:$0xff]
    %v1636 = vld [vmem:[#allocation7 + $0x48] sm:$0xff]
    %v1637 = vld [vmem:[#allocation7 + $0x50] sm:$0xff]
    %v1638 = vld [vmem:[#allocation7 + $0x58] sm:$0xff]
    %v1639 = vld [vmem:[#allocation7 + $0x60] sm:$0xff]
    %v1640 = vld [vmem:[#allocation7 + $0x68] sm:$0xff]
    %v1641 = vld [vmem:[#allocation7 + $0x70] sm:$0xff]
    %v1642 = vld [vmem:[#allocation7 + $0x78] sm:$0xff]
    %v1643 = vld [vmem:[#allocation7 + $0x80] sm:$0xff]
    %v1644 = vld [vmem:[#allocation7 + $0x88] sm:$0xff]
    %v1645 = vld [vmem:[#allocation7 + $0x90] sm:$0xff]
    %v1646 = vld [vmem:[#allocation7 + $0x98] sm:$0xff]
    %v1647 = vld [vmem:[#allocation7 + $0xa0] sm:$0xff]
    %v1648 = vld [vmem:[#allocation7 + $0xa8] sm:$0xff]
    %v1649 = vld [vmem:[#allocation7 + $0xb0] sm:$0xff]
    %v1650 = vld [vmem:[#allocation7 + $0xb8] sm:$0xff]
    %v1651 = vld [vmem:[#allocation7 + $0xc0] sm:$0xff]
    %v1652 = vld [vmem:[#allocation7 + $0xc8] sm:$0xff]
    %v1653 = vld [vmem:[#allocation7 + $0xd0] sm:$0xff]
    %v1654 = vld [vmem:[#allocation7 + $0xd8] sm:$0xff]
    %v1655 = vld [vmem:[#allocation7 + $0xe0] sm:$0xff]
    %v1656 = vld [vmem:[#allocation7 + $0xe8] sm:$0xff]
    %v1657 = vld [vmem:[#allocation7 + $0xf0] sm:$0xff]
    %v1658 = vld [vmem:[#allocation7 + $0xf8] sm:$0xff]
    %v1659 = vld [vmem:[%s6] sm:$0xf]
    %v1661 = vlaneseq
    %v1662 = vshrl.u32 %v1661, 7
    %v1663 = vsub.s32 0, %v1662
    %v1664 = vrot.slane %v1659, %v1663
    %v1665 = vlaneseq
    %v1666 = vshrl.u32 %v1665, 7
    %v1667 = vsub.s32 1, %v1666
    %v1668 = vrot.slane %v1659, %v1667
    %v1669 = vlaneseq
    %v1670 = vshrl.u32 %v1669, 7
    %v1671 = vsub.s32 2, %v1670
    %v1672 = vrot.slane %v1659, %v1671
    %v1673 = vlaneseq
    %v1674 = vshrl.u32 %v1673, 7
    %v1675 = vsub.s32 3, %v1674
    %v1676 = vrot.slane %v1659, %v1675
    %v1713 = vunpack.c.l.b16 %v1627
    %v1714 = vunpack.c.h.b16 %v1627
    %v1715 = vunpack.c.l.b16 %v1628
    %v1716 = vunpack.c.h.b16 %v1628
    %v1717 = vunpack.c.l.b16 %v1629
    %v1718 = vunpack.c.h.b16 %v1629
    %v1719 = vunpack.c.l.b16 %v1630
    %v1720 = vunpack.c.h.b16 %v1630
    %v1721 = vunpack.c.l.b16 %v1631
    %v1722 = vunpack.c.h.b16 %v1631
    %v1723 = vunpack.c.l.b16 %v1632
    %v1724 = vunpack.c.h.b16 %v1632
    %v1725 = vunpack.c.l.b16 %v1633
    %v1726 = vunpack.c.h.b16 %v1633
    %v1727 = vunpack.c.l.b16 %v1634
    %v1728 = vunpack.c.h.b16 %v1634
    %v1729 = vunpack.c.l.b16 %v1635
    %v1730 = vunpack.c.h.b16 %v1635
    %v1731 = vunpack.c.l.b16 %v1636
    %v1732 = vunpack.c.h.b16 %v1636
    %v1733 = vunpack.c.l.b16 %v1637
    %v1734 = vunpack.c.h.b16 %v1637
    %v1735 = vunpack.c.l.b16 %v1638
    %v1736 = vunpack.c.h.b16 %v1638
    %v1737 = vunpack.c.l.b16 %v1639
    %v1738 = vunpack.c.h.b16 %v1639
    %v1739 = vunpack.c.l.b16 %v1640
    %v1740 = vunpack.c.h.b16 %v1640
    %v1741 = vunpack.c.l.b16 %v1641
    %v1742 = vunpack.c.h.b16 %v1641
    %v1743 = vunpack.c.l.b16 %v1642
    %v1744 = vunpack.c.h.b16 %v1642
    %v1745 = vunpack.c.l.b16 %v1643
    %v1746 = vunpack.c.h.b16 %v1643
    %v1747 = vunpack.c.l.b16 %v1644
    %v1748 = vunpack.c.h.b16 %v1644
    %v1749 = vunpack.c.l.b16 %v1645
    %v1750 = vunpack.c.h.b16 %v1645
    %v1751 = vunpack.c.l.b16 %v1646
    %v1752 = vunpack.c.h.b16 %v1646
    %v1753 = vunpack.c.l.b16 %v1647
    %v1754 = vunpack.c.h.b16 %v1647
    %v1755 = vunpack.c.l.b16 %v1648
    %v1756 = vunpack.c.h.b16 %v1648
    %v1757 = vunpack.c.l.b16 %v1649
    %v1758 = vunpack.c.h.b16 %v1649
    %v1759 = vunpack.c.l.b16 %v1650
    %v1760 = vunpack.c.h.b16 %v1650
    %v1761 = vunpack.c.l.b16 %v1651
    %v1762 = vunpack.c.h.b16 %v1651
    %v1763 = vunpack.c.l.b16 %v1652
    %v1764 = vunpack.c.h.b16 %v1652
    %v1765 = vunpack.c.l.b16 %v1653
    %v1766 = vunpack.c.h.b16 %v1653
    %v1767 = vunpack.c.l.b16 %v1654
    %v1768 = vunpack.c.h.b16 %v1654
    %v1769 = vunpack.c.l.b16 %v1655
    %v1770 = vunpack.c.h.b16 %v1655
    %v1771 = vunpack.c.l.b16 %v1656
    %v1772 = vunpack.c.h.b16 %v1656
    %v1773 = vunpack.c.l.b16 %v1657
    %v1774 = vunpack.c.h.b16 %v1657
    %v1775 = vunpack.c.l.b16 %v1658
    %v1776 = vunpack.c.h.b16 %v1658
    %v1777 = vpack.c.b16 %v1717, %v1713
    %v1778 = vpack.c.b16 %v1718, %v1714
    %v1779 = vpack.c.b16 %v1719, %v1715
    %v1780 = vpack.c.b16 %v1720, %v1716
    %v1781 = vpack.c.b16 %v1725, %v1721
    %v1782 = vpack.c.b16 %v1726, %v1722
    %v1783 = vpack.c.b16 %v1727, %v1723
    %v1784 = vpack.c.b16 %v1728, %v1724
    %v1785 = vpack.c.b16 %v1733, %v1729
    %v1786 = vpack.c.b16 %v1734, %v1730
    %v1787 = vpack.c.b16 %v1735, %v1731
    %v1788 = vpack.c.b16 %v1736, %v1732
    %v1789 = vpack.c.b16 %v1741, %v1737
    %v1790 = vpack.c.b16 %v1742, %v1738
    %v1791 = vpack.c.b16 %v1743, %v1739
    %v1792 = vpack.c.b16 %v1744, %v1740
    %v1793 = vpack.c.b16 %v1749, %v1745
    %v1794 = vpack.c.b16 %v1750, %v1746
    %v1795 = vpack.c.b16 %v1751, %v1747
    %v1796 = vpack.c.b16 %v1752, %v1748
    %v1797 = vpack.c.b16 %v1757, %v1753
    %v1798 = vpack.c.b16 %v1758, %v1754
    %v1799 = vpack.c.b16 %v1759, %v1755
    %v1800 = vpack.c.b16 %v1760, %v1756
    %v1801 = vpack.c.b16 %v1765, %v1761
    %v1802 = vpack.c.b16 %v1766, %v1762
    %v1803 = vpack.c.b16 %v1767, %v1763
    %v1804 = vpack.c.b16 %v1768, %v1764
    %v1805 = vpack.c.b16 %v1773, %v1769
    %v1806 = vpack.c.b16 %v1774, %v1770
    %v1807 = vpack.c.b16 %v1775, %v1771
    %v1808 = vpack.c.b16 %v1776, %v1772
    %1841 = vmatprep.subr.bf16.mxu0 %v1778
    %1842 = vmatpush1.bf16.msra.mxu0 %v1777
    %1843 = vmatprep.subr.bf16.mxu0 %v1782
    %1844 = vmatpush1.bf16.msra.mxu0 %v1781
    %1845 = vmatprep.subr.bf16.mxu0 %v1786
    %1846 = vmatpush1.bf16.msra.mxu0 %v1785
    %1847 = vmatprep.subr.bf16.mxu0 %v1790
    %1848 = vmatpush1.bf16.msra.mxu0 %v1789
    %1849 = vmatprep.subr.bf16.mxu0 %v1794
    %1850 = vmatpush1.bf16.msra.mxu0 %v1793
    %1851 = vmatprep.subr.bf16.mxu0 %v1798
    %1852 = vmatpush1.bf16.msra.mxu0 %v1797
    %1853 = vmatprep.subr.bf16.mxu0 %v1802
    %1854 = vmatpush1.bf16.msra.mxu0 %v1801
    %1855 = vmatprep.subr.bf16.mxu0 %v1806
    %1856 = vmatpush1.bf16.msra.mxu0 %v1805
    %1857 = vmatprep.subr.bf16.mxu0 0
    %1858 = vmatpush1.bf16.msra.mxu0 0
    %1859 = vmatprep.subr.bf16.mxu0 0
    %1860 = vmatpush1.bf16.msra.mxu0 0
    %1861 = vmatprep.subr.bf16.mxu0 0
    %1862 = vmatpush1.bf16.msra.mxu0 0
    %1863 = vmatprep.subr.bf16.mxu0 0
    %1864 = vmatpush1.bf16.msra.mxu0 0
    %1865 = vmatprep.subr.bf16.mxu0 0
    %1866 = vmatpush1.bf16.msra.mxu0 0
    %1867 = vmatprep.subr.bf16.mxu0 0
    %1868 = vmatpush1.bf16.msra.mxu0 0
    %1869 = vmatprep.subr.bf16.mxu0 0
    %1870 = vmatpush1.bf16.msra.mxu0 0
    %1871 = vmatprep.subr.bf16.mxu0 0
    %1872 = vmatpush1.bf16.msra.mxu0 0
    %1873 = vmatprep.mubr.bf16.mxu0 0
    %1874 = vmatmul.mubr.bf16.gmra.mrb[0].mxu0 %v1623
    %v1875 = vpop.f32.mrb[0].mxu0
    %v1876 = vadd.f32 %v1664, %v1875
    %v1877 = vpop.f32.mrb[0].mxu0
    %v1878 = vadd.f32 %v1668, %v1877
    %v1879 = vpop.f32.mrb[0].mxu0
    %v1880 = vadd.f32 %v1664, %v1879
    %v1881 = vpop.f32.mrb[0].mxu0
    %v1882 = vadd.f32 %v1668, %v1881
    %1883 = vmatprep.mubr.bf16.mxu0 0
    %1884 = vmatmul.mubr.bf16.gmra.mrb[0].mxu0 %v1624
    %v1885 = vpop.f32.mrb[0].mxu0
    %v1886 = vadd.f32 %v1664, %v1885
    %v1887 = vpop.f32.mrb[0].mxu0
    %v1888 = vadd.f32 %v1668, %v1887
    %v1889 = vpop.f32.mrb[0].mxu0
    %v1890 = vadd.f32 %v1664, %v1889
    %v1891 = vpop.f32.mrb[0].mxu0
    %v1892 = vadd.f32 %v1668, %v1891
    %1893 = vmatprep.mubr.bf16.mxu0 0
    %1894 = vmatmul.mubr.bf16.gmra.mrb[0].mxu0 %v1625
    %v1895 = vpop.f32.mrb[0].mxu0
    %v1896 = vadd.f32 %v1664, %v1895
    %v1897 = vpop.f32.mrb[0].mxu0
    %v1898 = vadd.f32 %v1668, %v1897
    %v1899 = vpop.f32.mrb[0].mxu0
    %v1900 = vadd.f32 %v1664, %v1899
    %v1901 = vpop.f32.mrb[0].mxu0
    %v1902 = vadd.f32 %v1668, %v1901
    %1903 = vmatprep.mubr.bf16.mxu0 0
    %1904 = vmatmul.mubr.bf16.gmra.mrb[0].mxu0 %v1626
    %v1905 = vpop.f32.mrb[0].mxu0
    %v1906 = vadd.f32 %v1664, %v1905
    %v1907 = vpop.f32.mrb[0].mxu0
    %v1908 = vadd.f32 %v1668, %v1907
    %v1909 = vpop.f32.mrb[0].mxu0
    %v1910 = vadd.f32 %v1664, %v1909
    %v1911 = vpop.f32.mrb[0].mxu0
    %v1912 = vadd.f32 %v1668, %v1911
    %1913 = vdwg.mxu0
    %1914 = vmatprep.subr.bf16.mxu0 %v1780
    %1915 = vmatpush1.bf16.msra.mxu0 %v1779
    %1916 = vmatprep.subr.bf16.mxu0 %v1784
    %1917 = vmatpush1.bf16.msra.mxu0 %v1783
    %1918 = vmatprep.subr.bf16.mxu0 %v1788
    %1919 = vmatpush1.bf16.msra.mxu0 %v1787
    %1920 = vmatprep.subr.bf16.mxu0 %v1792
    %1921 = vmatpush1.bf16.msra.mxu0 %v1791
    %1922 = vmatprep.subr.bf16.mxu0 %v1796
    %1923 = vmatpush1.bf16.msra.mxu0 %v1795
    %1924 = vmatprep.subr.bf16.mxu0 %v1800
    %1925 = vmatpush1.bf16.msra.mxu0 %v1799
    %1926 = vmatprep.subr.bf16.mxu0 %v1804
    %1927 = vmatpush1.bf16.msra.mxu0 %v1803
    %1928 = vmatprep.subr.bf16.mxu0 %v1808
    %1929 = vmatpush1.bf16.msra.mxu0 %v1807
    %1930 = vmatprep.subr.bf16.mxu0 0
    %1931 = vmatpush1.bf16.msra.mxu0 0
    %1932 = vmatprep.subr.bf16.mxu0 0
    %1933 = vmatpush1.bf16.msra.mxu0 0
    %1934 = vmatprep.subr.bf16.mxu0 0
    %1935 = vmatpush1.bf16.msra.mxu0 0
    %1936 = vmatprep.subr.bf16.mxu0 0
    %1937 = vmatpush1.bf16.msra.mxu0 0
    %1938 = vmatprep.subr.bf16.mxu0 0
    %1939 = vmatpush1.bf16.msra.mxu0 0
    %1940 = vmatprep.subr.bf16.mxu0 0
    %1941 = vmatpush1.bf16.msra.mxu0 0
    %1942 = vmatprep.subr.bf16.mxu0 0
    %1943 = vmatpush1.bf16.msra.mxu0 0
    %1944 = vmatprep.subr.bf16.mxu0 0
    %1945 = vmatpush1.bf16.msra.mxu0 0
    %1946 = vmatprep.mubr.bf16.mxu0 0
    %1947 = vmatmul.mubr.bf16.gmra.mrb[0].mxu0 %v1623
    %v1948 = vpop.f32.mrb[0].mxu0
    %v1949 = vadd.f32 %v1672, %v1948
    %v1950 = vpop.f32.mrb[0].mxu0
    %v1951 = vadd.f32 %v1676, %v1950
    %v1952 = vpop.f32.mrb[0].mxu0
    %v1953 = vadd.f32 %v1672, %v1952
    %v1954 = vpop.f32.mrb[0].mxu0
    %v1955 = vadd.f32 %v1676, %v1954
    %1956 = vmatprep.mubr.bf16.mxu0 0
    %1957 = vmatmul.mubr.bf16.gmra.mrb[0].mxu0 %v1624
    %v1958 = vpop.f32.mrb[0].mxu0
    %v1959 = vadd.f32 %v1672, %v1958
    %v1960 = vpop.f32.mrb[0].mxu0
    %v1961 = vadd.f32 %v1676, %v1960
    %v1962 = vpop.f32.mrb[0].mxu0
    %v1963 = vadd.f32 %v1672, %v1962
    %v1964 = vpop.f32.mrb[0].mxu0
    %v1965 = vadd.f32 %v1676, %v1964
    %1966 = vmatprep.mubr.bf16.mxu0 0
    %1967 = vmatmul.mubr.bf16.gmra.mrb[0].mxu0 %v1625
    %v1968 = vpop.f32.mrb[0].mxu0
    %v1969 = vadd.f32 %v1672, %v1968
    %v1970 = vpop.f32.mrb[0].mxu0
    %v1971 = vadd.f32 %v1676, %v1970
    %v1972 = vpop.f32.mrb[0].mxu0
    %v1973 = vadd.f32 %v1672, %v1972
    %v1974 = vpop.f32.mrb[0].mxu0
    %v1975 = vadd.f32 %v1676, %v1974
    %1976 = vmatprep.mubr.bf16.mxu0 0
    %1977 = vmatmul.mubr.bf16.gmra.mrb[0].mxu0 %v1626
    %v1978 = vpop.f32.mrb[0].mxu0
    %v1979 = vadd.f32 %v1672, %v1978
    %v1980 = vpop.f32.mrb[0].mxu0
    %v1981 = vadd.f32 %v1676, %v1980
    %v1982 = vpop.f32.mrb[0].mxu0
    %v1983 = vadd.f32 %v1672, %v1982
    %v1984 = vpop.f32.mrb[0].mxu0
    %v1985 = vadd.f32 %v1676, %v1984
    %1986 = vdwg.mxu0
    %1987 = vst [vmem:[#allocation2] sm:$0xff] %v1876
    %1988 = vst [vmem:[#allocation2 + $0x8] sm:$0xff] %v1878
    %1989 = vst [vmem:[#allocation2 + $0x10] sm:$0xff] %v1949
    %1990 = vst [vmem:[#allocation2 + $0x18] sm:$0xff] %v1951
    %1991 = vst [vmem:[#allocation2 + $0x20] sm:$0xff] %v1880
    %1992 = vst [vmem:[#allocation2 + $0x28] sm:$0xff] %v1882
    %1993 = vst [vmem:[#allocation2 + $0x30] sm:$0xff] %v1953
    %1994 = vst [vmem:[#allocation2 + $0x38] sm:$0xff] %v1955
    %1995 = vst [vmem:[#allocation2 + $0x40] sm:$0xff] %v1886
    %1996 = vst [vmem:[#allocation2 + $0x48] sm:$0xff] %v1888
    %1997 = vst [vmem:[#allocation2 + $0x50] sm:$0xff] %v1959
    %1998 = vst [vmem:[#allocation2 + $0x58] sm:$0xff] %v1961
    %1999 = vst [vmem:[#allocation2 + $0x60] sm:$0xff] %v1890
    %2000 = vst [vmem:[#allocation2 + $0x68] sm:$0xff] %v1892
    %2001 = vst [vmem:[#allocation2 + $0x70] sm:$0xff] %v1963
    %2002 = vst [vmem:[#allocation2 + $0x78] sm:$0xff] %v1965
    %2003 = vst [vmem:[#allocation2 + $0x80] sm:$0xff] %v1896
    %2004 = vst [vmem:[#allocation2 + $0x88] sm:$0xff] %v1898
    %2005 = vst [vmem:[#allocation2 + $0x90] sm:$0xff] %v1969
    %2006 = vst [vmem:[#allocation2 + $0x98] sm:$0xff] %v1971
    %2007 = vst [vmem:[#allocation2 + $0xa0] sm:$0xff] %v1900
    %2008 = vst [vmem:[#allocation2 + $0xa8] sm:$0xff] %v1902
    %2009 = vst [vmem:[#allocation2 + $0xb0] sm:$0xff] %v1973
    %2010 = vst [vmem:[#allocation2 + $0xb8] sm:$0xff] %v1975
    %2011 = vst [vmem:[#allocation2 + $0xc0] sm:$0xff] %v1906
    %2012 = vst [vmem:[#allocation2 + $0xc8] sm:$0xff] %v1908
    %2013 = vst [vmem:[#allocation2 + $0xd0] sm:$0xff] %v1979
    %2014 = vst [vmem:[#allocation2 + $0xd8] sm:$0xff] %v1981
    %2015 = vst [vmem:[#allocation2 + $0xe0] sm:$0xff] %v1910
    %2016 = vst [vmem:[#allocation2 + $0xe8] sm:$0xff] %v1912
    %2017 = vst [vmem:[#allocation2 + $0xf0] sm:$0xff] %v1983
    %2018 = vst [vmem:[#allocation2 + $0xf8] sm:$0xff] %v1985
    %v2019 = vld [vmem:[#allocation8] sm:$0xff]
    %v2020 = vld [vmem:[#allocation8 + $0x8] sm:$0xff]
    %v2021 = vld [vmem:[#allocation8 + $0x10] sm:$0xff]
    %v2022 = vld [vmem:[#allocation8 + $0x18] sm:$0xff]
    %v2023 = vld [vmem:[#allocation8 + $0x20] sm:$0xff]
    %v2024 = vld [vmem:[#allocation8 + $0x28] sm:$0xff]
    %v2025 = vld [vmem:[#allocation8 + $0x30] sm:$0xff]
    %v2026 = vld [vmem:[#allocation8 + $0x38] sm:$0xff]
    %v2027 = vld [vmem:[#allocation8 + $0x40] sm:$0xff]
    %v2028 = vld [vmem:[#allocation8 + $0x48] sm:$0xff]
    %v2029 = vld [vmem:[#allocation8 + $0x50] sm:$0xff]
    %v2030 = vld [vmem:[#allocation8 + $0x58] sm:$0xff]
    %v2031 = vld [vmem:[#allocation8 + $0x60] sm:$0xff]
    %v2032 = vld [vmem:[#allocation8 + $0x68] sm:$0xff]
    %v2033 = vld [vmem:[#allocation8 + $0x70] sm:$0xff]
    %v2034 = vld [vmem:[#allocation8 + $0x78] sm:$0xff]
    %v2035 = vld [vmem:[#allocation8 + $0x80] sm:$0xff]
    %v2036 = vld [vmem:[#allocation8 + $0x88] sm:$0xff]
    %v2037 = vld [vmem:[#allocation8 + $0x90] sm:$0xff]
    %v2038 = vld [vmem:[#allocation8 + $0x98] sm:$0xff]
    %v2039 = vld [vmem:[#allocation8 + $0xa0] sm:$0xff]
    %v2040 = vld [vmem:[#allocation8 + $0xa8] sm:$0xff]
    %v2041 = vld [vmem:[#allocation8 + $0xb0] sm:$0xff]
    %v2042 = vld [vmem:[#allocation8 + $0xb8] sm:$0xff]
    %v2043 = vld [vmem:[#allocation8 + $0xc0] sm:$0xff]
    %v2044 = vld [vmem:[#allocation8 + $0xc8] sm:$0xff]
    %v2045 = vld [vmem:[#allocation8 + $0xd0] sm:$0xff]
    %v2046 = vld [vmem:[#allocation8 + $0xd8] sm:$0xff]
    %v2047 = vld [vmem:[#allocation8 + $0xe0] sm:$0xff]
    %v2048 = vld [vmem:[#allocation8 + $0xe8] sm:$0xff]
    %v2049 = vld [vmem:[#allocation8 + $0xf0] sm:$0xff]
    %v2050 = vld [vmem:[#allocation8 + $0xf8] sm:$0xff]
    %v2051 = vld [vmem:[#allocation2] sm:$0xff]
    %v2052 = vld [vmem:[#allocation2 + $0x8] sm:$0xff]
    %v2053 = vld [vmem:[#allocation2 + $0x10] sm:$0xff]
    %v2054 = vld [vmem:[#allocation2 + $0x18] sm:$0xff]
    %v2087 = vunpack.c.l.b16 %v2019
    %v2088 = vunpack.c.h.b16 %v2019
    %v2089 = vunpack.c.l.b16 %v2020
    %v2090 = vunpack.c.h.b16 %v2020
    %v2091 = vunpack.c.l.b16 %v2021
    %v2092 = vunpack.c.h.b16 %v2021
    %v2093 = vunpack.c.l.b16 %v2022
    %v2094 = vunpack.c.h.b16 %v2022
    %v2095 = vunpack.c.l.b16 %v2023
    %v2096 = vunpack.c.h.b16 %v2023
    %v2097 = vunpack.c.l.b16 %v2024
    %v2098 = vunpack.c.h.b16 %v2024
    %v2099 = vunpack.c.l.b16 %v2025
    %v2100 = vunpack.c.h.b16 %v2025
    %v2101 = vunpack.c.l.b16 %v2026
    %v2102 = vunpack.c.h.b16 %v2026
    %v2103 = vunpack.c.l.b16 %v2027
    %v2104 = vunpack.c.h.b16 %v2027
    %v2105 = vunpack.c.l.b16 %v2028
    %v2106 = vunpack.c.h.b16 %v2028
    %v2107 = vunpack.c.l.b16 %v2029
    %v2108 = vunpack.c.h.b16 %v2029
    %v2109 = vunpack.c.l.b16 %v2030
    %v2110 = vunpack.c.h.b16 %v2030
    %v2111 = vunpack.c.l.b16 %v2031
    %v2112 = vunpack.c.h.b16 %v2031
    %v2113 = vunpack.c.l.b16 %v2032
    %v2114 = vunpack.c.h.b16 %v2032
    %v2115 = vunpack.c.l.b16 %v2033
    %v2116 = vunpack.c.h.b16 %v2033
    %v2117 = vunpack.c.l.b16 %v2034
    %v2118 = vunpack.c.h.b16 %v2034
    %v2119 = vunpack.c.l.b16 %v2035
    %v2120 = vunpack.c.h.b16 %v2035
    %v2121 = vunpack.c.l.b16 %v2036
    %v2122 = vunpack.c.h.b16 %v2036
    %v2123 = vunpack.c.l.b16 %v2037
    %v2124 = vunpack.c.h.b16 %v2037
    %v2125 = vunpack.c.l.b16 %v2038
    %v2126 = vunpack.c.h.b16 %v2038
    %v2127 = vunpack.c.l.b16 %v2039
    %v2128 = vunpack.c.h.b16 %v2039
    %v2129 = vunpack.c.l.b16 %v2040
    %v2130 = vunpack.c.h.b16 %v2040
    %v2131 = vunpack.c.l.b16 %v2041
    %v2132 = vunpack.c.h.b16 %v2041
    %v2133 = vunpack.c.l.b16 %v2042
    %v2134 = vunpack.c.h.b16 %v2042
    %v2135 = vunpack.c.l.b16 %v2043
    %v2136 = vunpack.c.h.b16 %v2043
    %v2137 = vunpack.c.l.b16 %v2044
    %v2138 = vunpack.c.h.b16 %v2044
    %v2139 = vunpack.c.l.b16 %v2045
    %v2140 = vunpack.c.h.b16 %v2045
    %v2141 = vunpack.c.l.b16 %v2046
    %v2142 = vunpack.c.h.b16 %v2046
    %v2143 = vunpack.c.l.b16 %v2047
    %v2144 = vunpack.c.h.b16 %v2047
    %v2145 = vunpack.c.l.b16 %v2048
    %v2146 = vunpack.c.h.b16 %v2048
    %v2147 = vunpack.c.l.b16 %v2049
    %v2148 = vunpack.c.h.b16 %v2049
    %v2149 = vunpack.c.l.b16 %v2050
    %v2150 = vunpack.c.h.b16 %v2050
    %v2151 = vpack.c.b16 %v2091, %v2087
    %v2152 = vpack.c.b16 %v2092, %v2088
    %v2153 = vpack.c.b16 %v2093, %v2089
    %v2154 = vpack.c.b16 %v2094, %v2090
    %v2155 = vpack.c.b16 %v2099, %v2095
    %v2156 = vpack.c.b16 %v2100, %v2096
    %v2157 = vpack.c.b16 %v2101, %v2097
    %v2158 = vpack.c.b16 %v2102, %v2098
    %v2159 = vpack.c.b16 %v2107, %v2103
    %v2160 = vpack.c.b16 %v2108, %v2104
    %v2161 = vpack.c.b16 %v2109, %v2105
    %v2162 = vpack.c.b16 %v2110, %v2106
    %v2163 = vpack.c.b16 %v2115, %v2111
    %v2164 = vpack.c.b16 %v2116, %v2112
    %v2165 = vpack.c.b16 %v2117, %v2113
    %v2166 = vpack.c.b16 %v2118, %v2114
    %v2167 = vpack.c.b16 %v2123, %v2119
    %v2168 = vpack.c.b16 %v2124, %v2120
    %v2169 = vpack.c.b16 %v2125, %v2121
    %v2170 = vpack.c.b16 %v2126, %v2122
    %v2171 = vpack.c.b16 %v2131, %v2127
    %v2172 = vpack.c.b16 %v2132, %v2128
    %v2173 = vpack.c.b16 %v2133, %v2129
    %v2174 = vpack.c.b16 %v2134, %v2130
    %v2175 = vpack.c.b16 %v2139, %v2135
    %v2176 = vpack.c.b16 %v2140, %v2136
    %v2177 = vpack.c.b16 %v2141, %v2137
    %v2178 = vpack.c.b16 %v2142, %v2138
    %v2179 = vpack.c.b16 %v2147, %v2143
    %v2180 = vpack.c.b16 %v2148, %v2144
    %v2181 = vpack.c.b16 %v2149, %v2145
    %v2182 = vpack.c.b16 %v2150, %v2146
    %2215 = vmatprep.subr.bf16.mxu0 %v2152
    %2216 = vmatpush1.bf16.msra.mxu0 %v2151
    %2217 = vmatprep.subr.bf16.mxu0 %v2156
    %2218 = vmatpush1.bf16.msra.mxu0 %v2155
    %2219 = vmatprep.subr.bf16.mxu0 %v2160
    %2220 = vmatpush1.bf16.msra.mxu0 %v2159
    %2221 = vmatprep.subr.bf16.mxu0 %v2164
    %2222 = vmatpush1.bf16.msra.mxu0 %v2163
    %2223 = vmatprep.subr.bf16.mxu0 %v2168
    %2224 = vmatpush1.bf16.msra.mxu0 %v2167
    %2225 = vmatprep.subr.bf16.mxu0 %v2172
    %2226 = vmatpush1.bf16.msra.mxu0 %v2171
    %2227 = vmatprep.subr.bf16.mxu0 %v2176
    %2228 = vmatpush1.bf16.msra.mxu0 %v2175
    %2229 = vmatprep.subr.bf16.mxu0 %v2180
    %2230 = vmatpush1.bf16.msra.mxu0 %v2179
    %2231 = vmatprep.subr.bf16.mxu0 0
    %2232 = vmatpush1.bf16.msra.mxu0 0
    %2233 = vmatprep.subr.bf16.mxu0 0
    %2234 = vmatpush1.bf16.msra.mxu0 0
    %2235 = vmatprep.subr.bf16.mxu0 0
    %2236 = vmatpush1.bf16.msra.mxu0 0
    %2237 = vmatprep.subr.bf16.mxu0 0
    %2238 = vmatpush1.bf16.msra.mxu0 0
    %2239 = vmatprep.subr.bf16.mxu0 0
    %2240 = vmatpush1.bf16.msra.mxu0 0
    %2241 = vmatprep.subr.bf16.mxu0 0
    %2242 = vmatpush1.bf16.msra.mxu0 0
    %2243 = vmatprep.subr.bf16.mxu0 0
    %2244 = vmatpush1.bf16.msra.mxu0 0
    %2245 = vmatprep.subr.bf16.mxu0 0
    %2246 = vmatpush1.bf16.msra.mxu0 0
    %2247 = vmatprep.mubr.bf16.mxu0 0
    %2248 = vmatmul.mubr.bf16.gmra.mrb[0].mxu0 0
    %v2249 = vpop.f32.mrb[0].mxu0
    %v2250 = vadd.f32 0.0, %v2249
    %v2251 = vpop.f32.mrb[0].mxu0
    %v2252 = vadd.f32 0.0, %v2251
    %v2253 = vpop.f32.mrb[0].mxu0
    %v2254 = vpop.f32.mrb[0].mxu0
    %2255 = vdwg.mxu0
    %2256 = vmatprep.subr.bf16.mxu0 %v2154
    %2257 = vmatpush1.bf16.msra.mxu0 %v2153
    %2258 = vmatprep.subr.bf16.mxu0 %v2158
    %2259 = vmatpush1.bf16.msra.mxu0 %v2157
    %2260 = vmatprep.subr.bf16.mxu0 %v2162
    %2261 = vmatpush1.bf16.msra.mxu0 %v2161
    %2262 = vmatprep.subr.bf16.mxu0 %v2166
    %2263 = vmatpush1.bf16.msra.mxu0 %v2165
    %2264 = vmatprep.subr.bf16.mxu0 %v2170
    %2265 = vmatpush1.bf16.msra.mxu0 %v2169
    %2266 = vmatprep.subr.bf16.mxu0 %v2174
    %2267 = vmatpush1.bf16.msra.mxu0 %v2173
    %2268 = vmatprep.subr.bf16.mxu0 %v2178
    %2269 = vmatpush1.bf16.msra.mxu0 %v2177
    %2270 = vmatprep.subr.bf16.mxu0 %v2182
    %2271 = vmatpush1.bf16.msra.mxu0 %v2181
    %2272 = vmatprep.subr.bf16.mxu0 0
    %2273 = vmatpush1.bf16.msra.mxu0 0
    %2274 = vmatprep.subr.bf16.mxu0 0
    %2275 = vmatpush1.bf16.msra.mxu0 0
    %2276 = vmatprep.subr.bf16.mxu0 0
    %2277 = vmatpush1.bf16.msra.mxu0 0
    %2278 = vmatprep.subr.bf16.mxu0 0
    %2279 = vmatpush1.bf16.msra.mxu0 0
    %2280 = vmatprep.subr.bf16.mxu0 0
    %2281 = vmatpush1.bf16.msra.mxu0 0
    %2282 = vmatprep.subr.bf16.mxu0 0
    %2283 = vmatpush1.bf16.msra.mxu0 0
    %2284 = vmatprep.subr.bf16.mxu0 0
    %2285 = vmatpush1.bf16.msra.mxu0 0
    %2286 = vmatprep.subr.bf16.mxu0 0
    %2287 = vmatpush1.bf16.msra.mxu0 0
    %2288 = vmatprep.mubr.bf16.mxu0 0
    %2289 = vmatmul.mubr.bf16.gmra.mrb[0].mxu0 0
    %v2290 = vpop.f32.mrb[0].mxu0
    %v2291 = vadd.f32 0.0, %v2290
    %v2292 = vpop.f32.mrb[0].mxu0
    %v2293 = vadd.f32 0.0, %v2292
    %v2294 = vpop.f32.mrb[0].mxu0
    %v2295 = vpop.f32.mrb[0].mxu0
    %2296 = vdwg.mxu0
    %v2297 = vadd.f32 %v2051, %v2250
    %v2298 = vadd.f32 %v2052, %v2252
    %v2299 = vadd.f32 %v2053, %v2291
    %v2300 = vadd.f32 %v2054, %v2293
    %v2301 = vxor.u32 %v2297, 2147483648
    %v2302 = vxor.u32 %v2298, 2147483648
    %v2303 = vxor.u32 %v2299, 2147483648
    %v2304 = vmul.f32 %v2301, 1.442695
    %v2305 = vpow.pop %v2304
    %v2306 = vmul.f32 %v2302, 1.442695
    %v2307 = vpow.pop %v2306
    %v2308 = vmul.f32 %v2303, 1.442695
    %v2309 = vpow.pop %v2308
    %v2310 = vadd.f32 %v2305, 1.0
    %v2311 = vadd.f32 %v2307, 1.0
    %v2312 = vadd.f32 %v2309, 1.0
    %v2313 = vrcp.pop %v2310
    %v2314 = vmul.f32 1.0, %v2313
    %v2315 = vrcp.pop %v2311
    %v2316 = vmul.f32 1.0, %v2315
    %v2317 = vrcp.pop %v2312
    %v2318 = vmul.f32 1.0, %v2317
    %v2319 = vtanh.pop %v2300
    %v2320 = vmul.f32 %v2316, 0.0
    %v2321 = vmul.f32 %v2314, %v2319
    %v2322 = vadd.f32 %v2320, %v2321
    %v2323 = vtanh.pop %v2322
    %v2324 = vmul.f32 %v2318, %v2323
    %v2325 = vld [vmem:[#allocation2 + $0x20] sm:$0xff]
    %v2326 = vld [vmem:[#allocation2 + $0x28] sm:$0xff]
    %v2327 = vld [vmem:[#allocation2 + $0x30] sm:$0xff]
    %v2328 = vld [vmem:[#allocation2 + $0x38] sm:$0xff]
    %v2329 = vpack.c.bf16 %v2324, %v2324
    %2330 = vmatprep.subr.bf16.mxu0 %v2152
    %2331 = vmatpush1.bf16.msra.mxu0 %v2151
    %2332 = vmatprep.subr.bf16.mxu0 %v2156
    %2333 = vmatpush1.bf16.msra.mxu0 %v2155
    %2334 = vmatprep.subr.bf16.mxu0 %v2160
    %2335 = vmatpush1.bf16.msra.mxu0 %v2159
    %2336 = vmatprep.subr.bf16.mxu0 %v2164
    %2337 = vmatpush1.bf16.msra.mxu0 %v2163
    %2338 = vmatprep.subr.bf16.mxu0 %v2168
    %2339 = vmatpush1.bf16.msra.mxu0 %v2167
    %2340 = vmatprep.subr.bf16.mxu0 %v2172
    %2341 = vmatpush1.bf16.msra.mxu0 %v2171
    %2342 = vmatprep.subr.bf16.mxu0 %v2176
    %2343 = vmatpush1.bf16.msra.mxu0 %v2175
    %2344 = vmatprep.subr.bf16.mxu0 %v2180
    %2345 = vmatpush1.bf16.msra.mxu0 %v2179
    %2346 = vmatprep.subr.bf16.mxu0 0
    %2347 = vmatpush1.bf16.msra.mxu0 0
    %2348 = vmatprep.subr.bf16.mxu0 0
    %2349 = vmatpush1.bf16.msra.mxu0 0
    %2350 = vmatprep.subr.bf16.mxu0 0
    %2351 = vmatpush1.bf16.msra.mxu0 0
    %2352 = vmatprep.subr.bf16.mxu0 0
    %2353 = vmatpush1.bf16.msra.mxu0 0
    %2354 = vmatprep.subr.bf16.mxu0 0
    %2355 = vmatpush1.bf16.msra.mxu0 0
    %2356 = vmatprep.subr.bf16.mxu0 0
    %2357 = vmatpush1.bf16.msra.mxu0 0
    %2358 = vmatprep.subr.bf16.mxu0 0
    %2359 = vmatpush1.bf16.msra.mxu0 0
    %2360 = vmatprep.subr.bf16.mxu0 0
    %2361 = vmatpush1.bf16.msra.mxu0 0
    %2362 = vmatprep.mubr.bf16.mxu0 0
    %2363 = vmatmul.mubr.bf16.gmra.mrb[0].mxu0 %v2329
    %v2364 = vpop.f32.mrb[0].mxu0
    %v2365 = vadd.f32 0.0, %v2364
    %v2366 = vpop.f32.mrb[0].mxu0
    %v2367 = vadd.f32 0.0, %v2366
    %v2368 = vpop.f32.mrb[0].mxu0
    %v2369 = vpop.f32.mrb[0].mxu0
    %2370 = vdwg.mxu0
    %2371 = vmatprep.subr.bf16.mxu0 %v2154
    %2372 = vmatpush1.bf16.msra.mxu0 %v2153
    %2373 = vmatprep.subr.bf16.mxu0 %v2158
    %2374 = vmatpush1.bf16.msra.mxu0 %v2157
    %2375 = vmatprep.subr.bf16.mxu0 %v2162
    %2376 = vmatpush1.bf16.msra.mxu0 %v2161
    %2377 = vmatprep.subr.bf16.mxu0 %v2166
    %2378 = vmatpush1.bf16.msra.mxu0 %v2165
    %2379 = vmatprep.subr.bf16.mxu0 %v2170
    %2380 = vmatpush1.bf16.msra.mxu0 %v2169
    %2381 = vmatprep.subr.bf16.mxu0 %v2174
    %2382 = vmatpush1.bf16.msra.mxu0 %v2173
    %2383 = vmatprep.subr.bf16.mxu0 %v2178
    %2384 = vmatpush1.bf16.msra.mxu0 %v2177
    %2385 = vmatprep.subr.bf16.mxu0 %v2182
    %2386 = vmatpush1.bf16.msra.mxu0 %v2181
    %2387 = vmatprep.subr.bf16.mxu0 0
    %2388 = vmatpush1.bf16.msra.mxu0 0
    %2389 = vmatprep.subr.bf16.mxu0 0
    %2390 = vmatpush1.bf16.msra.mxu0 0
    %2391 = vmatprep.subr.bf16.mxu0 0
    %2392 = vmatpush1.bf16.msra.mxu0 0
    %2393 = vmatprep.subr.bf16.mxu0 0
    %2394 = vmatpush1.bf16.msra.mxu0 0
    %2395 = vmatprep.subr.bf16.mxu0 0
    %2396 = vmatpush1.bf16.msra.mxu0 0
    %2397 = vmatprep.subr.bf16.mxu0 0
    %2398 = vmatpush1.bf16.msra.mxu0 0
    %2399 = vmatprep.subr.bf16.mxu0 0
    %2400 = vmatpush1.bf16.msra.mxu0 0
    %2401 = vmatprep.subr.bf16.mxu0 0
    %2402 = vmatpush1.bf16.msra.mxu0 0
    %2403 = vmatprep.mubr.bf16.mxu0 0
    %2404 = vmatmul.mubr.bf16.gmra.mrb[0].mxu0 %v2329
    %v2405 = vpop.f32.mrb[0].mxu0
    %v2406 = vadd.f32 0.0, %v2405
    %v2407 = vpop.f32.mrb[0].mxu0
    %v2408 = vadd.f32 0.0, %v2407
    %v2409 = vpop.f32.mrb[0].mxu0
    %v2410 = vpop.f32.mrb[0].mxu0
    %2411 = vdwg.mxu0
    %v2412 = vadd.f32 %v2325, %v2365
    %v2413 = vadd.f32 %v2326, %v2367
    %v2414 = vadd.f32 %v2327, %v2406
    %v2415 = vadd.f32 %v2328, %v2408
    %v2416 = vxor.u32 %v2412, 2147483648
    %v2417 = vxor.u32 %v2413, 2147483648
    %v2418 = vxor.u32 %v2414, 2147483648
    %v2419 = vmul.f32 %v2416, 1.442695
    %v2420 = vpow.pop %v2419
    %v2421 = vmul.f32 %v2417, 1.442695
    %v2422 = vpow.pop %v2421
    %v2423 = vmul.f32 %v2418, 1.442695
    %v2424 = vpow.pop %v2423
    %v2425 = vadd.f32 %v2420, 1.0
    %v2426 = vadd.f32 %v2422, 1.0
    %v2427 = vadd.f32 %v2424, 1.0
    %v2428 = vrcp.pop %v2425
    %v2429 = vmul.f32 1.0, %v2428
    %v2430 = vrcp.pop %v2426
    %v2431 = vmul.f32 1.0, %v2430
    %v2432 = vrcp.pop %v2427
    %v2433 = vmul.f32 1.0, %v2432
    %v2434 = vtanh.pop %v2415
    %v2435 = vmul.f32 %v2431, %v2322
    %v2436 = vmul.f32 %v2429, %v2434
    %v2437 = vadd.f32 %v2435, %v2436
    %v2438 = vtanh.pop %v2437
    %v2439 = vmul.f32 %v2433, %v2438
    %v2440 = vld [vmem:[#allocation2 + $0x40] sm:$0xff]
    %v2441 = vld [vmem:[#allocation2 + $0x48] sm:$0xff]
    %v2442 = vld [vmem:[#allocation2 + $0x50] sm:$0xff]
    %v2443 = vld [vmem:[#allocation2 + $0x58] sm:$0xff]
    %v2444 = vpack.c.bf16 %v2439, %v2439
    %2445 = vmatprep.subr.bf16.mxu0 %v2152
    %2446 = vmatpush1.bf16.msra.mxu0 %v2151
    %2447 = vmatprep.subr.bf16.mxu0 %v2156
    %2448 = vmatpush1.bf16.msra.mxu0 %v2155
    %2449 = vmatprep.subr.bf16.mxu0 %v2160
    %2450 = vmatpush1.bf16.msra.mxu0 %v2159
    %2451 = vmatprep.subr.bf16.mxu0 %v2164
    %2452 = vmatpush1.bf16.msra.mxu0 %v2163
    %2453 = vmatprep.subr.bf16.mxu0 %v2168
    %2454 = vmatpush1.bf16.msra.mxu0 %v2167
    %2455 = vmatprep.subr.bf16.mxu0 %v2172
    %2456 = vmatpush1.bf16.msra.mxu0 %v2171
    %2457 = vmatprep.subr.bf16.mxu0 %v2176
    %2458 = vmatpush1.bf16.msra.mxu0 %v2175
    %2459 = vmatprep.subr.bf16.mxu0 %v2180
    %2460 = vmatpush1.bf16.msra.mxu0 %v2179
    %2461 = vmatprep.subr.bf16.mxu0 0
    %2462 = vmatpush1.bf16.msra.mxu0 0
    %2463 = vmatprep.subr.bf16.mxu0 0
    %2464 = vmatpush1.bf16.msra.mxu0 0
    %2465 = vmatprep.subr.bf16.mxu0 0
    %2466 = vmatpush1.bf16.msra.mxu0 0
    %2467 = vmatprep.subr.bf16.mxu0 0
    %2468 = vmatpush1.bf16.msra.mxu0 0
    %2469 = vmatprep.subr.bf16.mxu0 0
    %2470 = vmatpush1.bf16.msra.mxu0 0
    %2471 = vmatprep.subr.bf16.mxu0 0
    %2472 = vmatpush1.bf16.msra.mxu0 0
    %2473 = vmatprep.subr.bf16.mxu0 0
    %2474 = vmatpush1.bf16.msra.mxu0 0
    %2475 = vmatprep.subr.bf16.mxu0 0
    %2476 = vmatpush1.bf16.msra.mxu0 0
    %2477 = vmatprep.mubr.bf16.mxu0 0
    %2478 = vmatmul.mubr.bf16.gmra.mrb[0].mxu0 %v2444
    %v2479 = vpop.f32.mrb[0].mxu0
    %v2480 = vadd.f32 0.0, %v2479
    %v2481 = vpop.f32.mrb[0].mxu0
    %v2482 = vadd.f32 0.0, %v2481
    %v2483 = vpop.f32.mrb[0].mxu0
    %v2484 = vpop.f32.mrb[0].mxu0
    %2485 = vdwg.mxu0
    %2486 = vmatprep.subr.bf16.mxu0 %v2154
    %2487 = vmatpush1.bf16.msra.mxu0 %v2153
    %2488 = vmatprep.subr.bf16.mxu0 %v2158
    %2489 = vmatpush1.bf16.msra.mxu0 %v2157
    %2490 = vmatprep.subr.bf16.mxu0 %v2162
    %2491 = vmatpush1.bf16.msra.mxu0 %v2161
    %2492 = vmatprep.subr.bf16.mxu0 %v2166
    %2493 = vmatpush1.bf16.msra.mxu0 %v2165
    %2494 = vmatprep.subr.bf16.mxu0 %v2170
    %2495 = vmatpush1.bf16.msra.mxu0 %v2169
    %2496 = vmatprep.subr.bf16.mxu0 %v2174
    %2497 = vmatpush1.bf16.msra.mxu0 %v2173
    %2498 = vmatprep.subr.bf16.mxu0 %v2178
    %2499 = vmatpush1.bf16.msra.mxu0 %v2177
    %2500 = vmatprep.subr.bf16.mxu0 %v2182
    %2501 = vmatpush1.bf16.msra.mxu0 %v2181
    %2502 = vmatprep.subr.bf16.mxu0 0
    %2503 = vmatpush1.bf16.msra.mxu0 0
    %2504 = vmatprep.subr.bf16.mxu0 0
    %2505 = vmatpush1.bf16.msra.mxu0 0
    %2506 = vmatprep.subr.bf16.mxu0 0
    %2507 = vmatpush1.bf16.msra.mxu0 0
    %2508 = vmatprep.subr.bf16.mxu0 0
    %2509 = vmatpush1.bf16.msra.mxu0 0
    %2510 = vmatprep.subr.bf16.mxu0 0
    %2511 = vmatpush1.bf16.msra.mxu0 0
    %2512 = vmatprep.subr.bf16.mxu0 0
    %2513 = vmatpush1.bf16.msra.mxu0 0
    %2514 = vmatprep.subr.bf16.mxu0 0
    %2515 = vmatpush1.bf16.msra.mxu0 0
    %2516 = vmatprep.subr.bf16.mxu0 0
    %2517 = vmatpush1.bf16.msra.mxu0 0
    %2518 = vmatprep.mubr.bf16.mxu0 0
    %2519 = vmatmul.mubr.bf16.gmra.mrb[0].mxu0 %v2444
    %v2520 = vpop.f32.mrb[0].mxu0
    %v2521 = vadd.f32 0.0, %v2520
    %v2522 = vpop.f32.mrb[0].mxu0
    %v2523 = vadd.f32 0.0, %v2522
    %v2524 = vpop.f32.mrb[0].mxu0
    %v2525 = vpop.f32.mrb[0].mxu0
    %2526 = vdwg.mxu0
    %v2527 = vadd.f32 %v2440, %v2480
    %v2528 = vadd.f32 %v2441, %v2482
    %v2529 = vadd.f32 %v2442, %v2521
    %v2530 = vadd.f32 %v2443, %v2523
    %v2531 = vxor.u32 %v2527, 2147483648
    %v2532 = vxor.u32 %v2528, 2147483648
    %v2533 = vxor.u32 %v2529, 2147483648
    %v2534 = vmul.f32 %v2531, 1.442695
    %v2535 = vpow.pop %v2534
    %v2536 = vmul.f32 %v2532, 1.442695
    %v2537 = vpow.pop %v2536
    %v2538 = vmul.f32 %v2533, 1.442695
    %v2539 = vpow.pop %v2538
    %v2540 = vadd.f32 %v2535, 1.0
    %v2541 = vadd.f32 %v2537, 1.0
    %v2542 = vadd.f32 %v2539, 1.0
    %v2543 = vrcp.pop %v2540
    %v2544 = vmul.f32 1.0, %v2543
    %v2545 = vrcp.pop %v2541
    %v2546 = vmul.f32 1.0, %v2545
    %v2547 = vrcp.pop %v2542
    %v2548 = vmul.f32 1.0, %v2547
    %v2549 = vtanh.pop %v2530
    %v2550 = vmul.f32 %v2546, %v2437
    %v2551 = vmul.f32 %v2544, %v2549
    %v2552 = vadd.f32 %v2550, %v2551
    %v2553 = vtanh.pop %v2552
    %v2554 = vmul.f32 %v2548, %v2553
    %v2555 = vld [vmem:[#allocation2 + $0x60] sm:$0xff]
    %v2556 = vld [vmem:[#allocation2 + $0x68] sm:$0xff]
    %v2557 = vld [vmem:[#allocation2 + $0x70] sm:$0xff]
    %v2558 = vld [vmem:[#allocation2 + $0x78] sm:$0xff]
    %v2559 = vpack.c.bf16 %v2554, %v2554
    %2560 = vmatprep.subr.bf16.mxu0 %v2152
    %2561 = vmatpush1.bf16.msra.mxu0 %v2151
    %2562 = vmatprep.subr.bf16.mxu0 %v2156
    %2563 = vmatpush1.bf16.msra.mxu0 %v2155
    %2564 = vmatprep.subr.bf16.mxu0 %v2160
    %2565 = vmatpush1.bf16.msra.mxu0 %v2159
    %2566 = vmatprep.subr.bf16.mxu0 %v2164
    %2567 = vmatpush1.bf16.msra.mxu0 %v2163
    %2568 = vmatprep.subr.bf16.mxu0 %v2168
    %2569 = vmatpush1.bf16.msra.mxu0 %v2167
    %2570 = vmatprep.subr.bf16.mxu0 %v2172
    %2571 = vmatpush1.bf16.msra.mxu0 %v2171
    %2572 = vmatprep.subr.bf16.mxu0 %v2176
    %2573 = vmatpush1.bf16.msra.mxu0 %v2175
    %2574 = vmatprep.subr.bf16.mxu0 %v2180
    %2575 = vmatpush1.bf16.msra.mxu0 %v2179
    %2576 = vmatprep.subr.bf16.mxu0 0
    %2577 = vmatpush1.bf16.msra.mxu0 0
    %2578 = vmatprep.subr.bf16.mxu0 0
    %2579 = vmatpush1.bf16.msra.mxu0 0
    %2580 = vmatprep.subr.bf16.mxu0 0
    %2581 = vmatpush1.bf16.msra.mxu0 0
    %2582 = vmatprep.subr.bf16.mxu0 0
    %2583 = vmatpush1.bf16.msra.mxu0 0
    %2584 = vmatprep.subr.bf16.mxu0 0
    %2585 = vmatpush1.bf16.msra.mxu0 0
    %2586 = vmatprep.subr.bf16.mxu0 0
    %2587 = vmatpush1.bf16.msra.mxu0 0
    %2588 = vmatprep.subr.bf16.mxu0 0
    %2589 = vmatpush1.bf16.msra.mxu0 0
    %2590 = vmatprep.subr.bf16.mxu0 0
    %2591 = vmatpush1.bf16.msra.mxu0 0
    %2592 = vmatprep.mubr.bf16.mxu0 0
    %2593 = vmatmul.mubr.bf16.gmra.mrb[0].mxu0 %v2559
    %v2594 = vpop.f32.mrb[0].mxu0
    %v2595 = vadd.f32 0.0, %v2594
    %v2596 = vpop.f32.mrb[0].mxu0
    %v2597 = vadd.f32 0.0, %v2596
    %v2598 = vpop.f32.mrb[0].mxu0
    %v2599 = vpop.f32.mrb[0].mxu0
    %2600 = vdwg.mxu0
    %2601 = vmatprep.subr.bf16.mxu0 %v2154
    %2602 = vmatpush1.bf16.msra.mxu0 %v2153
    %2603 = vmatprep.subr.bf16.mxu0 %v2158
    %2604 = vmatpush1.bf16.msra.mxu0 %v2157
    %2605 = vmatprep.subr.bf16.mxu0 %v2162
    %2606 = vmatpush1.bf16.msra.mxu0 %v2161
    %2607 = vmatprep.subr.bf16.mxu0 %v2166
    %2608 = vmatpush1.bf16.msra.mxu0 %v2165
    %2609 = vmatprep.subr.bf16.mxu0 %v2170
    %2610 = vmatpush1.bf16.msra.mxu0 %v2169
    %2611 = vmatprep.subr.bf16.mxu0 %v2174
    %2612 = vmatpush1.bf16.msra.mxu0 %v2173
    %2613 = vmatprep.subr.bf16.mxu0 %v2178
    %2614 = vmatpush1.bf16.msra.mxu0 %v2177
    %2615 = vmatprep.subr.bf16.mxu0 %v2182
    %2616 = vmatpush1.bf16.msra.mxu0 %v2181
    %2617 = vmatprep.subr.bf16.mxu0 0
    %2618 = vmatpush1.bf16.msra.mxu0 0
    %2619 = vmatprep.subr.bf16.mxu0 0
    %2620 = vmatpush1.bf16.msra.mxu0 0
    %2621 = vmatprep.subr.bf16.mxu0 0
    %2622 = vmatpush1.bf16.msra.mxu0 0
    %2623 = vmatprep.subr.bf16.mxu0 0
    %2624 = vmatpush1.bf16.msra.mxu0 0
    %2625 = vmatprep.subr.bf16.mxu0 0
    %2626 = vmatpush1.bf16.msra.mxu0 0
    %2627 = vmatprep.subr.bf16.mxu0 0
    %2628 = vmatpush1.bf16.msra.mxu0 0
    %2629 = vmatprep.subr.bf16.mxu0 0
    %2630 = vmatpush1.bf16.msra.mxu0 0
    %2631 = vmatprep.subr.bf16.mxu0 0
    %2632 = vmatpush1.bf16.msra.mxu0 0
    %2633 = vmatprep.mubr.bf16.mxu0 0
    %2634 = vmatmul.mubr.bf16.gmra.mrb[0].mxu0 %v2559
    %v2635 = vpop.f32.mrb[0].mxu0
    %v2636 = vadd.f32 0.0, %v2635
    %v2637 = vpop.f32.mrb[0].mxu0
    %v2638 = vadd.f32 0.0, %v2637
    %v2639 = vpop.f32.mrb[0].mxu0
    %v2640 = vpop.f32.mrb[0].mxu0
    %2641 = vdwg.mxu0
    %v2642 = vadd.f32 %v2555, %v2595
    %v2643 = vadd.f32 %v2556, %v2597
    %v2644 = vadd.f32 %v2557, %v2636
    %v2645 = vadd.f32 %v2558, %v2638
    %v2646 = vxor.u32 %v2642, 2147483648
    %v2647 = vxor.u32 %v2643, 2147483648
    %v2648 = vxor.u32 %v2644, 2147483648
    %v2649 = vmul.f32 %v2646, 1.442695
    %v2650 = vpow.pop %v2649
    %v2651 = vmul.f32 %v2647, 1.442695
    %v2652 = vpow.pop %v2651
    %v2653 = vmul.f32 %v2648, 1.442695
    %v2654 = vpow.pop %v2653
    %v2655 = vadd.f32 %v2650, 1.0
    %v2656 = vadd.f32 %v2652, 1.0
    %v2657 = vadd.f32 %v2654, 1.0
    %v2658 = vrcp.pop %v2655
    %v2659 = vmul.f32 1.0, %v2658
    %v2660 = vrcp.pop %v2656
    %v2661 = vmul.f32 1.0, %v2660
    %v2662 = vrcp.pop %v2657
    %v2663 = vmul.f32 1.0, %v2662
    %v2664 = vtanh.pop %v2645
    %v2665 = vmul.f32 %v2661, %v2552
    %v2666 = vmul.f32 %v2659, %v2664
    %v2667 = vadd.f32 %v2665, %v2666
    %v2668 = vtanh.pop %v2667
    %v2669 = vmul.f32 %v2663, %v2668
    %v2670 = vld [vmem:[#allocation2 + $0x80] sm:$0xff]
    %v2671 = vld [vmem:[#allocation2 + $0x88] sm:$0xff]
    %v2672 = vld [vmem:[#allocation2 + $0x90] sm:$0xff]
    %v2673 = vld [vmem:[#allocation2 + $0x98] sm:$0xff]
    %v2674 = vpack.c.bf16 %v2669, %v2669
    %2675 = vmatprep.subr.bf16.mxu0 %v2152
    %2676 = vmatpush1.bf16.msra.mxu0 %v2151
    %2677 = vmatprep.subr.bf16.mxu0 %v2156
    %2678 = vmatpush1.bf16.msra.mxu0 %v2155
    %2679 = vmatprep.subr.bf16.mxu0 %v2160
    %2680 = vmatpush1.bf16.msra.mxu0 %v2159
    %2681 = vmatprep.subr.bf16.mxu0 %v2164
    %2682 = vmatpush1.bf16.msra.mxu0 %v2163
    %2683 = vmatprep.subr.bf16.mxu0 %v2168
    %2684 = vmatpush1.bf16.msra.mxu0 %v2167
    %2685 = vmatprep.subr.bf16.mxu0 %v2172
    %2686 = vmatpush1.bf16.msra.mxu0 %v2171
    %2687 = vmatprep.subr.bf16.mxu0 %v2176
    %2688 = vmatpush1.bf16.msra.mxu0 %v2175
    %2689 = vmatprep.subr.bf16.mxu0 %v2180
    %2690 = vmatpush1.bf16.msra.mxu0 %v2179
    %2691 = vmatprep.subr.bf16.mxu0 0
    %2692 = vmatpush1.bf16.msra.mxu0 0
    %2693 = vmatprep.subr.bf16.mxu0 0
    %2694 = vmatpush1.bf16.msra.mxu0 0
    %2695 = vmatprep.subr.bf16.mxu0 0
    %2696 = vmatpush1.bf16.msra.mxu0 0
    %2697 = vmatprep.subr.bf16.mxu0 0
    %2698 = vmatpush1.bf16.msra.mxu0 0
    %2699 = vmatprep.subr.bf16.mxu0 0
    %2700 = vmatpush1.bf16.msra.mxu0 0
    %2701 = vmatprep.subr.bf16.mxu0 0
    %2702 = vmatpush1.bf16.msra.mxu0 0
    %2703 = vmatprep.subr.bf16.mxu0 0
    %2704 = vmatpush1.bf16.msra.mxu0 0
    %2705 = vmatprep.subr.bf16.mxu0 0
    %2706 = vmatpush1.bf16.msra.mxu0 0
    %2707 = vmatprep.mubr.bf16.mxu0 0
    %2708 = vmatmul.mubr.bf16.gmra.mrb[0].mxu0 %v2674
    %v2709 = vpop.f32.mrb[0].mxu0
    %v2710 = vadd.f32 0.0, %v2709
    %v2711 = vpop.f32.mrb[0].mxu0
    %v2712 = vadd.f32 0.0, %v2711
    %v2713 = vpop.f32.mrb[0].mxu0
    %v2714 = vpop.f32.mrb[0].mxu0
    %2715 = vdwg.mxu0
    %2716 = vmatprep.subr.bf16.mxu0 %v2154
    %2717 = vmatpush1.bf16.msra.mxu0 %v2153
    %2718 = vmatprep.subr.bf16.mxu0 %v2158
    %2719 = vmatpush1.bf16.msra.mxu0 %v2157
    %2720 = vmatprep.subr.bf16.mxu0 %v2162
    %2721 = vmatpush1.bf16.msra.mxu0 %v2161
    %2722 = vmatprep.subr.bf16.mxu0 %v2166
    %2723 = vmatpush1.bf16.msra.mxu0 %v2165
    %2724 = vmatprep.subr.bf16.mxu0 %v2170
    %2725 = vmatpush1.bf16.msra.mxu0 %v2169
    %2726 = vmatprep.subr.bf16.mxu0 %v2174
    %2727 = vmatpush1.bf16.msra.mxu0 %v2173
    %2728 = vmatprep.subr.bf16.mxu0 %v2178
    %2729 = vmatpush1.bf16.msra.mxu0 %v2177
    %2730 = vmatprep.subr.bf16.mxu0 %v2182
    %2731 = vmatpush1.bf16.msra.mxu0 %v2181
    %2732 = vmatprep.subr.bf16.mxu0 0
    %2733 = vmatpush1.bf16.msra.mxu0 0
    %2734 = vmatprep.subr.bf16.mxu0 0
    %2735 = vmatpush1.bf16.msra.mxu0 0
    %2736 = vmatprep.subr.bf16.mxu0 0
    %2737 = vmatpush1.bf16.msra.mxu0 0
    %2738 = vmatprep.subr.bf16.mxu0 0
    %2739 = vmatpush1.bf16.msra.mxu0 0
    %2740 = vmatprep.subr.bf16.mxu0 0
    %2741 = vmatpush1.bf16.msra.mxu0 0
    %2742 = vmatprep.subr.bf16.mxu0 0
    %2743 = vmatpush1.bf16.msra.mxu0 0
    %2744 = vmatprep.subr.bf16.mxu0 0
    %2745 = vmatpush1.bf16.msra.mxu0 0
    %2746 = vmatprep.subr.bf16.mxu0 0
    %2747 = vmatpush1.bf16.msra.mxu0 0
    %2748 = vmatprep.mubr.bf16.mxu0 0
    %2749 = vmatmul.mubr.bf16.gmra.mrb[0].mxu0 %v2674
    %v2750 = vpop.f32.mrb[0].mxu0
    %v2751 = vadd.f32 0.0, %v2750
    %v2752 = vpop.f32.mrb[0].mxu0
    %v2753 = vadd.f32 0.0, %v2752
    %v2754 = vpop.f32.mrb[0].mxu0
    %v2755 = vpop.f32.mrb[0].mxu0
    %2756 = vdwg.mxu0
    %v2757 = vadd.f32 %v2670, %v2710
    %v2758 = vadd.f32 %v2671, %v2712
    %v2759 = vadd.f32 %v2672, %v2751
    %v2760 = vadd.f32 %v2673, %v2753
    %v2761 = vxor.u32 %v2757, 2147483648
    %v2762 = vxor.u32 %v2758, 2147483648
    %v2763 = vxor.u32 %v2759, 2147483648
    %v2764 = vmul.f32 %v2761, 1.442695
    %v2765 = vpow.pop %v2764
    %v2766 = vmul.f32 %v2762, 1.442695
    %v2767 = vpow.pop %v2766
    %v2768 = vmul.f32 %v2763, 1.442695
    %v2769 = vpow.pop %v2768
    %v2770 = vadd.f32 %v2765, 1.0
    %v2771 = vadd.f32 %v2767, 1.0
    %v2772 = vadd.f32 %v2769, 1.0
    %v2773 = vrcp.pop %v2770
    %v2774 = vmul.f32 1.0, %v2773
    %v2775 = vrcp.pop %v2771
    %v2776 = vmul.f32 1.0, %v2775
    %v2777 = vrcp.pop %v2772
    %v2778 = vmul.f32 1.0, %v2777
    %v2779 = vtanh.pop %v2760
    %v2780 = vmul.f32 %v2776, %v2667
    %v2781 = vmul.f32 %v2774, %v2779
    %v2782 = vadd.f32 %v2780, %v2781
    %v2783 = vtanh.pop %v2782
    %v2784 = vmul.f32 %v2778, %v2783
    %v2785 = vld [vmem:[#allocation2 + $0xa0] sm:$0xff]
    %v2786 = vld [vmem:[#allocation2 + $0xa8] sm:$0xff]
    %v2787 = vld [vmem:[#allocation2 + $0xb0] sm:$0xff]
    %v2788 = vld [vmem:[#allocation2 + $0xb8] sm:$0xff]
    %v2789 = vpack.c.bf16 %v2784, %v2784
    %2790 = vmatprep.subr.bf16.mxu0 %v2152
    %2791 = vmatpush1.bf16.msra.mxu0 %v2151
    %2792 = vmatprep.subr.bf16.mxu0 %v2156
    %2793 = vmatpush1.bf16.msra.mxu0 %v2155
    %2794 = vmatprep.subr.bf16.mxu0 %v2160
    %2795 = vmatpush1.bf16.msra.mxu0 %v2159
    %2796 = vmatprep.subr.bf16.mxu0 %v2164
    %2797 = vmatpush1.bf16.msra.mxu0 %v2163
    %2798 = vmatprep.subr.bf16.mxu0 %v2168
    %2799 = vmatpush1.bf16.msra.mxu0 %v2167
    %2800 = vmatprep.subr.bf16.mxu0 %v2172
    %2801 = vmatpush1.bf16.msra.mxu0 %v2171
    %2802 = vmatprep.subr.bf16.mxu0 %v2176
    %2803 = vmatpush1.bf16.msra.mxu0 %v2175
    %2804 = vmatprep.subr.bf16.mxu0 %v2180
    %2805 = vmatpush1.bf16.msra.mxu0 %v2179
    %2806 = vmatprep.subr.bf16.mxu0 0
    %2807 = vmatpush1.bf16.msra.mxu0 0
    %2808 = vmatprep.subr.bf16.mxu0 0
    %2809 = vmatpush1.bf16.msra.mxu0 0
    %2810 = vmatprep.subr.bf16.mxu0 0
    %2811 = vmatpush1.bf16.msra.mxu0 0
    %2812 = vmatprep.subr.bf16.mxu0 0
    %2813 = vmatpush1.bf16.msra.mxu0 0
    %2814 = vmatprep.subr.bf16.mxu0 0
    %2815 = vmatpush1.bf16.msra.mxu0 0
    %2816 = vmatprep.subr.bf16.mxu0 0
    %2817 = vmatpush1.bf16.msra.mxu0 0
    %2818 = vmatprep.subr.bf16.mxu0 0
    %2819 = vmatpush1.bf16.msra.mxu0 0
    %2820 = vmatprep.subr.bf16.mxu0 0
    %2821 = vmatpush1.bf16.msra.mxu0 0
    %2822 = vmatprep.mubr.bf16.mxu0 0
    %2823 = vmatmul.mubr.bf16.gmra.mrb[0].mxu0 %v2789
    %v2824 = vpop.f32.mrb[0].mxu0
    %v2825 = vadd.f32 0.0, %v2824
    %v2826 = vpop.f32.mrb[0].mxu0
    %v2827 = vadd.f32 0.0, %v2826
    %v2828 = vpop.f32.mrb[0].mxu0
    %v2829 = vpop.f32.mrb[0].mxu0
    %2830 = vdwg.mxu0
    %2831 = vmatprep.subr.bf16.mxu0 %v2154
    %2832 = vmatpush1.bf16.msra.mxu0 %v2153
    %2833 = vmatprep.subr.bf16.mxu0 %v2158
    %2834 = vmatpush1.bf16.msra.mxu0 %v2157
    %2835 = vmatprep.subr.bf16.mxu0 %v2162
    %2836 = vmatpush1.bf16.msra.mxu0 %v2161
    %2837 = vmatprep.subr.bf16.mxu0 %v2166
    %2838 = vmatpush1.bf16.msra.mxu0 %v2165
    %2839 = vmatprep.subr.bf16.mxu0 %v2170
    %2840 = vmatpush1.bf16.msra.mxu0 %v2169
    %2841 = vmatprep.subr.bf16.mxu0 %v2174
    %2842 = vmatpush1.bf16.msra.mxu0 %v2173
    %2843 = vmatprep.subr.bf16.mxu0 %v2178
    %2844 = vmatpush1.bf16.msra.mxu0 %v2177
    %2845 = vmatprep.subr.bf16.mxu0 %v2182
    %2846 = vmatpush1.bf16.msra.mxu0 %v2181
    %2847 = vmatprep.subr.bf16.mxu0 0
    %2848 = vmatpush1.bf16.msra.mxu0 0
    %2849 = vmatprep.subr.bf16.mxu0 0
    %2850 = vmatpush1.bf16.msra.mxu0 0
    %2851 = vmatprep.subr.bf16.mxu0 0
    %2852 = vmatpush1.bf16.msra.mxu0 0
    %2853 = vmatprep.subr.bf16.mxu0 0
    %2854 = vmatpush1.bf16.msra.mxu0 0
    %2855 = vmatprep.subr.bf16.mxu0 0
    %2856 = vmatpush1.bf16.msra.mxu0 0
    %2857 = vmatprep.subr.bf16.mxu0 0
    %2858 = vmatpush1.bf16.msra.mxu0 0
    %2859 = vmatprep.subr.bf16.mxu0 0
    %2860 = vmatpush1.bf16.msra.mxu0 0
    %2861 = vmatprep.subr.bf16.mxu0 0
    %2862 = vmatpush1.bf16.msra.mxu0 0
    %2863 = vmatprep.mubr.bf16.mxu0 0
    %2864 = vmatmul.mubr.bf16.gmra.mrb[0].mxu0 %v2789
    %v2865 = vpop.f32.mrb[0].mxu0
    %v2866 = vadd.f32 0.0, %v2865
    %v2867 = vpop.f32.mrb[0].mxu0
    %v2868 = vadd.f32 0.0, %v2867
    %v2869 = vpop.f32.mrb[0].mxu0
    %v2870 = vpop.f32.mrb[0].mxu0
    %2871 = vdwg.mxu0
    %v2872 = vadd.f32 %v2785, %v2825
    %v2873 = vadd.f32 %v2786, %v2827
    %v2874 = vadd.f32 %v2787, %v2866
    %v2875 = vadd.f32 %v2788, %v2868
    %v2876 = vxor.u32 %v2872, 2147483648
    %v2877 = vxor.u32 %v2873, 2147483648
    %v2878 = vxor.u32 %v2874, 2147483648
    %v2879 = vmul.f32 %v2876, 1.442695
    %v2880 = vpow.pop %v2879
    %v2881 = vmul.f32 %v2877, 1.442695
    %v2882 = vpow.pop %v2881
    %v2883 = vmul.f32 %v2878, 1.442695
    %v2884 = vpow.pop %v2883
    %v2885 = vadd.f32 %v2880, 1.0
    %v2886 = vadd.f32 %v2882, 1.0
    %v2887 = vadd.f32 %v2884, 1.0
    %v2888 = vrcp.pop %v2885
    %v2889 = vmul.f32 1.0, %v2888
    %v2890 = vrcp.pop %v2886
    %v2891 = vmul.f32 1.0, %v2890
    %v2892 = vrcp.pop %v2887
    %v2893 = vmul.f32 1.0, %v2892
    %v2894 = vtanh.pop %v2875
    %v2895 = vmul.f32 %v2891, %v2782
    %v2896 = vmul.f32 %v2889, %v2894
    %v2897 = vadd.f32 %v2895, %v2896
    %v2898 = vtanh.pop %v2897
    %v2899 = vmul.f32 %v2893, %v2898
    %v2900 = vld [vmem:[#allocation2 + $0xc0] sm:$0xff]
    %v2901 = vld [vmem:[#allocation2 + $0xc8] sm:$0xff]
    %v2902 = vld [vmem:[#allocation2 + $0xd0] sm:$0xff]
    %v2903 = vld [vmem:[#allocation2 + $0xd8] sm:$0xff]
    %v2904 = vpack.c.bf16 %v2899, %v2899
    %2905 = vmatprep.subr.bf16.mxu0 %v2152
    %2906 = vmatpush1.bf16.msra.mxu0 %v2151
    %2907 = vmatprep.subr.bf16.mxu0 %v2156
    %2908 = vmatpush1.bf16.msra.mxu0 %v2155
    %2909 = vmatprep.subr.bf16.mxu0 %v2160
    %2910 = vmatpush1.bf16.msra.mxu0 %v2159
    %2911 = vmatprep.subr.bf16.mxu0 %v2164
    %2912 = vmatpush1.bf16.msra.mxu0 %v2163
    %2913 = vmatprep.subr.bf16.mxu0 %v2168
    %2914 = vmatpush1.bf16.msra.mxu0 %v2167
    %2915 = vmatprep.subr.bf16.mxu0 %v2172
    %2916 = vmatpush1.bf16.msra.mxu0 %v2171
    %2917 = vmatprep.subr.bf16.mxu0 %v2176
    %2918 = vmatpush1.bf16.msra.mxu0 %v2175
    %2919 = vmatprep.subr.bf16.mxu0 %v2180
    %2920 = vmatpush1.bf16.msra.mxu0 %v2179
    %2921 = vmatprep.subr.bf16.mxu0 0
    %2922 = vmatpush1.bf16.msra.mxu0 0
    %2923 = vmatprep.subr.bf16.mxu0 0
    %2924 = vmatpush1.bf16.msra.mxu0 0
    %2925 = vmatprep.subr.bf16.mxu0 0
    %2926 = vmatpush1.bf16.msra.mxu0 0
    %2927 = vmatprep.subr.bf16.mxu0 0
    %2928 = vmatpush1.bf16.msra.mxu0 0
    %2929 = vmatprep.subr.bf16.mxu0 0
    %2930 = vmatpush1.bf16.msra.mxu0 0
    %2931 = vmatprep.subr.bf16.mxu0 0
    %2932 = vmatpush1.bf16.msra.mxu0 0
    %2933 = vmatprep.subr.bf16.mxu0 0
    %2934 = vmatpush1.bf16.msra.mxu0 0
    %2935 = vmatprep.subr.bf16.mxu0 0
    %2936 = vmatpush1.bf16.msra.mxu0 0
    %2937 = vmatprep.mubr.bf16.mxu0 0
    %2938 = vmatmul.mubr.bf16.gmra.mrb[0].mxu0 %v2904
    %v2939 = vpop.f32.mrb[0].mxu0
    %v2940 = vadd.f32 0.0, %v2939
    %v2941 = vpop.f32.mrb[0].mxu0
    %v2942 = vadd.f32 0.0, %v2941
    %v2943 = vpop.f32.mrb[0].mxu0
    %v2944 = vpop.f32.mrb[0].mxu0
    %2945 = vdwg.mxu0
    %2946 = vmatprep.subr.bf16.mxu0 %v2154
    %2947 = vmatpush1.bf16.msra.mxu0 %v2153
    %2948 = vmatprep.subr.bf16.mxu0 %v2158
    %2949 = vmatpush1.bf16.msra.mxu0 %v2157
    %2950 = vmatprep.subr.bf16.mxu0 %v2162
    %2951 = vmatpush1.bf16.msra.mxu0 %v2161
    %2952 = vmatprep.subr.bf16.mxu0 %v2166
    %2953 = vmatpush1.bf16.msra.mxu0 %v2165
    %2954 = vmatprep.subr.bf16.mxu0 %v2170
    %2955 = vmatpush1.bf16.msra.mxu0 %v2169
    %2956 = vmatprep.subr.bf16.mxu0 %v2174
    %2957 = vmatpush1.bf16.msra.mxu0 %v2173
    %2958 = vmatprep.subr.bf16.mxu0 %v2178
    %2959 = vmatpush1.bf16.msra.mxu0 %v2177
    %2960 = vmatprep.subr.bf16.mxu0 %v2182
    %2961 = vmatpush1.bf16.msra.mxu0 %v2181
    %2962 = vmatprep.subr.bf16.mxu0 0
    %2963 = vmatpush1.bf16.msra.mxu0 0
    %2964 = vmatprep.subr.bf16.mxu0 0
    %2965 = vmatpush1.bf16.msra.mxu0 0
    %2966 = vmatprep.subr.bf16.mxu0 0
    %2967 = vmatpush1.bf16.msra.mxu0 0
    %2968 = vmatprep.subr.bf16.mxu0 0
    %2969 = vmatpush1.bf16.msra.mxu0 0
    %2970 = vmatprep.subr.bf16.mxu0 0
    %2971 = vmatpush1.bf16.msra.mxu0 0
    %2972 = vmatprep.subr.bf16.mxu0 0
    %2973 = vmatpush1.bf16.msra.mxu0 0
    %2974 = vmatprep.subr.bf16.mxu0 0
    %2975 = vmatpush1.bf16.msra.mxu0 0
    %2976 = vmatprep.subr.bf16.mxu0 0
    %2977 = vmatpush1.bf16.msra.mxu0 0
    %2978 = vmatprep.mubr.bf16.mxu0 0
    %2979 = vmatmul.mubr.bf16.gmra.mrb[0].mxu0 %v2904
    %v2980 = vpop.f32.mrb[0].mxu0
    %v2981 = vadd.f32 0.0, %v2980
    %v2982 = vpop.f32.mrb[0].mxu0
    %v2983 = vadd.f32 0.0, %v2982
    %v2984 = vpop.f32.mrb[0].mxu0
    %v2985 = vpop.f32.mrb[0].mxu0
    %2986 = vdwg.mxu0
    %v2987 = vadd.f32 %v2900, %v2940
    %v2988 = vadd.f32 %v2901, %v2942
    %v2989 = vadd.f32 %v2902, %v2981
    %v2990 = vadd.f32 %v2903, %v2983
    %v2991 = vxor.u32 %v2987, 2147483648
    %v2992 = vxor.u32 %v2988, 2147483648
    %v2993 = vxor.u32 %v2989, 2147483648
    %v2994 = vmul.f32 %v2991, 1.442695
    %v2995 = vpow.pop %v2994
    %v2996 = vmul.f32 %v2992, 1.442695
    %v2997 = vpow.pop %v2996
    %v2998 = vmul.f32 %v2993, 1.442695
    %v2999 = vpow.pop %v2998
    %v3000 = vadd.f32 %v2995, 1.0
    %v3001 = vadd.f32 %v2997, 1.0
    %v3002 = vadd.f32 %v2999, 1.0
    %v3003 = vrcp.pop %v3000
    %v3004 = vmul.f32 1.0, %v3003
    %v3005 = vrcp.pop %v3001
    %v3006 = vmul.f32 1.0, %v3005
    %v3007 = vrcp.pop %v3002
    %v3008 = vmul.f32 1.0, %v3007
    %v3009 = vtanh.pop %v2990
    %v3010 = vmul.f32 %v3006, %v2897
    %v3011 = vmul.f32 %v3004, %v3009
    %v3012 = vadd.f32 %v3010, %v3011
    %v3013 = vtanh.pop %v3012
    %v3014 = vmul.f32 %v3008, %v3013
    %v3015 = vld [vmem:[#allocation2 + $0xe0] sm:$0xff]
    %v3016 = vld [vmem:[#allocation2 + $0xe8] sm:$0xff]
    %v3017 = vld [vmem:[#allocation2 + $0xf0] sm:$0xff]
    %v3018 = vld [vmem:[#allocation2 + $0xf8] sm:$0xff]
    %v3019 = vpack.c.bf16 %v3014, %v3014
    %3020 = vmatprep.subr.bf16.mxu0 %v2152
    %3021 = vmatpush1.bf16.msra.mxu0 %v2151
    %3022 = vmatprep.subr.bf16.mxu0 %v2156
    %3023 = vmatpush1.bf16.msra.mxu0 %v2155
    %3024 = vmatprep.subr.bf16.mxu0 %v2160
    %3025 = vmatpush1.bf16.msra.mxu0 %v2159
    %3026 = vmatprep.subr.bf16.mxu0 %v2164
    %3027 = vmatpush1.bf16.msra.mxu0 %v2163
    %3028 = vmatprep.subr.bf16.mxu0 %v2168
    %3029 = vmatpush1.bf16.msra.mxu0 %v2167
    %3030 = vmatprep.subr.bf16.mxu0 %v2172
    %3031 = vmatpush1.bf16.msra.mxu0 %v2171
    %3032 = vmatprep.subr.bf16.mxu0 %v2176
    %3033 = vmatpush1.bf16.msra.mxu0 %v2175
    %3034 = vmatprep.subr.bf16.mxu0 %v2180
    %3035 = vmatpush1.bf16.msra.mxu0 %v2179
    %3036 = vmatprep.subr.bf16.mxu0 0
    %3037 = vmatpush1.bf16.msra.mxu0 0
    %3038 = vmatprep.subr.bf16.mxu0 0
    %3039 = vmatpush1.bf16.msra.mxu0 0
    %3040 = vmatprep.subr.bf16.mxu0 0
    %3041 = vmatpush1.bf16.msra.mxu0 0
    %3042 = vmatprep.subr.bf16.mxu0 0
    %3043 = vmatpush1.bf16.msra.mxu0 0
    %3044 = vmatprep.subr.bf16.mxu0 0
    %3045 = vmatpush1.bf16.msra.mxu0 0
    %3046 = vmatprep.subr.bf16.mxu0 0
    %3047 = vmatpush1.bf16.msra.mxu0 0
    %3048 = vmatprep.subr.bf16.mxu0 0
    %3049 = vmatpush1.bf16.msra.mxu0 0
    %3050 = vmatprep.subr.bf16.mxu0 0
    %3051 = vmatpush1.bf16.msra.mxu0 0
    %3052 = vmatprep.mubr.bf16.mxu0 0
    %3053 = vmatmul.mubr.bf16.gmra.mrb[0].mxu0 %v3019
    %v3054 = vpop.f32.mrb[0].mxu0
    %v3055 = vadd.f32 0.0, %v3054
    %v3056 = vpop.f32.mrb[0].mxu0
    %v3057 = vadd.f32 0.0, %v3056
    %v3058 = vpop.f32.mrb[0].mxu0
    %v3059 = vpop.f32.mrb[0].mxu0
    %3060 = vdwg.mxu0
    %3061 = vmatprep.subr.bf16.mxu0 %v2154
    %3062 = vmatpush1.bf16.msra.mxu0 %v2153
    %3063 = vmatprep.subr.bf16.mxu0 %v2158
    %3064 = vmatpush1.bf16.msra.mxu0 %v2157
    %3065 = vmatprep.subr.bf16.mxu0 %v2162
    %3066 = vmatpush1.bf16.msra.mxu0 %v2161
    %3067 = vmatprep.subr.bf16.mxu0 %v2166
    %3068 = vmatpush1.bf16.msra.mxu0 %v2165
    %3069 = vmatprep.subr.bf16.mxu0 %v2170
    %3070 = vmatpush1.bf16.msra.mxu0 %v2169
    %3071 = vmatprep.subr.bf16.mxu0 %v2174
    %3072 = vmatpush1.bf16.msra.mxu0 %v2173
    %3073 = vmatprep.subr.bf16.mxu0 %v2178
    %3074 = vmatpush1.bf16.msra.mxu0 %v2177
    %3075 = vmatprep.subr.bf16.mxu0 %v2182
    %3076 = vmatpush1.bf16.msra.mxu0 %v2181
    %3077 = vmatprep.subr.bf16.mxu0 0
    %3078 = vmatpush1.bf16.msra.mxu0 0
    %3079 = vmatprep.subr.bf16.mxu0 0
    %3080 = vmatpush1.bf16.msra.mxu0 0
    %3081 = vmatprep.subr.bf16.mxu0 0
    %3082 = vmatpush1.bf16.msra.mxu0 0
    %3083 = vmatprep.subr.bf16.mxu0 0
    %3084 = vmatpush1.bf16.msra.mxu0 0
    %3085 = vmatprep.subr.bf16.mxu0 0
    %3086 = vmatpush1.bf16.msra.mxu0 0
    %3087 = vmatprep.subr.bf16.mxu0 0
    %3088 = vmatpush1.bf16.msra.mxu0 0
    %3089 = vmatprep.subr.bf16.mxu0 0
    %3090 = vmatpush1.bf16.msra.mxu0 0
    %3091 = vmatprep.subr.bf16.mxu0 0
    %3092 = vmatpush1.bf16.msra.mxu0 0
    %3093 = vmatprep.mubr.bf16.mxu0 0
    %3094 = vmatmul.mubr.bf16.gmra.mrb[0].mxu0 %v3019
    %v3095 = vpop.f32.mrb[0].mxu0
    %v3096 = vadd.f32 0.0, %v3095
    %v3097 = vpop.f32.mrb[0].mxu0
    %v3098 = vadd.f32 0.0, %v3097
    %v3099 = vpop.f32.mrb[0].mxu0
    %v3100 = vpop.f32.mrb[0].mxu0
    %3101 = vdwg.mxu0
    %v3102 = vadd.f32 %v3015, %v3055
    %v3103 = vadd.f32 %v3016, %v3057
    %v3104 = vadd.f32 %v3017, %v3096
    %v3105 = vadd.f32 %v3018, %v3098
    %v3106 = vxor.u32 %v3102, 2147483648
    %v3107 = vxor.u32 %v3103, 2147483648
    %v3108 = vxor.u32 %v3104, 2147483648
    %v3109 = vmul.f32 %v3106, 1.442695
    %v3110 = vpow.pop %v3109
    %v3111 = vmul.f32 %v3107, 1.442695
    %v3112 = vpow.pop %v3111
    %v3113 = vmul.f32 %v3108, 1.442695
    %v3114 = vpow.pop %v3113
    %v3115 = vadd.f32 %v3110, 1.0
    %v3116 = vadd.f32 %v3112, 1.0
    %v3117 = vadd.f32 %v3114, 1.0
    %v3118 = vrcp.pop %v3115
    %v3119 = vmul.f32 1.0, %v3118
    %v3120 = vrcp.pop %v3116
    %v3121 = vmul.f32 1.0, %v3120
    %v3122 = vrcp.pop %v3117
    %v3123 = vmul.f32 1.0, %v3122
    %v3124 = vtanh.pop %v3105
    %v3125 = vmul.f32 %v3121, %v3012
    %v3126 = vmul.f32 %v3119, %v3124
    %v3127 = vadd.f32 %v3125, %v3126
    %v3128 = vtanh.pop %v3127
    %v3129 = vmul.f32 %v3123, %v3128
    %v3130 = vpack.c.bf16 %v3129, %v3129
    %v3131 = vld [vmem:[%s7] sm:$0xf]
    %v3132 = vld [vmem:[%s7 + $0x4] sm:$0xf]
    %v3133 = vld [vmem:[%s7 + $0x8] sm:$0xf]
    %v3134 = vld [vmem:[%s7 + $0xc] sm:$0xf]
    %v3135 = vld [vmem:[%s7 + $0x10] sm:$0xf]
    %v3136 = vld [vmem:[%s7 + $0x14] sm:$0xf]
    %v3137 = vld [vmem:[%s7 + $0x18] sm:$0xf]
    %v3138 = vld [vmem:[%s7 + $0x1c] sm:$0xf]
    %v3139 = vld [vmem:[%s7 + $0x20] sm:$0xf]
    %v3140 = vld [vmem:[%s7 + $0x24] sm:$0xf]
    %v3141 = vld [vmem:[%s7 + $0x28] sm:$0xf]
    %v3142 = vld [vmem:[%s7 + $0x2c] sm:$0xf]
    %v3143 = vld [vmem:[%s7 + $0x30] sm:$0xf]
    %v3144 = vld [vmem:[%s7 + $0x34] sm:$0xf]
    %v3145 = vld [vmem:[%s7 + $0x38] sm:$0xf]
    %v3146 = vld [vmem:[%s7 + $0x3c] sm:$0xf]
    %v3147 = vld [vmem:[%s8] sm:$0x1]
    %v3149 = vlaneseq
    %v3150 = vshrl.u32 %v3149, 7
    %v3151 = vsub.s32 0, %v3150
    %v3152 = vrot.slane %v3147, %v3151
    %v3170 = vunpack.c.l.b16 %v3131
    %v3171 = vunpack.c.l.b16 %v3132
    %v3172 = vunpack.c.l.b16 %v3133
    %v3173 = vunpack.c.l.b16 %v3134
    %v3174 = vunpack.c.l.b16 %v3135
    %v3175 = vunpack.c.l.b16 %v3136
    %v3176 = vunpack.c.l.b16 %v3137
    %v3177 = vunpack.c.l.b16 %v3138
    %v3178 = vunpack.c.l.b16 %v3139
    %v3179 = vunpack.c.l.b16 %v3140
    %v3180 = vunpack.c.l.b16 %v3141
    %v3181 = vunpack.c.l.b16 %v3142
    %v3182 = vunpack.c.l.b16 %v3143
    %v3183 = vunpack.c.l.b16 %v3144
    %v3184 = vunpack.c.l.b16 %v3145
    %v3185 = vunpack.c.l.b16 %v3146
    %v3186 = vpack.c.b16 %v3171, %v3170
    %v3187 = vpack.c.b16 %v3173, %v3172
    %v3188 = vpack.c.b16 %v3175, %v3174
    %v3189 = vpack.c.b16 %v3177, %v3176
    %v3190 = vpack.c.b16 %v3179, %v3178
    %v3191 = vpack.c.b16 %v3181, %v3180
    %v3192 = vpack.c.b16 %v3183, %v3182
    %v3193 = vpack.c.b16 %v3185, %v3184
    %3202 = vmatprep.subr.bf16.mxu0 0
    %3203 = vmatpush1.bf16.msra.mxu0 %v3186
    %3204 = vmatprep.subr.bf16.mxu0 0
    %3205 = vmatpush1.bf16.msra.mxu0 %v3187
    %3206 = vmatprep.subr.bf16.mxu0 0
    %3207 = vmatpush1.bf16.msra.mxu0 %v3188
    %3208 = vmatprep.subr.bf16.mxu0 0
    %3209 = vmatpush1.bf16.msra.mxu0 %v3189
    %3210 = vmatprep.subr.bf16.mxu0 0
    %3211 = vmatpush1.bf16.msra.mxu0 %v3190
    %3212 = vmatprep.subr.bf16.mxu0 0
    %3213 = vmatpush1.bf16.msra.mxu0 %v3191
    %3214 = vmatprep.subr.bf16.mxu0 0
    %3215 = vmatpush1.bf16.msra.mxu0 %v3192
    %3216 = vmatprep.subr.bf16.mxu0 0
    %3217 = vmatpush1.bf16.msra.mxu0 %v3193
    %3218 = vmatprep.subr.bf16.mxu0 0
    %3219 = vmatpush1.bf16.msra.mxu0 0
    %3220 = vmatprep.subr.bf16.mxu0 0
    %3221 = vmatpush1.bf16.msra.mxu0 0
    %3222 = vmatprep.subr.bf16.mxu0 0
    %3223 = vmatpush1.bf16.msra.mxu0 0
    %3224 = vmatprep.subr.bf16.mxu0 0
    %3225 = vmatpush1.bf16.msra.mxu0 0
    %3226 = vmatprep.subr.bf16.mxu0 0
    %3227 = vmatpush1.bf16.msra.mxu0 0
    %3228 = vmatprep.subr.bf16.mxu0 0
    %3229 = vmatpush1.bf16.msra.mxu0 0
    %3230 = vmatprep.subr.bf16.mxu0 0
    %3231 = vmatpush1.bf16.msra.mxu0 0
    %3232 = vmatprep.subr.bf16.mxu0 0
    %3233 = vmatpush1.bf16.msra.mxu0 0
    %3234 = vmatprep.mubr.bf16.mxu0 0
    %3235 = vmatmul.mubr.bf16.gmra.mrb[0].mxu0 %v3130
    %v3236 = vpop.f32.mrb[0].mxu0
    %v3237 = vadd.f32 %v3152, %v3236
    %v3238 = vpop.f32.mrb[0].mxu0
    %v3239 = vpop.f32.mrb[0].mxu0
    %v3240 = vpop.f32.mrb[0].mxu0
    %3241 = vdwg.mxu0
    %3242 = vst [vmem:[%s9] sm:$0xff] %v3237
    // Predicated region
    $region54: #{lstm_classifier_forward.1} parent=1 // pred_check
      _
    $region55: #{lstm_classifier_forward.1} parent=1 // pred_check_branch
      %3244 = sbr.rel (0) target = $region57
    $region56: #{lstm_classifier_forward.1} parent=1 // pred_region
      _
    $region57: #{lstm_classifier_forward.1} parent=1 // pred_fallthru
      _
    // Predicated region
    $region58: #{lstm_classifier_forward.1} parent=1 // pred_check
      _
    $region59: #{lstm_classifier_forward.1} parent=1 // pred_check_branch
      %3246 = sbr.rel (0) target = $region61
    $region60: #{lstm_classifier_forward.1} parent=1 // pred_region
      _
    $region61: #{lstm_classifier_forward.1} parent=1 // pred_fallthru
      _
    %3247 = vsyncpa [#allocation4], 1
    %3248 = vsyncpa [#allocation6], 1
    %3249 = vsyncpa [#allocation9], 1

</llo_original>
